<compile_context>
chip_gen: v5e
topology: v5e:2x2
jax: 0.10.0
libtpu: 0.0.40
codegen_flags: <defaults>
</compile_context>

<pallas_src>
import functools

import numpy as np
import jax
import jax.numpy as jnp
from jax import lax
from jax.experimental import pallas as pl
from jax.experimental.pallas import tpu as pltpu


def _cdiv(a: int, b: int) -> int:
    return (a + b - 1) // b


def _round_up(x: int, m: int) -> int:
    return _cdiv(x, m) * m


# L -> (padded feature width, group size g).  W = L_pad * g is the lane width.
_GROUPS = {5: (5, 128), 10: (10, 64), 85: (128, 1)}


def _make_A(L: int) -> np.ndarray:
    """The exact PyTorch A matrix: A[i, j] = 1 - |i - j| / L."""
    idx = np.arange(L, dtype=np.float64)
    return (1.0 - np.abs(idx[:, None] - idx[None, :]) / float(L)).astype(np.float32)


def _make_A_big(L: int, L_pad: int, g: int) -> np.ndarray:
    """Block-diagonal A for the (g*L_pad)-wide regrouped layout."""
    a = np.zeros((L_pad, L_pad), dtype=np.float32)
    a[:L, :L] = _make_A(L)
    return np.kron(np.eye(g, dtype=np.float32), a)  # (g*L_pad, g*L_pad)


def _qfd_gram_kernel(pd_ref, gt_ref, gram_ref, *, mxu_dtype):
    # gram_ref: (1, W, W) f32 output block, resident across the reduction axis.
    @pl.when(pl.program_id(1) == 0)
    def _():
        gram_ref[...] = jnp.zeros_like(gram_ref)

    # Cast after load (works for f32 or bf16 wire format; v5e has no bf16 VPU).
    x = pd_ref[...].astype(jnp.float32)
    y = gt_ref[...].astype(jnp.float32)
    t = jnp.abs(x - y).astype(mxu_dtype)                    # (tb, W)

    # G += t^T t   (MXU contraction over the batch-tile rows, f32 accumulate).
    gram_ref[0] = gram_ref[0] + lax.dot_general(
        t, t,
        dimension_numbers=(((0,), (0,)), ((), ())),
        preferred_element_type=jnp.float32)                 # (W, W)


def qfd_loss(pred: jnp.ndarray,
             target: jnp.ndarray,
             *,
             block_rows: int | None = None,
             num_cores: int = 2,
             mxu_dtype=jnp.bfloat16,
             stream_dtype=None) -> jnp.ndarray:
    """0.1 * sum(diag(|pred-target| @ A @ |pred-target|.T)), A[i,j] = 1 - |i-j|/L."""
    assert pred.shape == target.shape and pred.ndim == 2
    B, L = pred.shape
    # Faithful to the PyTorch module: only 5/10/85-bin distributions define A.
    assert L in (5, 10, 85), "QFDloss only defines A for L in {5, 10, 85}"
    L_pad, g = _GROUPS[L]
    W = L_pad * g

    if stream_dtype is not None:
        pred = pred.astype(stream_dtype)
        target = target.astype(stream_dtype)
    itemsize = jnp.dtype(pred.dtype).itemsize

    # Tile budget: ~4 MiB of streamed input bytes per grid step (both inputs),
    # capped so 2 inputs x 2 pipeline buffers + Gram fit comfortably in the
    # 64 MiB-per-TC v7x VMEM (and well under v5e/v6e's 128 MiB).
    rows_needed = _cdiv(B, g)
    rows_per_core = _cdiv(rows_needed, num_cores)
    if block_rows is None:
        block_rows = (4 << 20) // (W * itemsize * 2)
        block_rows = max(8, min(4096, block_rows))
    tb = _round_up(min(block_rows, _round_up(max(rows_per_core, 1), 8)), 8)
    steps = max(1, _cdiv(rows_per_core, tb))
    total_rows = num_cores * steps * tb
    total_samples = total_rows * g

    # Zero padding: padded samples/features give temp == 0 -> no contribution.
    pad_b = total_samples - B
    pad_l = L_pad - L
    if pad_b or pad_l:
        pred = jnp.pad(pred, ((0, pad_b), (0, pad_l)))
        target = jnp.pad(target, ((0, pad_b), (0, pad_l)))
    pred = pred.reshape(total_rows, W)     # free row-major regrouping
    target = target.reshape(total_rows, W)

    cost = pl.CostEstimate(
        flops=2 * total_rows * W * W + 2 * total_rows * W,
        transcendentals=0,
        bytes_accessed=2 * total_rows * W * itemsize + num_cores * W * W * 4)

    kernel = functools.partial(_qfd_gram_kernel, mxu_dtype=mxu_dtype)
    gram = pl.pallas_call(
        kernel,
        out_shape=jax.ShapeDtypeStruct((num_cores, W, W), jnp.float32),
        grid_spec=pltpu.PrefetchScalarGridSpec(
            num_scalar_prefetch=0,
            grid=(num_cores, steps),
            in_specs=[
                pl.BlockSpec((tb, W), lambda c, i: (c * steps + i, 0)),  # pred
                pl.BlockSpec((tb, W), lambda c, i: (c * steps + i, 0)),  # target
            ],
            out_specs=pl.BlockSpec((1, W, W), lambda c, i: (c, 0, 0)),
        ),
        compiler_params=pltpu.CompilerParams(
            # core axis parallel (2x on v7x megacore), batch axis is the reduction
            dimension_semantics=("parallel", "arbitrary"),
            vmem_limit_bytes=48 * 1024 * 1024,
        ),
        cost_estimate=cost,
    )(pred, target)

    # Tiny epilogue in plain JAX: sum per-core partial Grams and contract with
    # the block-diagonal A (padded rows/cols of the Gram are zero).
    a_big = jnp.asarray(_make_A_big(L, L_pad, g))
    return 0.1 * jnp.einsum("ij,ij->", a_big, gram.sum(axis=0))


def qfd_loss_ref(pred, target):
    """Pure-JAX reference for sanity checking."""
    A = jnp.asarray(_make_A(pred.shape[1]))
    temp = jnp.abs(pred.astype(jnp.float32) - target.astype(jnp.float32))
    return 0.1 * jnp.einsum("bi,ij,bj->", temp, A, temp)


if __name__ == "__main__":
    key = jax.random.PRNGKey(0)
    ks = jax.random.split(key, 6)

    # Case 1: 10-bin label distributions.  Small tile (8 reshaped rows) forces a
    # multi-step grid on both core slots; checked with exact f32 MXU operands.
    B1, L1 = 2500, 10
    p1 = jax.nn.softmax(jax.random.normal(ks[0], (B1, L1), jnp.float32), axis=-1)
    t1 = jax.nn.softmax(jax.random.normal(ks[1], (B1, L1), jnp.float32), axis=-1)
    r1 = qfd_loss_ref(p1, t1)

    l1 = qfd_loss(p1, t1, block_rows=8, mxu_dtype=jnp.float32)
    jax.block_until_ready(l1)
    assert jnp.allclose(l1, r1, rtol=1e-5, atol=1e-6), (l1, r1)

    # Fast path: bf16 MXU operands + bf16 wire format (looser tolerance).
    l1_fast = qfd_loss(p1, t1, stream_dtype=jnp.bfloat16)
    jax.block_until_ready(l1_fast)
    assert jnp.allclose(l1_fast, r1, rtol=5e-2, atol=1e-3), (l1_fast, r1)

    # Case 2: 5-bin distributions, tiny batch (heavy zero-padded tail, g=128).
    B2, L2 = 37, 5
    p2 = jax.nn.softmax(jax.random.normal(ks[2], (B2, L2), jnp.float32), axis=-1)
    t2 = jax.nn.softmax(jax.random.normal(ks[3], (B2, L2), jnp.float32), axis=-1)
    l2 = qfd_loss(p2, t2, mxu_dtype=jnp.float32)
    jax.block_until_ready(l2)
    r2 = qfd_loss_ref(p2, t2)
    assert jnp.allclose(l2, r2, rtol=1e-5, atol=1e-6), (l2, r2)

    # Case 3: 85-bin path (feature dim zero-padded 85 -> 128 for full lanes).
    B3, L3 = 300, 85
    p3 = jax.nn.softmax(jax.random.normal(ks[4], (B3, L3), jnp.float32), axis=-1)
    t3 = jax.nn.softmax(jax.random.normal(ks[5], (B3, L3), jnp.float32), axis=-1)
    l3 = qfd_loss(p3, t3, mxu_dtype=jnp.float32)
    jax.block_until_ready(l3)
    r3 = qfd_loss_ref(p3, t3)
    assert jnp.allclose(l3, r3, rtol=1e-5, atol=1e-6), (l3, r3)

    print("KERNEL_OK")
</pallas_src>

<mosaic_0001>
module attributes {stable_mosaic.version = 11 : i64} {
  func.func @_qfd_gram_kernel(%arg0: i32, %arg1: i32, %arg2: memref<8x640xf32, #tpu.memory_space<vmem>>, %arg3: memref<8x640xf32, #tpu.memory_space<vmem>>, %arg4: memref<1x640x640xf32, #tpu.memory_space<vmem>>) attributes {dimension_semantics = [#tpu.dimension_semantics<parallel>, #tpu.dimension_semantics<arbitrary>], iteration_bounds = array<i64: 2, 3>, scalar_prefetch = 0 : i64, scratch_operands = 0 : i64, tpu.core_type = #tpu.core_type<tc>, window_params = [{transform_indices = @transform_0, window_bounds = array<i64: 8, 640>}, {transform_indices = @transform_1, window_bounds = array<i64: 8, 640>}, {transform_indices = @transform_2, window_bounds = array<i64: 1, 640, 640>}]} {
    %c0_i32 = arith.constant 0 : i32
    %0 = arith.cmpi eq, %arg1, %c0_i32 : i32
    %1 = arith.extui %0 : i1 to i32
    %c0_i32_0 = arith.constant 0 : i32
    %2 = arith.cmpi ne, %1, %c0_i32_0 : i32
    scf.if %2 {
      %cst_10 = arith.constant 0.000000e+00 : f32
      %14 = vector.broadcast %cst_10 : f32 to vector<1x640x640xf32>
      %c0_11 = arith.constant 0 : index
      %c0_12 = arith.constant 0 : index
      %c0_13 = arith.constant 0 : index
      %15 = vector.load %arg4[%c0_11, %c0_12, %c0_13] : memref<1x640x640xf32, #tpu.memory_space<vmem>>, vector<1x640x640xf32>
      tpu.vector_store %arg4[%c0_11, %c0_12, %c0_13], %14 {strides = array<i32>} : memref<1x640x640xf32, #tpu.memory_space<vmem>>, vector<1x640x640xf32>,
    } else {
    }
    %c0 = arith.constant 0 : index
    %c0_1 = arith.constant 0 : index
    %3 = vector.load %arg2[%c0, %c0_1] : memref<8x640xf32, #tpu.memory_space<vmem>>, vector<8x640xf32>
    %c0_2 = arith.constant 0 : index
    %c0_3 = arith.constant 0 : index
    %4 = vector.load %arg3[%c0_2, %c0_3] : memref<8x640xf32, #tpu.memory_space<vmem>>, vector<8x640xf32>
    %5 = arith.subf %3, %4 : vector<8x640xf32>
    %6 = math.absf %5 : vector<8x640xf32>
    %c0_4 = arith.constant 0 : index
    %c0_5 = arith.constant 0 : index
    %c0_6 = arith.constant 0 : index
    %7 = vector.load %arg4[%c0_4, %c0_5, %c0_6] : memref<1x640x640xf32, #tpu.memory_space<vmem>>, vector<1x640x640xf32>
    %8 = vector.shape_cast %7 : vector<1x640x640xf32> to vector<640x640xf32>
    %cst = arith.constant dense<0.000000e+00> : vector<640x640xf32>
    %9 = tpu.matmul %6, %6, %cst {dimension_numbers = #tpu.dot_dimension_numbers<[0], [0], [1], [1], [0, 1, 1, 1], [], []>} : vector<8x640xf32>, vector<8x640xf32>, vector<640x640xf32> -> vector<640x640xf32>
    %10 = arith.addf %8, %9 : vector<640x640xf32>
    %c0_7 = arith.constant 0 : index
    %c0_8 = arith.constant 0 : index
    %c0_9 = arith.constant 0 : index
    %11 = vector.load %arg4[%c0_7, %c0_8, %c0_9] : memref<1x640x640xf32, #tpu.memory_space<vmem>>, vector<1x640x640xf32>
    %12 = vector.shape_cast %11 : vector<1x640x640xf32> to vector<640x640xf32>
    %13 = vector.shape_cast %10 : vector<640x640xf32> to vector<1x640x640xf32>
    tpu.vector_store %arg4[%c0_7, %c0_8, %c0_9], %13 {strides = array<i32>} : memref<1x640x640xf32, #tpu.memory_space<vmem>>, vector<1x640x640xf32>,
    return
  }
  func.func @transform_0(%arg0: i32, %arg1: i32) -> (i32, i32) {
    %c3_i32 = arith.constant 3 : i32
    %0 = arith.muli %arg0, %c3_i32 : i32
    %1 = arith.addi %0, %arg1 : i32
    %c0_i32 = arith.constant 0 : i32
    %c0_i32_0 = arith.constant 0 : i32
    return %1, %c0_i32 : i32, i32
  }
  func.func @transform_1(%arg0: i32, %arg1: i32) -> (i32, i32) {
    %c3_i32 = arith.constant 3 : i32
    %0 = arith.muli %arg0, %c3_i32 : i32
    %1 = arith.addi %0, %arg1 : i32
    %c0_i32 = arith.constant 0 : i32
    %c0_i32_0 = arith.constant 0 : i32
    return %1, %c0_i32 : i32, i32
  }
  func.func @transform_2(%arg0: i32, %arg1: i32) -> (i32, i32, i32) {
    %c0_i32 = arith.constant 0 : i32
    %c0_i32_0 = arith.constant 0 : i32
    %c0_i32_1 = arith.constant 0 : i32
    return %arg0, %c0_i32, %c0_i32_0 : i32, i32, i32
  }
}

</mosaic_0001>

<llo_original>
// kernel: tpu_custom_call.1
$region0: #{tpu_custom_call.1}
  #allocation0 [shape = 'u32[]', space=smem, size = 0x4, offset = 0x4, fixed_abs, tag = 'smem constant byte address 0x4 - core index']
  #allocation1 [shape = 'u32[72,128]{1,0:T(1,128)}', space=vmem, size = 0x9000, scoped, tag = 'internal scratch']
  %s0 = inlined_call_operand.hbm [shape: f32[48,640], index: 0, kind: input, shape index: {}]
  %s1 = inlined_call_operand.hbm [shape: f32[48,640], index: 1, kind: input, shape index: {}]
  %s2 = inlined_call_operand.hbm [shape: f32[2,640,640], index: 2, kind: output, shape index: {}]
  %s3 = sld [smem:[#allocation0]]
  $region53: #{tpu_custom_call.1} parent=0
    _
  %s5 = ssub.s32 1, %s3
  %s6 = scalar_select 0, %s5, %s3
  $region1: #{tpu_custom_call.1} parent=0
    #allocation2 [shape = 'u8[40960]{0}', space=vmem, size = 0xa000, scoped, tag = 'input window, operand 0']
    #allocation3 [shape = 's32[2]{0}', space=sflag, size = 0x8, scoped, tag = 'scoped memory for tpu_custom_call.1']
    #allocation4 [shape = 's32[2]{0}', space=sflag, size = 0x8, scoped, tag = 'scoped memory for tpu_custom_call.1']
    #allocation5 [shape = 'u8[40960]{0}', space=vmem, size = 0xa000, scoped, tag = 'input window, operand 1']
    #allocation6 [shape = 's32[2]{0}', space=sflag, size = 0x8, scoped, tag = 'scoped memory for tpu_custom_call.1']
    #allocation7 [shape = 'u8[3276800]{0}', space=vmem, size = 0x320000, scoped, tag = 'output window, operand 0']
    %7 = vsyncpa [#allocation3], 0
    %s8 = scalar_lea.sflag [#allocation3], 1
    %9 = vsyncpa %s8, 0
    %10 = vsyncpa [#allocation6], 0
    %s11 = scalar_lea.sflag [#allocation6], 1
    %12 = vsyncpa %s11, 0
    %13 = vsyncpa [#allocation4], 0
    %s14 = scalar_lea.sflag [#allocation4], 1
    %15 = vsyncpa %s14, 0
    loop: start=0, step=1, limit=8
    $region2: #{tpu_custom_call.1} parent=1 // loop_pre_header
      _
    $region3: #{tpu_custom_call.1} parent=1 // loop_header
      %s17 = sphi 0, %s21
      %p18 = scmp.ge.s32.totalorder %s17, 8
      %s24 = sphi 0, %s36
      %s25 = sphi 0, %s32
      %s26 = sphi 0, %s24
      %s27 = sphi 0, %s25
      %s28 = sphi 0, %s26
      %s29 = sphi 0, %s27
      %s43 = sphi 0, %s45
      %s46 = sphi 0, %s43
      %s47 = sphi 0, %s46
      %s63 = sphi 0, %s47
      %s73 = sphi 0, %s75
      %s76 = sphi 0, %s73
      %s77 = sphi 0, %s76
      %s93 = sphi 0, %s77
      %s99 = sphi 0, %s101
      %s102 = sphi 0, %s99
      %s103 = sphi 0, %s102
      %s119 = sphi 0, %s103
    $region4: #{tpu_custom_call.1} parent=1 // loop_header_branch
      %20 = sbr.rel (%p18) target = $region8
    $region5: #{tpu_custom_call.1} parent=1 // loop_body
      %s22 = ssub.s32 %s17, 1
      %s23 = ssub.s32 %s17, 2
      %s30 = sadd.s32 1, %s25
      %p31 = scmp.ge.s32.totalorder %s30, 3
      %s32 = scalar_select %p31, 0, %s30
      %s33 = sadd.s32 1, %s24
      %s34 = scalar_select %p31, %s33, %s24
      %p35 = scmp.ge.s32.totalorder %s34, 2
      %s36 = scalar_select %p35, 0, %s34
      %s37 = smul.u32 %s24, 3
      %s38 = sadd.s32 %s37, %s25
      %s39 = smul.u32 %s36, 3
      %s40 = sadd.s32 %s39, %s32
      %s41 = ssub.s32 %s38, %s40
      %p42 = scmp.eq.s32.totalorder %s41, 0
      %s44 = sadd.s32 %s43, 1
      %s45 = scalar_select %p42, %s43, %s44
      %p48 = pneg %p42
      %p49 = scmp.eq.s32.totalorder %s17, 5
      %p50 = por %p48, %p49
      %p51 = scmp.ne.s32.totalorder %s43, %s46
      %p52 = scmp.eq.s32.totalorder %s17, 0
      %p53 = por %p51, %p52
      %p54 = scmp.ne.s32.totalorder %s43, %s46
      %p55 = scmp.eq.s32.totalorder %s22, 5
      %p56 = por %p54, %p55
      %p57 = scmp.ne.s32.totalorder %s46, %s47
      %p58 = scmp.eq.s32.totalorder %s22, 0
      %p59 = por %p57, %p58
      %p60 = scmp.ne.s32.totalorder %s46, %s47
      %p61 = scmp.eq.s32.totalorder %s23, 5
      %p62 = por %p60, %p61
      %p64 = scmp.ne.s32.totalorder %s47, %s63
      %p65 = scmp.eq.s32.totalorder %s23, 0
      %p66 = por %p64, %p65
      %s67 = smul.u32 %s24, 3
      %s68 = sadd.s32 %s67, %s25
      %s69 = smul.u32 %s36, 3
      %s70 = sadd.s32 %s69, %s32
      %s71 = ssub.s32 %s68, %s70
      %p72 = scmp.eq.s32.totalorder %s71, 0
      %s74 = sadd.s32 %s73, 1
      %s75 = scalar_select %p72, %s73, %s74
      %p78 = pneg %p72
      %p79 = scmp.eq.s32.totalorder %s17, 5
      %p80 = por %p78, %p79
      %p81 = scmp.ne.s32.totalorder %s73, %s76
      %p82 = scmp.eq.s32.totalorder %s17, 0
      %p83 = por %p81, %p82
      %p84 = scmp.ne.s32.totalorder %s73, %s76
      %p85 = scmp.eq.s32.totalorder %s22, 5
      %p86 = por %p84, %p85
      %p87 = scmp.ne.s32.totalorder %s76, %s77
      %p88 = scmp.eq.s32.totalorder %s22, 0
      %p89 = por %p87, %p88
      %p90 = scmp.ne.s32.totalorder %s76, %s77
      %p91 = scmp.eq.s32.totalorder %s23, 5
      %p92 = por %p90, %p91
      %p94 = scmp.ne.s32.totalorder %s77, %s93
      %p95 = scmp.eq.s32.totalorder %s23, 0
      %p96 = por %p94, %p95
      %s97 = ssub.s32 %s24, %s36
      %p98 = scmp.eq.s32.totalorder %s97, 0
      %s100 = sadd.s32 %s99, 1
      %s101 = scalar_select %p98, %s99, %s100
      %p104 = pneg %p98
      %p105 = scmp.eq.s32.totalorder %s17, 5
      %p106 = por %p104, %p105
      %p107 = scmp.ne.s32.totalorder %s99, %s102
      %p108 = scmp.eq.s32.totalorder %s17, 0
      %p109 = por %p107, %p108
      %p110 = scmp.ne.s32.totalorder %s99, %s102
      %p111 = scmp.eq.s32.totalorder %s22, 5
      %p112 = por %p110, %p111
      %p113 = scmp.ne.s32.totalorder %s102, %s103
      %p114 = scmp.eq.s32.totalorder %s22, 0
      %p115 = por %p113, %p114
      %p116 = scmp.ne.s32.totalorder %s102, %s103
      %p117 = scmp.eq.s32.totalorder %s23, 5
      %p118 = por %p116, %p117
      %p120 = scmp.ne.s32.totalorder %s103, %s119
      %p121 = scmp.eq.s32.totalorder %s23, 0
      %p122 = por %p120, %p121
      %p123 = scmp.le.s32.totalorder 1, %s17
      %p124 = scmp.lt.s32.totalorder %s17, 7
      %p125 = pnand %p123, %p124
      %p126 = pneg %p125
      // Predicated region
      $region9: #{tpu_custom_call.1} parent=5 // pred_check
        _
      $region10: #{tpu_custom_call.1} parent=5 // pred_check_branch
        %128 = sbr.rel (%p125) target = $region12
      $region11: #{tpu_custom_call.1} parent=5 // pred_region
        %s129 = ssub.s32 %s17, 1
      $region12: #{tpu_custom_call.1} parent=5 // pred_fallthru
        _
      %p130 = scmp.lt.s32.totalorder %s17, 6
      // Predicated region
      $region13: #{tpu_custom_call.1} parent=5 // pred_check
        %p131 = pneg %p130
      $region14: #{tpu_custom_call.1} parent=5 // pred_check_branch
        %133 = sbr.rel (%p131) target = $region16
      $region15: #{tpu_custom_call.1} parent=5 // pred_region
        // Predicated region
        $region17: #{tpu_custom_call.1} parent=15 // pred_check
          %p134 = pneg %p53
        $region18: #{tpu_custom_call.1} parent=15 // pred_check_branch
          %136 = sbr.rel (%p134) target = $region20
        $region19: #{tpu_custom_call.1} parent=15 // pred_region
          %s137 = sand.u32 %s43, 1
          %s138 = scalar_lea.sflag [#allocation3], %s137
          %s139 = sand.u32 %s43, 1
          %s140 = smul.addr %s139, 40
          %s141 = scalar_lea.vmem [#allocation2], %s140
          %s142 = smul.u32 %s24, 3
          %s143 = sadd.s32 %s142, %s25
          %145 = vsyncadd %s138, 0
          %s146 = smul.addr %s143, 5
          %s147 = smul.addr %s146, 8
          %s148 = scalar_lea.hbm %s0, %s147
          %s150 = sshll.u32 %s148, 4
          %s151 = int_to_ptr.hbm [resolvable:$true] %s150
          %s152 = sshll.u32 %s141, 4
          %s153 = int_to_ptr.vmem [resolvable:$true] %s152
          %155 = dma.hbm_to_vmem [thread:$0]  %s151, 640, %s153, %s138
        $region20: #{tpu_custom_call.1} parent=15 // pred_fallthru
          _
        // Predicated region
        $region21: #{tpu_custom_call.1} parent=15 // pred_check
          %p156 = pneg %p83
        $region22: #{tpu_custom_call.1} parent=15 // pred_check_branch
          %158 = sbr.rel (%p156) target = $region24
        $region23: #{tpu_custom_call.1} parent=15 // pred_region
          %s159 = sand.u32 %s73, 1
          %s160 = scalar_lea.sflag [#allocation6], %s159
          %s161 = sand.u32 %s73, 1
          %s162 = smul.addr %s161, 40
          %s163 = scalar_lea.vmem [#allocation5], %s162
          %s164 = smul.u32 %s24, 3
          %s165 = sadd.s32 %s164, %s25
          %167 = vsyncadd %s160, 0
          %s168 = smul.addr %s165, 5
          %s169 = smul.addr %s168, 8
          %s170 = scalar_lea.hbm %s1, %s169
          %s172 = sshll.u32 %s170, 4
          %s173 = int_to_ptr.hbm [resolvable:$true] %s172
          %s174 = sshll.u32 %s163, 4
          %s175 = int_to_ptr.vmem [resolvable:$true] %s174
          %177 = dma.hbm_to_vmem [thread:$0]  %s173, 640, %s175, %s160
        $region24: #{tpu_custom_call.1} parent=15 // pred_fallthru
          _
      $region16: #{tpu_custom_call.1} parent=5 // pred_fallthru
        _
      %p178 = scmp.le.s32.totalorder 1, %s17
      %p179 = scmp.lt.s32.totalorder %s17, 7
      %p180 = pnand %p178, %p179
      %p181 = pneg %p180
      // Predicated region
      $region25: #{tpu_custom_call.1} parent=5 // pred_check
        _
      $region26: #{tpu_custom_call.1} parent=5 // pred_check_branch
        %183 = sbr.rel (%p180) target = $region28
      $region27: #{tpu_custom_call.1} parent=5 // pred_region
        %s184 = ssub.s32 %s17, 1
        %s185 = sand.u32 %s46, 1
        %s186 = scalar_lea.sflag [#allocation3], %s185
        %s187 = sand.u32 %s46, 1
        %s188 = smul.addr %s187, 40
        %s189 = scalar_lea.vmem [#allocation2], %s188
        // Predicated region
        $region29: #{tpu_custom_call.1} parent=27 // pred_check
          %p190 = pneg %p59
        $region30: #{tpu_custom_call.1} parent=27 // pred_check_branch
          %192 = sbr.rel (%p190) target = $region32
        $region31: #{tpu_custom_call.1} parent=27 // pred_region
          %194 = dma.done %s186, 640
        $region32: #{tpu_custom_call.1} parent=27 // pred_fallthru
          _
        %s195 = sand.u32 %s76, 1
        %s196 = scalar_lea.sflag [#allocation6], %s195
        %s197 = sand.u32 %s76, 1
        %s198 = smul.addr %s197, 40
        %s199 = scalar_lea.vmem [#allocation5], %s198
        // Predicated region
        $region33: #{tpu_custom_call.1} parent=27 // pred_check
          %p200 = pneg %p89
        $region34: #{tpu_custom_call.1} parent=27 // pred_check_branch
          %202 = sbr.rel (%p200) target = $region36
        $region35: #{tpu_custom_call.1} parent=27 // pred_region
          %204 = dma.done %s196, 640
        $region36: #{tpu_custom_call.1} parent=27 // pred_fallthru
          _
        %s205 = sand.u32 %s46, 1
        %s206 = scalar_lea.sflag [#allocation3], %s205
        %s207 = sand.u32 %s46, 1
        %s208 = smul.addr %s207, 40
        %s209 = scalar_lea.vmem [#allocation2], %s208
        %p210 = pneg %p59
        %p211 = pneg %p56
        %s212 = sand.u32 %s76, 1
        %s213 = scalar_lea.sflag [#allocation6], %s212
        %s214 = sand.u32 %s76, 1
        %s215 = smul.addr %s214, 40
        %s216 = scalar_lea.vmem [#allocation5], %s215
        %p217 = pneg %p89
        %p218 = pneg %p86
        %p219 = pneg %p115
        %p220 = pneg %p112
        %s221 = sand.u32 %s102, 1
        %s222 = scalar_lea.sflag [#allocation4], %s221
        %s223 = sand.u32 %s102, 1
        %s224 = smul.addr %s223, 3200
        %s225 = scalar_lea.vmem [#allocation7], %s224
        %s226 = smul.u32 %s26, 3
        %s227 = sadd.s32 %s226, %s27
        %s228 = smul.u32 %s26, 3
        %s229 = sadd.s32 %s228, %s27
        %p230 = scmp.eq.s32.totalorder %s27, 0
        // Predicated region
        $region37: #{tpu_custom_call.1} parent=27 // pred_check
          %p231 = pneg %p230
        $region38: #{tpu_custom_call.1} parent=27 // pred_check_branch
          %233 = sbr.rel (%p231) target = $region40
        $region39: #{tpu_custom_call.1} parent=27 // pred_region
          %234 = vst [vmem:[%s225] sm:$0xff] 0.0
          %235 = vst [vmem:[%s225 + $0x8] sm:$0xff] 0.0
          %236 = vst [vmem:[%s225 + $0x10] sm:$0xff] 0.0
          %237 = vst [vmem:[%s225 + $0x18] sm:$0xff] 0.0
          %238 = vst [vmem:[%s225 + $0x20] sm:$0xff] 0.0
          %239 = vst [vmem:[%s225 + $0x28] sm:$0xff] 0.0
          %240 = vst [vmem:[%s225 + $0x30] sm:$0xff] 0.0
          %241 = vst [vmem:[%s225 + $0x38] sm:$0xff] 0.0
          %242 = vst [vmem:[%s225 + $0x40] sm:$0xff] 0.0
          %243 = vst [vmem:[%s225 + $0x48] sm:$0xff] 0.0
          %244 = vst [vmem:[%s225 + $0x50] sm:$0xff] 0.0
          %245 = vst [vmem:[%s225 + $0x58] sm:$0xff] 0.0
          %246 = vst [vmem:[%s225 + $0x60] sm:$0xff] 0.0
          %247 = vst [vmem:[%s225 + $0x68] sm:$0xff] 0.0
          %248 = vst [vmem:[%s225 + $0x70] sm:$0xff] 0.0
          %249 = vst [vmem:[%s225 + $0x78] sm:$0xff] 0.0
          %250 = vst [vmem:[%s225 + $0x80] sm:$0xff] 0.0
          %251 = vst [vmem:[%s225 + $0x88] sm:$0xff] 0.0
          %252 = vst [vmem:[%s225 + $0x90] sm:$0xff] 0.0
          %253 = vst [vmem:[%s225 + $0x98] sm:$0xff] 0.0
          %254 = vst [vmem:[%s225 + $0xa0] sm:$0xff] 0.0
          %255 = vst [vmem:[%s225 + $0xa8] sm:$0xff] 0.0
          %256 = vst [vmem:[%s225 + $0xb0] sm:$0xff] 0.0
          %257 = vst [vmem:[%s225 + $0xb8] sm:$0xff] 0.0
          %258 = vst [vmem:[%s225 + $0xc0] sm:$0xff] 0.0
          %259 = vst [vmem:[%s225 + $0xc8] sm:$0xff] 0.0
          %260 = vst [vmem:[%s225 + $0xd0] sm:$0xff] 0.0
          %261 = vst [vmem:[%s225 + $0xd8] sm:$0xff] 0.0
          %262 = vst [vmem:[%s225 + $0xe0] sm:$0xff] 0.0
          %263 = vst [vmem:[%s225 + $0xe8] sm:$0xff] 0.0
          %264 = vst [vmem:[%s225 + $0xf0] sm:$0xff] 0.0
          %265 = vst [vmem:[%s225 + $0xf8] sm:$0xff] 0.0
          %266 = vst [vmem:[%s225 + $0x100] sm:$0xff] 0.0
          %267 = vst [vmem:[%s225 + $0x108] sm:$0xff] 0.0
          %268 = vst [vmem:[%s225 + $0x110] sm:$0xff] 0.0
          %269 = vst [vmem:[%s225 + $0x118] sm:$0xff] 0.0
          %270 = vst [vmem:[%s225 + $0x120] sm:$0xff] 0.0
          %271 = vst [vmem:[%s225 + $0x128] sm:$0xff] 0.0
          %272 = vst [vmem:[%s225 + $0x130] sm:$0xff] 0.0
          %273 = vst [vmem:[%s225 + $0x138] sm:$0xff] 0.0
          %274 = vst [vmem:[%s225 + $0x140] sm:$0xff] 0.0
          %275 = vst [vmem:[%s225 + $0x148] sm:$0xff] 0.0
          %276 = vst [vmem:[%s225 + $0x150] sm:$0xff] 0.0
          %277 = vst [vmem:[%s225 + $0x158] sm:$0xff] 0.0
          %278 = vst [vmem:[%s225 + $0x160] sm:$0xff] 0.0
          %279 = vst [vmem:[%s225 + $0x168] sm:$0xff] 0.0
          %280 = vst [vmem:[%s225 + $0x170] sm:$0xff] 0.0
          %281 = vst [vmem:[%s225 + $0x178] sm:$0xff] 0.0
          %282 = vst [vmem:[%s225 + $0x180] sm:$0xff] 0.0
          %283 = vst [vmem:[%s225 + $0x188] sm:$0xff] 0.0
          %284 = vst [vmem:[%s225 + $0x190] sm:$0xff] 0.0
          %285 = vst [vmem:[%s225 + $0x198] sm:$0xff] 0.0
          %286 = vst [vmem:[%s225 + $0x1a0] sm:$0xff] 0.0
          %287 = vst [vmem:[%s225 + $0x1a8] sm:$0xff] 0.0
          %288 = vst [vmem:[%s225 + $0x1b0] sm:$0xff] 0.0
          %289 = vst [vmem:[%s225 + $0x1b8] sm:$0xff] 0.0
          %290 = vst [vmem:[%s225 + $0x1c0] sm:$0xff] 0.0
          %291 = vst [vmem:[%s225 + $0x1c8] sm:$0xff] 0.0
          %292 = vst [vmem:[%s225 + $0x1d0] sm:$0xff] 0.0
          %293 = vst [vmem:[%s225 + $0x1d8] sm:$0xff] 0.0
          %294 = vst [vmem:[%s225 + $0x1e0] sm:$0xff] 0.0
          %295 = vst [vmem:[%s225 + $0x1e8] sm:$0xff] 0.0
          %296 = vst [vmem:[%s225 + $0x1f0] sm:$0xff] 0.0
          %297 = vst [vmem:[%s225 + $0x1f8] sm:$0xff] 0.0
          %298 = vst [vmem:[%s225 + $0x200] sm:$0xff] 0.0
          %299 = vst [vmem:[%s225 + $0x208] sm:$0xff] 0.0
          %300 = vst [vmem:[%s225 + $0x210] sm:$0xff] 0.0
          %301 = vst [vmem:[%s225 + $0x218] sm:$0xff] 0.0
          %302 = vst [vmem:[%s225 + $0x220] sm:$0xff] 0.0
          %303 = vst [vmem:[%s225 + $0x228] sm:$0xff] 0.0
          %304 = vst [vmem:[%s225 + $0x230] sm:$0xff] 0.0
          %305 = vst [vmem:[%s225 + $0x238] sm:$0xff] 0.0
          %306 = vst [vmem:[%s225 + $0x240] sm:$0xff] 0.0
          %307 = vst [vmem:[%s225 + $0x248] sm:$0xff] 0.0
          %308 = vst [vmem:[%s225 + $0x250] sm:$0xff] 0.0
          %309 = vst [vmem:[%s225 + $0x258] sm:$0xff] 0.0
          %310 = vst [vmem:[%s225 + $0x260] sm:$0xff] 0.0
          %311 = vst [vmem:[%s225 + $0x268] sm:$0xff] 0.0
          %312 = vst [vmem:[%s225 + $0x270] sm:$0xff] 0.0
          %313 = vst [vmem:[%s225 + $0x278] sm:$0xff] 0.0
          %314 = vst [vmem:[%s225 + $0x280] sm:$0xff] 0.0
          %315 = vst [vmem:[%s225 + $0x288] sm:$0xff] 0.0
          %316 = vst [vmem:[%s225 + $0x290] sm:$0xff] 0.0
          %317 = vst [vmem:[%s225 + $0x298] sm:$0xff] 0.0
          %318 = vst [vmem:[%s225 + $0x2a0] sm:$0xff] 0.0
          %319 = vst [vmem:[%s225 + $0x2a8] sm:$0xff] 0.0
          %320 = vst [vmem:[%s225 + $0x2b0] sm:$0xff] 0.0
          %321 = vst [vmem:[%s225 + $0x2b8] sm:$0xff] 0.0
          %322 = vst [vmem:[%s225 + $0x2c0] sm:$0xff] 0.0
          %323 = vst [vmem:[%s225 + $0x2c8] sm:$0xff] 0.0
          %324 = vst [vmem:[%s225 + $0x2d0] sm:$0xff] 0.0
          %325 = vst [vmem:[%s225 + $0x2d8] sm:$0xff] 0.0
          %326 = vst [vmem:[%s225 + $0x2e0] sm:$0xff] 0.0
          %327 = vst [vmem:[%s225 + $0x2e8] sm:$0xff] 0.0
          %328 = vst [vmem:[%s225 + $0x2f0] sm:$0xff] 0.0
          %329 = vst [vmem:[%s225 + $0x2f8] sm:$0xff] 0.0
          %330 = vst [vmem:[%s225 + $0x300] sm:$0xff] 0.0
          %331 = vst [vmem:[%s225 + $0x308] sm:$0xff] 0.0
          %332 = vst [vmem:[%s225 + $0x310] sm:$0xff] 0.0
          %333 = vst [vmem:[%s225 + $0x318] sm:$0xff] 0.0
          %334 = vst [vmem:[%s225 + $0x320] sm:$0xff] 0.0
          %335 = vst [vmem:[%s225 + $0x328] sm:$0xff] 0.0
          %336 = vst [vmem:[%s225 + $0x330] sm:$0xff] 0.0
          %337 = vst [vmem:[%s225 + $0x338] sm:$0xff] 0.0
          %338 = vst [vmem:[%s225 + $0x340] sm:$0xff] 0.0
          %339 = vst [vmem:[%s225 + $0x348] sm:$0xff] 0.0
          %340 = vst [vmem:[%s225 + $0x350] sm:$0xff] 0.0
          %341 = vst [vmem:[%s225 + $0x358] sm:$0xff] 0.0
          %342 = vst [vmem:[%s225 + $0x360] sm:$0xff] 0.0
          %343 = vst [vmem:[%s225 + $0x368] sm:$0xff] 0.0
          %344 = vst [vmem:[%s225 + $0x370] sm:$0xff] 0.0
          %345 = vst [vmem:[%s225 + $0x378] sm:$0xff] 0.0
          %346 = vst [vmem:[%s225 + $0x380] sm:$0xff] 0.0
          %347 = vst [vmem:[%s225 + $0x388] sm:$0xff] 0.0
          %348 = vst [vmem:[%s225 + $0x390] sm:$0xff] 0.0
          %349 = vst [vmem:[%s225 + $0x398] sm:$0xff] 0.0
          %350 = vst [vmem:[%s225 + $0x3a0] sm:$0xff] 0.0
          %351 = vst [vmem:[%s225 + $0x3a8] sm:$0xff] 0.0
          %352 = vst [vmem:[%s225 + $0x3b0] sm:$0xff] 0.0
          %353 = vst [vmem:[%s225 + $0x3b8] sm:$0xff] 0.0
          %354 = vst [vmem:[%s225 + $0x3c0] sm:$0xff] 0.0
          %355 = vst [vmem:[%s225 + $0x3c8] sm:$0xff] 0.0
          %356 = vst [vmem:[%s225 + $0x3d0] sm:$0xff] 0.0
          %357 = vst [vmem:[%s225 + $0x3d8] sm:$0xff] 0.0
          %358 = vst [vmem:[%s225 + $0x3e0] sm:$0xff] 0.0
          %359 = vst [vmem:[%s225 + $0x3e8] sm:$0xff] 0.0
          %360 = vst [vmem:[%s225 + $0x3f0] sm:$0xff] 0.0
          %361 = vst [vmem:[%s225 + $0x3f8] sm:$0xff] 0.0
          %362 = vst [vmem:[%s225 + $0x400] sm:$0xff] 0.0
          %363 = vst [vmem:[%s225 + $0x408] sm:$0xff] 0.0
          %364 = vst [vmem:[%s225 + $0x410] sm:$0xff] 0.0
          %365 = vst [vmem:[%s225 + $0x418] sm:$0xff] 0.0
          %366 = vst [vmem:[%s225 + $0x420] sm:$0xff] 0.0
          %367 = vst [vmem:[%s225 + $0x428] sm:$0xff] 0.0
          %368 = vst [vmem:[%s225 + $0x430] sm:$0xff] 0.0
          %369 = vst [vmem:[%s225 + $0x438] sm:$0xff] 0.0
          %370 = vst [vmem:[%s225 + $0x440] sm:$0xff] 0.0
          %371 = vst [vmem:[%s225 + $0x448] sm:$0xff] 0.0
          %372 = vst [vmem:[%s225 + $0x450] sm:$0xff] 0.0
          %373 = vst [vmem:[%s225 + $0x458] sm:$0xff] 0.0
          %374 = vst [vmem:[%s225 + $0x460] sm:$0xff] 0.0
          %375 = vst [vmem:[%s225 + $0x468] sm:$0xff] 0.0
          %376 = vst [vmem:[%s225 + $0x470] sm:$0xff] 0.0
          %377 = vst [vmem:[%s225 + $0x478] sm:$0xff] 0.0
          %378 = vst [vmem:[%s225 + $0x480] sm:$0xff] 0.0
          %379 = vst [vmem:[%s225 + $0x488] sm:$0xff] 0.0
          %380 = vst [vmem:[%s225 + $0x490] sm:$0xff] 0.0
          %381 = vst [vmem:[%s225 + $0x498] sm:$0xff] 0.0
          %382 = vst [vmem:[%s225 + $0x4a0] sm:$0xff] 0.0
          %383 = vst [vmem:[%s225 + $0x4a8] sm:$0xff] 0.0
          %384 = vst [vmem:[%s225 + $0x4b0] sm:$0xff] 0.0
          %385 = vst [vmem:[%s225 + $0x4b8] sm:$0xff] 0.0
          %386 = vst [vmem:[%s225 + $0x4c0] sm:$0xff] 0.0
          %387 = vst [vmem:[%s225 + $0x4c8] sm:$0xff] 0.0
          %388 = vst [vmem:[%s225 + $0x4d0] sm:$0xff] 0.0
          %389 = vst [vmem:[%s225 + $0x4d8] sm:$0xff] 0.0
          %390 = vst [vmem:[%s225 + $0x4e0] sm:$0xff] 0.0
          %391 = vst [vmem:[%s225 + $0x4e8] sm:$0xff] 0.0
          %392 = vst [vmem:[%s225 + $0x4f0] sm:$0xff] 0.0
          %393 = vst [vmem:[%s225 + $0x4f8] sm:$0xff] 0.0
          %394 = vst [vmem:[%s225 + $0x500] sm:$0xff] 0.0
          %395 = vst [vmem:[%s225 + $0x508] sm:$0xff] 0.0
          %396 = vst [vmem:[%s225 + $0x510] sm:$0xff] 0.0
          %397 = vst [vmem:[%s225 + $0x518] sm:$0xff] 0.0
          %398 = vst [vmem:[%s225 + $0x520] sm:$0xff] 0.0
          %399 = vst [vmem:[%s225 + $0x528] sm:$0xff] 0.0
          %400 = vst [vmem:[%s225 + $0x530] sm:$0xff] 0.0
          %401 = vst [vmem:[%s225 + $0x538] sm:$0xff] 0.0
          %402 = vst [vmem:[%s225 + $0x540] sm:$0xff] 0.0
          %403 = vst [vmem:[%s225 + $0x548] sm:$0xff] 0.0
          %404 = vst [vmem:[%s225 + $0x550] sm:$0xff] 0.0
          %405 = vst [vmem:[%s225 + $0x558] sm:$0xff] 0.0
          %406 = vst [vmem:[%s225 + $0x560] sm:$0xff] 0.0
          %407 = vst [vmem:[%s225 + $0x568] sm:$0xff] 0.0
          %408 = vst [vmem:[%s225 + $0x570] sm:$0xff] 0.0
          %409 = vst [vmem:[%s225 + $0x578] sm:$0xff] 0.0
          %410 = vst [vmem:[%s225 + $0x580] sm:$0xff] 0.0
          %411 = vst [vmem:[%s225 + $0x588] sm:$0xff] 0.0
          %412 = vst [vmem:[%s225 + $0x590] sm:$0xff] 0.0
          %413 = vst [vmem:[%s225 + $0x598] sm:$0xff] 0.0
          %414 = vst [vmem:[%s225 + $0x5a0] sm:$0xff] 0.0
          %415 = vst [vmem:[%s225 + $0x5a8] sm:$0xff] 0.0
          %416 = vst [vmem:[%s225 + $0x5b0] sm:$0xff] 0.0
          %417 = vst [vmem:[%s225 + $0x5b8] sm:$0xff] 0.0
          %418 = vst [vmem:[%s225 + $0x5c0] sm:$0xff] 0.0
          %419 = vst [vmem:[%s225 + $0x5c8] sm:$0xff] 0.0
          %420 = vst [vmem:[%s225 + $0x5d0] sm:$0xff] 0.0
          %421 = vst [vmem:[%s225 + $0x5d8] sm:$0xff] 0.0
          %422 = vst [vmem:[%s225 + $0x5e0] sm:$0xff] 0.0
          %423 = vst [vmem:[%s225 + $0x5e8] sm:$0xff] 0.0
          %424 = vst [vmem:[%s225 + $0x5f0] sm:$0xff] 0.0
          %425 = vst [vmem:[%s225 + $0x5f8] sm:$0xff] 0.0
          %426 = vst [vmem:[%s225 + $0x600] sm:$0xff] 0.0
          %427 = vst [vmem:[%s225 + $0x608] sm:$0xff] 0.0
          %428 = vst [vmem:[%s225 + $0x610] sm:$0xff] 0.0
          %429 = vst [vmem:[%s225 + $0x618] sm:$0xff] 0.0
          %430 = vst [vmem:[%s225 + $0x620] sm:$0xff] 0.0
          %431 = vst [vmem:[%s225 + $0x628] sm:$0xff] 0.0
          %432 = vst [vmem:[%s225 + $0x630] sm:$0xff] 0.0
          %433 = vst [vmem:[%s225 + $0x638] sm:$0xff] 0.0
          %434 = vst [vmem:[%s225 + $0x640] sm:$0xff] 0.0
          %435 = vst [vmem:[%s225 + $0x648] sm:$0xff] 0.0
          %436 = vst [vmem:[%s225 + $0x650] sm:$0xff] 0.0
          %437 = vst [vmem:[%s225 + $0x658] sm:$0xff] 0.0
          %438 = vst [vmem:[%s225 + $0x660] sm:$0xff] 0.0
          %439 = vst [vmem:[%s225 + $0x668] sm:$0xff] 0.0
          %440 = vst [vmem:[%s225 + $0x670] sm:$0xff] 0.0
          %441 = vst [vmem:[%s225 + $0x678] sm:$0xff] 0.0
          %442 = vst [vmem:[%s225 + $0x680] sm:$0xff] 0.0
          %443 = vst [vmem:[%s225 + $0x688] sm:$0xff] 0.0
          %444 = vst [vmem:[%s225 + $0x690] sm:$0xff] 0.0
          %445 = vst [vmem:[%s225 + $0x698] sm:$0xff] 0.0
          %446 = vst [vmem:[%s225 + $0x6a0] sm:$0xff] 0.0
          %447 = vst [vmem:[%s225 + $0x6a8] sm:$0xff] 0.0
          %448 = vst [vmem:[%s225 + $0x6b0] sm:$0xff] 0.0
          %449 = vst [vmem:[%s225 + $0x6b8] sm:$0xff] 0.0
          %450 = vst [vmem:[%s225 + $0x6c0] sm:$0xff] 0.0
          %451 = vst [vmem:[%s225 + $0x6c8] sm:$0xff] 0.0
          %452 = vst [vmem:[%s225 + $0x6d0] sm:$0xff] 0.0
          %453 = vst [vmem:[%s225 + $0x6d8] sm:$0xff] 0.0
          %454 = vst [vmem:[%s225 + $0x6e0] sm:$0xff] 0.0
          %455 = vst [vmem:[%s225 + $0x6e8] sm:$0xff] 0.0
          %456 = vst [vmem:[%s225 + $0x6f0] sm:$0xff] 0.0
          %457 = vst [vmem:[%s225 + $0x6f8] sm:$0xff] 0.0
          %458 = vst [vmem:[%s225 + $0x700] sm:$0xff] 0.0
          %459 = vst [vmem:[%s225 + $0x708] sm:$0xff] 0.0
          %460 = vst [vmem:[%s225 + $0x710] sm:$0xff] 0.0
          %461 = vst [vmem:[%s225 + $0x718] sm:$0xff] 0.0
          %462 = vst [vmem:[%s225 + $0x720] sm:$0xff] 0.0
          %463 = vst [vmem:[%s225 + $0x728] sm:$0xff] 0.0
          %464 = vst [vmem:[%s225 + $0x730] sm:$0xff] 0.0
          %465 = vst [vmem:[%s225 + $0x738] sm:$0xff] 0.0
          %466 = vst [vmem:[%s225 + $0x740] sm:$0xff] 0.0
          %467 = vst [vmem:[%s225 + $0x748] sm:$0xff] 0.0
          %468 = vst [vmem:[%s225 + $0x750] sm:$0xff] 0.0
          %469 = vst [vmem:[%s225 + $0x758] sm:$0xff] 0.0
          %470 = vst [vmem:[%s225 + $0x760] sm:$0xff] 0.0
          %471 = vst [vmem:[%s225 + $0x768] sm:$0xff] 0.0
          %472 = vst [vmem:[%s225 + $0x770] sm:$0xff] 0.0
          %473 = vst [vmem:[%s225 + $0x778] sm:$0xff] 0.0
          %474 = vst [vmem:[%s225 + $0x780] sm:$0xff] 0.0
          %475 = vst [vmem:[%s225 + $0x788] sm:$0xff] 0.0
          %476 = vst [vmem:[%s225 + $0x790] sm:$0xff] 0.0
          %477 = vst [vmem:[%s225 + $0x798] sm:$0xff] 0.0
          %478 = vst [vmem:[%s225 + $0x7a0] sm:$0xff] 0.0
          %479 = vst [vmem:[%s225 + $0x7a8] sm:$0xff] 0.0
          %480 = vst [vmem:[%s225 + $0x7b0] sm:$0xff] 0.0
          %481 = vst [vmem:[%s225 + $0x7b8] sm:$0xff] 0.0
          %482 = vst [vmem:[%s225 + $0x7c0] sm:$0xff] 0.0
          %483 = vst [vmem:[%s225 + $0x7c8] sm:$0xff] 0.0
          %484 = vst [vmem:[%s225 + $0x7d0] sm:$0xff] 0.0
          %485 = vst [vmem:[%s225 + $0x7d8] sm:$0xff] 0.0
          %486 = vst [vmem:[%s225 + $0x7e0] sm:$0xff] 0.0
          %487 = vst [vmem:[%s225 + $0x7e8] sm:$0xff] 0.0
          %488 = vst [vmem:[%s225 + $0x7f0] sm:$0xff] 0.0
          %489 = vst [vmem:[%s225 + $0x7f8] sm:$0xff] 0.0
          %490 = vst [vmem:[%s225 + $0x800] sm:$0xff] 0.0
          %491 = vst [vmem:[%s225 + $0x808] sm:$0xff] 0.0
          %492 = vst [vmem:[%s225 + $0x810] sm:$0xff] 0.0
          %493 = vst [vmem:[%s225 + $0x818] sm:$0xff] 0.0
          %494 = vst [vmem:[%s225 + $0x820] sm:$0xff] 0.0
          %495 = vst [vmem:[%s225 + $0x828] sm:$0xff] 0.0
          %496 = vst [vmem:[%s225 + $0x830] sm:$0xff] 0.0
          %497 = vst [vmem:[%s225 + $0x838] sm:$0xff] 0.0
          %498 = vst [vmem:[%s225 + $0x840] sm:$0xff] 0.0
          %499 = vst [vmem:[%s225 + $0x848] sm:$0xff] 0.0
          %500 = vst [vmem:[%s225 + $0x850] sm:$0xff] 0.0
          %501 = vst [vmem:[%s225 + $0x858] sm:$0xff] 0.0
          %502 = vst [vmem:[%s225 + $0x860] sm:$0xff] 0.0
          %503 = vst [vmem:[%s225 + $0x868] sm:$0xff] 0.0
          %504 = vst [vmem:[%s225 + $0x870] sm:$0xff] 0.0
          %505 = vst [vmem:[%s225 + $0x878] sm:$0xff] 0.0
          %506 = vst [vmem:[%s225 + $0x880] sm:$0xff] 0.0
          %507 = vst [vmem:[%s225 + $0x888] sm:$0xff] 0.0
          %508 = vst [vmem:[%s225 + $0x890] sm:$0xff] 0.0
          %509 = vst [vmem:[%s225 + $0x898] sm:$0xff] 0.0
          %510 = vst [vmem:[%s225 + $0x8a0] sm:$0xff] 0.0
          %511 = vst [vmem:[%s225 + $0x8a8] sm:$0xff] 0.0
          %512 = vst [vmem:[%s225 + $0x8b0] sm:$0xff] 0.0
          %513 = vst [vmem:[%s225 + $0x8b8] sm:$0xff] 0.0
          %514 = vst [vmem:[%s225 + $0x8c0] sm:$0xff] 0.0
          %515 = vst [vmem:[%s225 + $0x8c8] sm:$0xff] 0.0
          %516 = vst [vmem:[%s225 + $0x8d0] sm:$0xff] 0.0
          %517 = vst [vmem:[%s225 + $0x8d8] sm:$0xff] 0.0
          %518 = vst [vmem:[%s225 + $0x8e0] sm:$0xff] 0.0
          %519 = vst [vmem:[%s225 + $0x8e8] sm:$0xff] 0.0
          %520 = vst [vmem:[%s225 + $0x8f0] sm:$0xff] 0.0
          %521 = vst [vmem:[%s225 + $0x8f8] sm:$0xff] 0.0
          %522 = vst [vmem:[%s225 + $0x900] sm:$0xff] 0.0
          %523 = vst [vmem:[%s225 + $0x908] sm:$0xff] 0.0
          %524 = vst [vmem:[%s225 + $0x910] sm:$0xff] 0.0
          %525 = vst [vmem:[%s225 + $0x918] sm:$0xff] 0.0
          %526 = vst [vmem:[%s225 + $0x920] sm:$0xff] 0.0
          %527 = vst [vmem:[%s225 + $0x928] sm:$0xff] 0.0
          %528 = vst [vmem:[%s225 + $0x930] sm:$0xff] 0.0
          %529 = vst [vmem:[%s225 + $0x938] sm:$0xff] 0.0
          %530 = vst [vmem:[%s225 + $0x940] sm:$0xff] 0.0
          %531 = vst [vmem:[%s225 + $0x948] sm:$0xff] 0.0
          %532 = vst [vmem:[%s225 + $0x950] sm:$0xff] 0.0
          %533 = vst [vmem:[%s225 + $0x958] sm:$0xff] 0.0
          %534 = vst [vmem:[%s225 + $0x960] sm:$0xff] 0.0
          %535 = vst [vmem:[%s225 + $0x968] sm:$0xff] 0.0
          %536 = vst [vmem:[%s225 + $0x970] sm:$0xff] 0.0
          %537 = vst [vmem:[%s225 + $0x978] sm:$0xff] 0.0
          %538 = vst [vmem:[%s225 + $0x980] sm:$0xff] 0.0
          %539 = vst [vmem:[%s225 + $0x988] sm:$0xff] 0.0
          %540 = vst [vmem:[%s225 + $0x990] sm:$0xff] 0.0
          %541 = vst [vmem:[%s225 + $0x998] sm:$0xff] 0.0
          %542 = vst [vmem:[%s225 + $0x9a0] sm:$0xff] 0.0
          %543 = vst [vmem:[%s225 + $0x9a8] sm:$0xff] 0.0
          %544 = vst [vmem:[%s225 + $0x9b0] sm:$0xff] 0.0
          %545 = vst [vmem:[%s225 + $0x9b8] sm:$0xff] 0.0
          %546 = vst [vmem:[%s225 + $0x9c0] sm:$0xff] 0.0
          %547 = vst [vmem:[%s225 + $0x9c8] sm:$0xff] 0.0
          %548 = vst [vmem:[%s225 + $0x9d0] sm:$0xff] 0.0
          %549 = vst [vmem:[%s225 + $0x9d8] sm:$0xff] 0.0
          %550 = vst [vmem:[%s225 + $0x9e0] sm:$0xff] 0.0
          %551 = vst [vmem:[%s225 + $0x9e8] sm:$0xff] 0.0
          %552 = vst [vmem:[%s225 + $0x9f0] sm:$0xff] 0.0
          %553 = vst [vmem:[%s225 + $0x9f8] sm:$0xff] 0.0
          %554 = vst [vmem:[%s225 + $0xa00] sm:$0xff] 0.0
          %555 = vst [vmem:[%s225 + $0xa08] sm:$0xff] 0.0
          %556 = vst [vmem:[%s225 + $0xa10] sm:$0xff] 0.0
          %557 = vst [vmem:[%s225 + $0xa18] sm:$0xff] 0.0
          %558 = vst [vmem:[%s225 + $0xa20] sm:$0xff] 0.0
          %559 = vst [vmem:[%s225 + $0xa28] sm:$0xff] 0.0
          %560 = vst [vmem:[%s225 + $0xa30] sm:$0xff] 0.0
          %561 = vst [vmem:[%s225 + $0xa38] sm:$0xff] 0.0
          %562 = vst [vmem:[%s225 + $0xa40] sm:$0xff] 0.0
          %563 = vst [vmem:[%s225 + $0xa48] sm:$0xff] 0.0
          %564 = vst [vmem:[%s225 + $0xa50] sm:$0xff] 0.0
          %565 = vst [vmem:[%s225 + $0xa58] sm:$0xff] 0.0
          %566 = vst [vmem:[%s225 + $0xa60] sm:$0xff] 0.0
          %567 = vst [vmem:[%s225 + $0xa68] sm:$0xff] 0.0
          %568 = vst [vmem:[%s225 + $0xa70] sm:$0xff] 0.0
          %569 = vst [vmem:[%s225 + $0xa78] sm:$0xff] 0.0
          %570 = vst [vmem:[%s225 + $0xa80] sm:$0xff] 0.0
          %571 = vst [vmem:[%s225 + $0xa88] sm:$0xff] 0.0
          %572 = vst [vmem:[%s225 + $0xa90] sm:$0xff] 0.0
          %573 = vst [vmem:[%s225 + $0xa98] sm:$0xff] 0.0
          %574 = vst [vmem:[%s225 + $0xaa0] sm:$0xff] 0.0
          %575 = vst [vmem:[%s225 + $0xaa8] sm:$0xff] 0.0
          %576 = vst [vmem:[%s225 + $0xab0] sm:$0xff] 0.0
          %577 = vst [vmem:[%s225 + $0xab8] sm:$0xff] 0.0
          %578 = vst [vmem:[%s225 + $0xac0] sm:$0xff] 0.0
          %579 = vst [vmem:[%s225 + $0xac8] sm:$0xff] 0.0
          %580 = vst [vmem:[%s225 + $0xad0] sm:$0xff] 0.0
          %581 = vst [vmem:[%s225 + $0xad8] sm:$0xff] 0.0
          %582 = vst [vmem:[%s225 + $0xae0] sm:$0xff] 0.0
          %583 = vst [vmem:[%s225 + $0xae8] sm:$0xff] 0.0
          %584 = vst [vmem:[%s225 + $0xaf0] sm:$0xff] 0.0
          %585 = vst [vmem:[%s225 + $0xaf8] sm:$0xff] 0.0
          %586 = vst [vmem:[%s225 + $0xb00] sm:$0xff] 0.0
          %587 = vst [vmem:[%s225 + $0xb08] sm:$0xff] 0.0
          %588 = vst [vmem:[%s225 + $0xb10] sm:$0xff] 0.0
          %589 = vst [vmem:[%s225 + $0xb18] sm:$0xff] 0.0
          %590 = vst [vmem:[%s225 + $0xb20] sm:$0xff] 0.0
          %591 = vst [vmem:[%s225 + $0xb28] sm:$0xff] 0.0
          %592 = vst [vmem:[%s225 + $0xb30] sm:$0xff] 0.0
          %593 = vst [vmem:[%s225 + $0xb38] sm:$0xff] 0.0
          %594 = vst [vmem:[%s225 + $0xb40] sm:$0xff] 0.0
          %595 = vst [vmem:[%s225 + $0xb48] sm:$0xff] 0.0
          %596 = vst [vmem:[%s225 + $0xb50] sm:$0xff] 0.0
          %597 = vst [vmem:[%s225 + $0xb58] sm:$0xff] 0.0
          %598 = vst [vmem:[%s225 + $0xb60] sm:$0xff] 0.0
          %599 = vst [vmem:[%s225 + $0xb68] sm:$0xff] 0.0
          %600 = vst [vmem:[%s225 + $0xb70] sm:$0xff] 0.0
          %601 = vst [vmem:[%s225 + $0xb78] sm:$0xff] 0.0
          %602 = vst [vmem:[%s225 + $0xb80] sm:$0xff] 0.0
          %603 = vst [vmem:[%s225 + $0xb88] sm:$0xff] 0.0
          %604 = vst [vmem:[%s225 + $0xb90] sm:$0xff] 0.0
          %605 = vst [vmem:[%s225 + $0xb98] sm:$0xff] 0.0
          %606 = vst [vmem:[%s225 + $0xba0] sm:$0xff] 0.0
          %607 = vst [vmem:[%s225 + $0xba8] sm:$0xff] 0.0
          %608 = vst [vmem:[%s225 + $0xbb0] sm:$0xff] 0.0
          %609 = vst [vmem:[%s225 + $0xbb8] sm:$0xff] 0.0
          %610 = vst [vmem:[%s225 + $0xbc0] sm:$0xff] 0.0
          %611 = vst [vmem:[%s225 + $0xbc8] sm:$0xff] 0.0
          %612 = vst [vmem:[%s225 + $0xbd0] sm:$0xff] 0.0
          %613 = vst [vmem:[%s225 + $0xbd8] sm:$0xff] 0.0
          %614 = vst [vmem:[%s225 + $0xbe0] sm:$0xff] 0.0
          %615 = vst [vmem:[%s225 + $0xbe8] sm:$0xff] 0.0
          %616 = vst [vmem:[%s225 + $0xbf0] sm:$0xff] 0.0
          %617 = vst [vmem:[%s225 + $0xbf8] sm:$0xff] 0.0
          %618 = vst [vmem:[%s225 + $0xc00] sm:$0xff] 0.0
          %619 = vst [vmem:[%s225 + $0xc08] sm:$0xff] 0.0
          %620 = vst [vmem:[%s225 + $0xc10] sm:$0xff] 0.0
          %621 = vst [vmem:[%s225 + $0xc18] sm:$0xff] 0.0
          %622 = vst [vmem:[%s225 + $0xc20] sm:$0xff] 0.0
          %623 = vst [vmem:[%s225 + $0xc28] sm:$0xff] 0.0
          %624 = vst [vmem:[%s225 + $0xc30] sm:$0xff] 0.0
          %625 = vst [vmem:[%s225 + $0xc38] sm:$0xff] 0.0
          %626 = vst [vmem:[%s225 + $0xc40] sm:$0xff] 0.0
          %627 = vst [vmem:[%s225 + $0xc48] sm:$0xff] 0.0
          %628 = vst [vmem:[%s225 + $0xc50] sm:$0xff] 0.0
          %629 = vst [vmem:[%s225 + $0xc58] sm:$0xff] 0.0
          %630 = vst [vmem:[%s225 + $0xc60] sm:$0xff] 0.0
          %631 = vst [vmem:[%s225 + $0xc68] sm:$0xff] 0.0
          %632 = vst [vmem:[%s225 + $0xc70] sm:$0xff] 0.0
          %633 = vst [vmem:[%s225 + $0xc78] sm:$0xff] 0.0
        $region40: #{tpu_custom_call.1} parent=27 // pred_fallthru
          _
        %v634 = vld [vmem:[%s189] sm:$0xff]
        %v635 = vld [vmem:[%s189 + $0x8] sm:$0xff]
        %v636 = vld [vmem:[%s189 + $0x10] sm:$0xff]
        %v637 = vld [vmem:[%s189 + $0x18] sm:$0xff]
        %v638 = vld [vmem:[%s189 + $0x20] sm:$0xff]
        %v639 = vld [vmem:[%s199] sm:$0xff]
        %v640 = vld [vmem:[%s199 + $0x8] sm:$0xff]
        %v641 = vld [vmem:[%s199 + $0x10] sm:$0xff]
        %v642 = vld [vmem:[%s199 + $0x18] sm:$0xff]
        %v643 = vld [vmem:[%s199 + $0x20] sm:$0xff]
        %v644 = vsub.f32 %v634, %v639
        %v645 = vsub.f32 %v635, %v640
        %v646 = vsub.f32 %v636, %v641
        %v647 = vsub.f32 %v637, %v642
        %v648 = vsub.f32 %v638, %v643
        %v649 = vand.u32 2147483647, %v644
        %v650 = vand.u32 2147483647, %v645
        %v651 = vand.u32 2147483647, %v646
        %v652 = vand.u32 2147483647, %v647
        %v653 = vand.u32 2147483647, %v648
        %v654 = vld [vmem:[%s225] sm:$0xff]
        %v655 = vld [vmem:[%s225 + $0x8] sm:$0xff]
        %v656 = vld [vmem:[%s225 + $0x10] sm:$0xff]
        %v657 = vld [vmem:[%s225 + $0x18] sm:$0xff]
        %v658 = vld [vmem:[%s225 + $0x20] sm:$0xff]
        %v659 = vld [vmem:[%s225 + $0x28] sm:$0xff]
        %v660 = vld [vmem:[%s225 + $0x30] sm:$0xff]
        %v661 = vld [vmem:[%s225 + $0x38] sm:$0xff]
        %v662 = vld [vmem:[%s225 + $0x40] sm:$0xff]
        %v663 = vld [vmem:[%s225 + $0x48] sm:$0xff]
        %v664 = vld [vmem:[%s225 + $0x50] sm:$0xff]
        %v665 = vld [vmem:[%s225 + $0x58] sm:$0xff]
        %v666 = vld [vmem:[%s225 + $0x60] sm:$0xff]
        %v667 = vld [vmem:[%s225 + $0x68] sm:$0xff]
        %v668 = vld [vmem:[%s225 + $0x70] sm:$0xff]
        %v669 = vld [vmem:[%s225 + $0x78] sm:$0xff]
        %v670 = vld [vmem:[%s225 + $0x80] sm:$0xff]
        %v671 = vld [vmem:[%s225 + $0x88] sm:$0xff]
        %v672 = vld [vmem:[%s225 + $0x90] sm:$0xff]
        %v673 = vld [vmem:[%s225 + $0x98] sm:$0xff]
        %v674 = vld [vmem:[%s225 + $0xa0] sm:$0xff]
        %v675 = vld [vmem:[%s225 + $0xa8] sm:$0xff]
        %v676 = vld [vmem:[%s225 + $0xb0] sm:$0xff]
        %v677 = vld [vmem:[%s225 + $0xb8] sm:$0xff]
        %v678 = vld [vmem:[%s225 + $0xc0] sm:$0xff]
        %v679 = vld [vmem:[%s225 + $0xc8] sm:$0xff]
        %v680 = vld [vmem:[%s225 + $0xd0] sm:$0xff]
        %v681 = vld [vmem:[%s225 + $0xd8] sm:$0xff]
        %v682 = vld [vmem:[%s225 + $0xe0] sm:$0xff]
        %v683 = vld [vmem:[%s225 + $0xe8] sm:$0xff]
        %v684 = vld [vmem:[%s225 + $0xf0] sm:$0xff]
        %v685 = vld [vmem:[%s225 + $0xf8] sm:$0xff]
        %v686 = vld [vmem:[%s225 + $0x100] sm:$0xff]
        %v687 = vld [vmem:[%s225 + $0x108] sm:$0xff]
        %v688 = vld [vmem:[%s225 + $0x110] sm:$0xff]
        %v689 = vld [vmem:[%s225 + $0x118] sm:$0xff]
        %v690 = vld [vmem:[%s225 + $0x120] sm:$0xff]
        %v691 = vld [vmem:[%s225 + $0x128] sm:$0xff]
        %v692 = vld [vmem:[%s225 + $0x130] sm:$0xff]
        %v693 = vld [vmem:[%s225 + $0x138] sm:$0xff]
        %v694 = vld [vmem:[%s225 + $0x140] sm:$0xff]
        %v695 = vld [vmem:[%s225 + $0x148] sm:$0xff]
        %v696 = vld [vmem:[%s225 + $0x150] sm:$0xff]
        %v697 = vld [vmem:[%s225 + $0x158] sm:$0xff]
        %v698 = vld [vmem:[%s225 + $0x160] sm:$0xff]
        %v699 = vld [vmem:[%s225 + $0x168] sm:$0xff]
        %v700 = vld [vmem:[%s225 + $0x170] sm:$0xff]
        %v701 = vld [vmem:[%s225 + $0x178] sm:$0xff]
        %v702 = vld [vmem:[%s225 + $0x180] sm:$0xff]
        %v703 = vld [vmem:[%s225 + $0x188] sm:$0xff]
        %v704 = vld [vmem:[%s225 + $0x190] sm:$0xff]
        %v705 = vld [vmem:[%s225 + $0x198] sm:$0xff]
        %v706 = vld [vmem:[%s225 + $0x1a0] sm:$0xff]
        %v707 = vld [vmem:[%s225 + $0x1a8] sm:$0xff]
        %v708 = vld [vmem:[%s225 + $0x1b0] sm:$0xff]
        %v709 = vld [vmem:[%s225 + $0x1b8] sm:$0xff]
        %v710 = vld [vmem:[%s225 + $0x1c0] sm:$0xff]
        %v711 = vld [vmem:[%s225 + $0x1c8] sm:$0xff]
        %v712 = vld [vmem:[%s225 + $0x1d0] sm:$0xff]
        %v713 = vld [vmem:[%s225 + $0x1d8] sm:$0xff]
        %v714 = vld [vmem:[%s225 + $0x1e0] sm:$0xff]
        %v715 = vld [vmem:[%s225 + $0x1e8] sm:$0xff]
        %v716 = vld [vmem:[%s225 + $0x1f0] sm:$0xff]
        %v717 = vld [vmem:[%s225 + $0x1f8] sm:$0xff]
        %v718 = vld [vmem:[%s225 + $0x200] sm:$0xff]
        %v719 = vld [vmem:[%s225 + $0x208] sm:$0xff]
        %v720 = vld [vmem:[%s225 + $0x210] sm:$0xff]
        %v721 = vld [vmem:[%s225 + $0x218] sm:$0xff]
        %v722 = vld [vmem:[%s225 + $0x220] sm:$0xff]
        %v723 = vld [vmem:[%s225 + $0x228] sm:$0xff]
        %v724 = vld [vmem:[%s225 + $0x230] sm:$0xff]
        %v725 = vld [vmem:[%s225 + $0x238] sm:$0xff]
        %v726 = vld [vmem:[%s225 + $0x240] sm:$0xff]
        %v727 = vld [vmem:[%s225 + $0x248] sm:$0xff]
        %v728 = vld [vmem:[%s225 + $0x250] sm:$0xff]
        %v729 = vld [vmem:[%s225 + $0x258] sm:$0xff]
        %v730 = vld [vmem:[%s225 + $0x260] sm:$0xff]
        %v731 = vld [vmem:[%s225 + $0x268] sm:$0xff]
        %v732 = vld [vmem:[%s225 + $0x270] sm:$0xff]
        %v733 = vld [vmem:[%s225 + $0x278] sm:$0xff]
        %v734 = vld [vmem:[%s225 + $0x280] sm:$0xff]
        %v735 = vld [vmem:[%s225 + $0x288] sm:$0xff]
        %v736 = vld [vmem:[%s225 + $0x290] sm:$0xff]
        %v737 = vld [vmem:[%s225 + $0x298] sm:$0xff]
        %v738 = vld [vmem:[%s225 + $0x2a0] sm:$0xff]
        %v739 = vld [vmem:[%s225 + $0x2a8] sm:$0xff]
        %v740 = vld [vmem:[%s225 + $0x2b0] sm:$0xff]
        %v741 = vld [vmem:[%s225 + $0x2b8] sm:$0xff]
        %v742 = vld [vmem:[%s225 + $0x2c0] sm:$0xff]
        %v743 = vld [vmem:[%s225 + $0x2c8] sm:$0xff]
        %v744 = vld [vmem:[%s225 + $0x2d0] sm:$0xff]
        %v745 = vld [vmem:[%s225 + $0x2d8] sm:$0xff]
        %v746 = vld [vmem:[%s225 + $0x2e0] sm:$0xff]
        %v747 = vld [vmem:[%s225 + $0x2e8] sm:$0xff]
        %v748 = vld [vmem:[%s225 + $0x2f0] sm:$0xff]
        %v749 = vld [vmem:[%s225 + $0x2f8] sm:$0xff]
        %v750 = vld [vmem:[%s225 + $0x300] sm:$0xff]
        %v751 = vld [vmem:[%s225 + $0x308] sm:$0xff]
        %v752 = vld [vmem:[%s225 + $0x310] sm:$0xff]
        %v753 = vld [vmem:[%s225 + $0x318] sm:$0xff]
        %v754 = vld [vmem:[%s225 + $0x320] sm:$0xff]
        %v755 = vld [vmem:[%s225 + $0x328] sm:$0xff]
        %v756 = vld [vmem:[%s225 + $0x330] sm:$0xff]
        %v757 = vld [vmem:[%s225 + $0x338] sm:$0xff]
        %v758 = vld [vmem:[%s225 + $0x340] sm:$0xff]
        %v759 = vld [vmem:[%s225 + $0x348] sm:$0xff]
        %v760 = vld [vmem:[%s225 + $0x350] sm:$0xff]
        %v761 = vld [vmem:[%s225 + $0x358] sm:$0xff]
        %v762 = vld [vmem:[%s225 + $0x360] sm:$0xff]
        %v763 = vld [vmem:[%s225 + $0x368] sm:$0xff]
        %v764 = vld [vmem:[%s225 + $0x370] sm:$0xff]
        %v765 = vld [vmem:[%s225 + $0x378] sm:$0xff]
        %v766 = vld [vmem:[%s225 + $0x380] sm:$0xff]
        %v767 = vld [vmem:[%s225 + $0x388] sm:$0xff]
        %v768 = vld [vmem:[%s225 + $0x390] sm:$0xff]
        %v769 = vld [vmem:[%s225 + $0x398] sm:$0xff]
        %v770 = vld [vmem:[%s225 + $0x3a0] sm:$0xff]
        %v771 = vld [vmem:[%s225 + $0x3a8] sm:$0xff]
        %v772 = vld [vmem:[%s225 + $0x3b0] sm:$0xff]
        %v773 = vld [vmem:[%s225 + $0x3b8] sm:$0xff]
        %v774 = vld [vmem:[%s225 + $0x3c0] sm:$0xff]
        %v775 = vld [vmem:[%s225 + $0x3c8] sm:$0xff]
        %v776 = vld [vmem:[%s225 + $0x3d0] sm:$0xff]
        %v777 = vld [vmem:[%s225 + $0x3d8] sm:$0xff]
        %v778 = vld [vmem:[%s225 + $0x3e0] sm:$0xff]
        %v779 = vld [vmem:[%s225 + $0x3e8] sm:$0xff]
        %v780 = vld [vmem:[%s225 + $0x3f0] sm:$0xff]
        %v781 = vld [vmem:[%s225 + $0x3f8] sm:$0xff]
        %v782 = vld [vmem:[%s225 + $0x400] sm:$0xff]
        %v783 = vld [vmem:[%s225 + $0x408] sm:$0xff]
        %v784 = vld [vmem:[%s225 + $0x410] sm:$0xff]
        %v785 = vld [vmem:[%s225 + $0x418] sm:$0xff]
        %v786 = vld [vmem:[%s225 + $0x420] sm:$0xff]
        %v787 = vld [vmem:[%s225 + $0x428] sm:$0xff]
        %v788 = vld [vmem:[%s225 + $0x430] sm:$0xff]
        %v789 = vld [vmem:[%s225 + $0x438] sm:$0xff]
        %v790 = vld [vmem:[%s225 + $0x440] sm:$0xff]
        %v791 = vld [vmem:[%s225 + $0x448] sm:$0xff]
        %v792 = vld [vmem:[%s225 + $0x450] sm:$0xff]
        %v793 = vld [vmem:[%s225 + $0x458] sm:$0xff]
        %v794 = vld [vmem:[%s225 + $0x460] sm:$0xff]
        %v795 = vld [vmem:[%s225 + $0x468] sm:$0xff]
        %v796 = vld [vmem:[%s225 + $0x470] sm:$0xff]
        %v797 = vld [vmem:[%s225 + $0x478] sm:$0xff]
        %v798 = vld [vmem:[%s225 + $0x480] sm:$0xff]
        %v799 = vld [vmem:[%s225 + $0x488] sm:$0xff]
        %v800 = vld [vmem:[%s225 + $0x490] sm:$0xff]
        %v801 = vld [vmem:[%s225 + $0x498] sm:$0xff]
        %v802 = vld [vmem:[%s225 + $0x4a0] sm:$0xff]
        %v803 = vld [vmem:[%s225 + $0x4a8] sm:$0xff]
        %v804 = vld [vmem:[%s225 + $0x4b0] sm:$0xff]
        %v805 = vld [vmem:[%s225 + $0x4b8] sm:$0xff]
        %v806 = vld [vmem:[%s225 + $0x4c0] sm:$0xff]
        %v807 = vld [vmem:[%s225 + $0x4c8] sm:$0xff]
        %v808 = vld [vmem:[%s225 + $0x4d0] sm:$0xff]
        %v809 = vld [vmem:[%s225 + $0x4d8] sm:$0xff]
        %v810 = vld [vmem:[%s225 + $0x4e0] sm:$0xff]
        %v811 = vld [vmem:[%s225 + $0x4e8] sm:$0xff]
        %v812 = vld [vmem:[%s225 + $0x4f0] sm:$0xff]
        %v813 = vld [vmem:[%s225 + $0x4f8] sm:$0xff]
        %v814 = vld [vmem:[%s225 + $0x500] sm:$0xff]
        %v815 = vld [vmem:[%s225 + $0x508] sm:$0xff]
        %v816 = vld [vmem:[%s225 + $0x510] sm:$0xff]
        %v817 = vld [vmem:[%s225 + $0x518] sm:$0xff]
        %v818 = vld [vmem:[%s225 + $0x520] sm:$0xff]
        %v819 = vld [vmem:[%s225 + $0x528] sm:$0xff]
        %v820 = vld [vmem:[%s225 + $0x530] sm:$0xff]
        %v821 = vld [vmem:[%s225 + $0x538] sm:$0xff]
        %v822 = vld [vmem:[%s225 + $0x540] sm:$0xff]
        %v823 = vld [vmem:[%s225 + $0x548] sm:$0xff]
        %v824 = vld [vmem:[%s225 + $0x550] sm:$0xff]
        %v825 = vld [vmem:[%s225 + $0x558] sm:$0xff]
        %v826 = vld [vmem:[%s225 + $0x560] sm:$0xff]
        %v827 = vld [vmem:[%s225 + $0x568] sm:$0xff]
        %v828 = vld [vmem:[%s225 + $0x570] sm:$0xff]
        %v829 = vld [vmem:[%s225 + $0x578] sm:$0xff]
        %v830 = vld [vmem:[%s225 + $0x580] sm:$0xff]
        %v831 = vld [vmem:[%s225 + $0x588] sm:$0xff]
        %v832 = vld [vmem:[%s225 + $0x590] sm:$0xff]
        %v833 = vld [vmem:[%s225 + $0x598] sm:$0xff]
        %v834 = vld [vmem:[%s225 + $0x5a0] sm:$0xff]
        %v835 = vld [vmem:[%s225 + $0x5a8] sm:$0xff]
        %v836 = vld [vmem:[%s225 + $0x5b0] sm:$0xff]
        %v837 = vld [vmem:[%s225 + $0x5b8] sm:$0xff]
        %v838 = vld [vmem:[%s225 + $0x5c0] sm:$0xff]
        %v839 = vld [vmem:[%s225 + $0x5c8] sm:$0xff]
        %v840 = vld [vmem:[%s225 + $0x5d0] sm:$0xff]
        %v841 = vld [vmem:[%s225 + $0x5d8] sm:$0xff]
        %v842 = vld [vmem:[%s225 + $0x5e0] sm:$0xff]
        %v843 = vld [vmem:[%s225 + $0x5e8] sm:$0xff]
        %v844 = vld [vmem:[%s225 + $0x5f0] sm:$0xff]
        %v845 = vld [vmem:[%s225 + $0x5f8] sm:$0xff]
        %v846 = vld [vmem:[%s225 + $0x600] sm:$0xff]
        %v847 = vld [vmem:[%s225 + $0x608] sm:$0xff]
        %v848 = vld [vmem:[%s225 + $0x610] sm:$0xff]
        %v849 = vld [vmem:[%s225 + $0x618] sm:$0xff]
        %v850 = vld [vmem:[%s225 + $0x620] sm:$0xff]
        %v851 = vld [vmem:[%s225 + $0x628] sm:$0xff]
        %v852 = vld [vmem:[%s225 + $0x630] sm:$0xff]
        %v853 = vld [vmem:[%s225 + $0x638] sm:$0xff]
        %v854 = vld [vmem:[%s225 + $0x640] sm:$0xff]
        %v855 = vld [vmem:[%s225 + $0x648] sm:$0xff]
        %v856 = vld [vmem:[%s225 + $0x650] sm:$0xff]
        %v857 = vld [vmem:[%s225 + $0x658] sm:$0xff]
        %v858 = vld [vmem:[%s225 + $0x660] sm:$0xff]
        %v859 = vld [vmem:[%s225 + $0x668] sm:$0xff]
        %v860 = vld [vmem:[%s225 + $0x670] sm:$0xff]
        %v861 = vld [vmem:[%s225 + $0x678] sm:$0xff]
        %v862 = vld [vmem:[%s225 + $0x680] sm:$0xff]
        %v863 = vld [vmem:[%s225 + $0x688] sm:$0xff]
        %v864 = vld [vmem:[%s225 + $0x690] sm:$0xff]
        %v865 = vld [vmem:[%s225 + $0x698] sm:$0xff]
        %v866 = vld [vmem:[%s225 + $0x6a0] sm:$0xff]
        %v867 = vld [vmem:[%s225 + $0x6a8] sm:$0xff]
        %v868 = vld [vmem:[%s225 + $0x6b0] sm:$0xff]
        %v869 = vld [vmem:[%s225 + $0x6b8] sm:$0xff]
        %v870 = vld [vmem:[%s225 + $0x6c0] sm:$0xff]
        %v871 = vld [vmem:[%s225 + $0x6c8] sm:$0xff]
        %v872 = vld [vmem:[%s225 + $0x6d0] sm:$0xff]
        %v873 = vld [vmem:[%s225 + $0x6d8] sm:$0xff]
        %v874 = vld [vmem:[%s225 + $0x6e0] sm:$0xff]
        %v875 = vld [vmem:[%s225 + $0x6e8] sm:$0xff]
        %v876 = vld [vmem:[%s225 + $0x6f0] sm:$0xff]
        %v877 = vld [vmem:[%s225 + $0x6f8] sm:$0xff]
        %v878 = vld [vmem:[%s225 + $0x700] sm:$0xff]
        %v879 = vld [vmem:[%s225 + $0x708] sm:$0xff]
        %v880 = vld [vmem:[%s225 + $0x710] sm:$0xff]
        %v881 = vld [vmem:[%s225 + $0x718] sm:$0xff]
        %v882 = vld [vmem:[%s225 + $0x720] sm:$0xff]
        %v883 = vld [vmem:[%s225 + $0x728] sm:$0xff]
        %v884 = vld [vmem:[%s225 + $0x730] sm:$0xff]
        %v885 = vld [vmem:[%s225 + $0x738] sm:$0xff]
        %v886 = vld [vmem:[%s225 + $0x740] sm:$0xff]
        %v887 = vld [vmem:[%s225 + $0x748] sm:$0xff]
        %v888 = vld [vmem:[%s225 + $0x750] sm:$0xff]
        %v889 = vld [vmem:[%s225 + $0x758] sm:$0xff]
        %v890 = vld [vmem:[%s225 + $0x760] sm:$0xff]
        %v891 = vld [vmem:[%s225 + $0x768] sm:$0xff]
        %v892 = vld [vmem:[%s225 + $0x770] sm:$0xff]
        %v893 = vld [vmem:[%s225 + $0x778] sm:$0xff]
        %v894 = vld [vmem:[%s225 + $0x780] sm:$0xff]
        %v895 = vld [vmem:[%s225 + $0x788] sm:$0xff]
        %v896 = vld [vmem:[%s225 + $0x790] sm:$0xff]
        %v897 = vld [vmem:[%s225 + $0x798] sm:$0xff]
        %v898 = vld [vmem:[%s225 + $0x7a0] sm:$0xff]
        %v899 = vld [vmem:[%s225 + $0x7a8] sm:$0xff]
        %v900 = vld [vmem:[%s225 + $0x7b0] sm:$0xff]
        %v901 = vld [vmem:[%s225 + $0x7b8] sm:$0xff]
        %v902 = vld [vmem:[%s225 + $0x7c0] sm:$0xff]
        %v903 = vld [vmem:[%s225 + $0x7c8] sm:$0xff]
        %v904 = vld [vmem:[%s225 + $0x7d0] sm:$0xff]
        %v905 = vld [vmem:[%s225 + $0x7d8] sm:$0xff]
        %v906 = vld [vmem:[%s225 + $0x7e0] sm:$0xff]
        %v907 = vld [vmem:[%s225 + $0x7e8] sm:$0xff]
        %v908 = vld [vmem:[%s225 + $0x7f0] sm:$0xff]
        %v909 = vld [vmem:[%s225 + $0x7f8] sm:$0xff]
        %v910 = vld [vmem:[%s225 + $0x800] sm:$0xff]
        %v911 = vld [vmem:[%s225 + $0x808] sm:$0xff]
        %v912 = vld [vmem:[%s225 + $0x810] sm:$0xff]
        %v913 = vld [vmem:[%s225 + $0x818] sm:$0xff]
        %v914 = vld [vmem:[%s225 + $0x820] sm:$0xff]
        %v915 = vld [vmem:[%s225 + $0x828] sm:$0xff]
        %v916 = vld [vmem:[%s225 + $0x830] sm:$0xff]
        %v917 = vld [vmem:[%s225 + $0x838] sm:$0xff]
        %v918 = vld [vmem:[%s225 + $0x840] sm:$0xff]
        %v919 = vld [vmem:[%s225 + $0x848] sm:$0xff]
        %v920 = vld [vmem:[%s225 + $0x850] sm:$0xff]
        %v921 = vld [vmem:[%s225 + $0x858] sm:$0xff]
        %v922 = vld [vmem:[%s225 + $0x860] sm:$0xff]
        %v923 = vld [vmem:[%s225 + $0x868] sm:$0xff]
        %v924 = vld [vmem:[%s225 + $0x870] sm:$0xff]
        %v925 = vld [vmem:[%s225 + $0x878] sm:$0xff]
        %v926 = vld [vmem:[%s225 + $0x880] sm:$0xff]
        %v927 = vld [vmem:[%s225 + $0x888] sm:$0xff]
        %v928 = vld [vmem:[%s225 + $0x890] sm:$0xff]
        %v929 = vld [vmem:[%s225 + $0x898] sm:$0xff]
        %v930 = vld [vmem:[%s225 + $0x8a0] sm:$0xff]
        %v931 = vld [vmem:[%s225 + $0x8a8] sm:$0xff]
        %v932 = vld [vmem:[%s225 + $0x8b0] sm:$0xff]
        %v933 = vld [vmem:[%s225 + $0x8b8] sm:$0xff]
        %v934 = vld [vmem:[%s225 + $0x8c0] sm:$0xff]
        %v935 = vld [vmem:[%s225 + $0x8c8] sm:$0xff]
        %v936 = vld [vmem:[%s225 + $0x8d0] sm:$0xff]
        %v937 = vld [vmem:[%s225 + $0x8d8] sm:$0xff]
        %v938 = vld [vmem:[%s225 + $0x8e0] sm:$0xff]
        %v939 = vld [vmem:[%s225 + $0x8e8] sm:$0xff]
        %v940 = vld [vmem:[%s225 + $0x8f0] sm:$0xff]
        %v941 = vld [vmem:[%s225 + $0x8f8] sm:$0xff]
        %v942 = vld [vmem:[%s225 + $0x900] sm:$0xff]
        %v943 = vld [vmem:[%s225 + $0x908] sm:$0xff]
        %v944 = vld [vmem:[%s225 + $0x910] sm:$0xff]
        %v945 = vld [vmem:[%s225 + $0x918] sm:$0xff]
        %v946 = vld [vmem:[%s225 + $0x920] sm:$0xff]
        %v947 = vld [vmem:[%s225 + $0x928] sm:$0xff]
        %v948 = vld [vmem:[%s225 + $0x930] sm:$0xff]
        %v949 = vld [vmem:[%s225 + $0x938] sm:$0xff]
        %v950 = vld [vmem:[%s225 + $0x940] sm:$0xff]
        %v951 = vld [vmem:[%s225 + $0x948] sm:$0xff]
        %v952 = vld [vmem:[%s225 + $0x950] sm:$0xff]
        %v953 = vld [vmem:[%s225 + $0x958] sm:$0xff]
        %v954 = vld [vmem:[%s225 + $0x960] sm:$0xff]
        %v955 = vld [vmem:[%s225 + $0x968] sm:$0xff]
        %v956 = vld [vmem:[%s225 + $0x970] sm:$0xff]
        %v957 = vld [vmem:[%s225 + $0x978] sm:$0xff]
        %v958 = vld [vmem:[%s225 + $0x980] sm:$0xff]
        %v959 = vld [vmem:[%s225 + $0x988] sm:$0xff]
        %v960 = vld [vmem:[%s225 + $0x990] sm:$0xff]
        %v961 = vld [vmem:[%s225 + $0x998] sm:$0xff]
        %v962 = vld [vmem:[%s225 + $0x9a0] sm:$0xff]
        %v963 = vld [vmem:[%s225 + $0x9a8] sm:$0xff]
        %v964 = vld [vmem:[%s225 + $0x9b0] sm:$0xff]
        %v965 = vld [vmem:[%s225 + $0x9b8] sm:$0xff]
        %v966 = vld [vmem:[%s225 + $0x9c0] sm:$0xff]
        %v967 = vld [vmem:[%s225 + $0x9c8] sm:$0xff]
        %v968 = vld [vmem:[%s225 + $0x9d0] sm:$0xff]
        %v969 = vld [vmem:[%s225 + $0x9d8] sm:$0xff]
        %v970 = vld [vmem:[%s225 + $0x9e0] sm:$0xff]
        %v971 = vld [vmem:[%s225 + $0x9e8] sm:$0xff]
        %v972 = vld [vmem:[%s225 + $0x9f0] sm:$0xff]
        %v973 = vld [vmem:[%s225 + $0x9f8] sm:$0xff]
        %v974 = vld [vmem:[%s225 + $0xa00] sm:$0xff]
        %v975 = vld [vmem:[%s225 + $0xa08] sm:$0xff]
        %v976 = vld [vmem:[%s225 + $0xa10] sm:$0xff]
        %v977 = vld [vmem:[%s225 + $0xa18] sm:$0xff]
        %v978 = vld [vmem:[%s225 + $0xa20] sm:$0xff]
        %v979 = vld [vmem:[%s225 + $0xa28] sm:$0xff]
        %v980 = vld [vmem:[%s225 + $0xa30] sm:$0xff]
        %v981 = vld [vmem:[%s225 + $0xa38] sm:$0xff]
        %v982 = vld [vmem:[%s225 + $0xa40] sm:$0xff]
        %v983 = vld [vmem:[%s225 + $0xa48] sm:$0xff]
        %v984 = vld [vmem:[%s225 + $0xa50] sm:$0xff]
        %v985 = vld [vmem:[%s225 + $0xa58] sm:$0xff]
        %v986 = vld [vmem:[%s225 + $0xa60] sm:$0xff]
        %v987 = vld [vmem:[%s225 + $0xa68] sm:$0xff]
        %v988 = vld [vmem:[%s225 + $0xa70] sm:$0xff]
        %v989 = vld [vmem:[%s225 + $0xa78] sm:$0xff]
        %v990 = vld [vmem:[%s225 + $0xa80] sm:$0xff]
        %v991 = vld [vmem:[%s225 + $0xa88] sm:$0xff]
        %v992 = vld [vmem:[%s225 + $0xa90] sm:$0xff]
        %v993 = vld [vmem:[%s225 + $0xa98] sm:$0xff]
        %v994 = vld [vmem:[%s225 + $0xaa0] sm:$0xff]
        %v995 = vld [vmem:[%s225 + $0xaa8] sm:$0xff]
        %v996 = vld [vmem:[%s225 + $0xab0] sm:$0xff]
        %v997 = vld [vmem:[%s225 + $0xab8] sm:$0xff]
        %v998 = vld [vmem:[%s225 + $0xac0] sm:$0xff]
        %v999 = vld [vmem:[%s225 + $0xac8] sm:$0xff]
        %v1000 = vld [vmem:[%s225 + $0xad0] sm:$0xff]
        %v1001 = vld [vmem:[%s225 + $0xad8] sm:$0xff]
        %v1002 = vld [vmem:[%s225 + $0xae0] sm:$0xff]
        %v1003 = vld [vmem:[%s225 + $0xae8] sm:$0xff]
        %v1004 = vld [vmem:[%s225 + $0xaf0] sm:$0xff]
        %v1005 = vld [vmem:[%s225 + $0xaf8] sm:$0xff]
        %v1006 = vld [vmem:[%s225 + $0xb00] sm:$0xff]
        %v1007 = vld [vmem:[%s225 + $0xb08] sm:$0xff]
        %v1008 = vld [vmem:[%s225 + $0xb10] sm:$0xff]
        %v1009 = vld [vmem:[%s225 + $0xb18] sm:$0xff]
        %v1010 = vld [vmem:[%s225 + $0xb20] sm:$0xff]
        %v1011 = vld [vmem:[%s225 + $0xb28] sm:$0xff]
        %v1012 = vld [vmem:[%s225 + $0xb30] sm:$0xff]
        %v1013 = vld [vmem:[%s225 + $0xb38] sm:$0xff]
        %v1014 = vld [vmem:[%s225 + $0xb40] sm:$0xff]
        %v1015 = vld [vmem:[%s225 + $0xb48] sm:$0xff]
        %v1016 = vld [vmem:[%s225 + $0xb50] sm:$0xff]
        %v1017 = vld [vmem:[%s225 + $0xb58] sm:$0xff]
        %v1018 = vld [vmem:[%s225 + $0xb60] sm:$0xff]
        %v1019 = vld [vmem:[%s225 + $0xb68] sm:$0xff]
        %v1020 = vld [vmem:[%s225 + $0xb70] sm:$0xff]
        %v1021 = vld [vmem:[%s225 + $0xb78] sm:$0xff]
        %v1022 = vld [vmem:[%s225 + $0xb80] sm:$0xff]
        %v1023 = vld [vmem:[%s225 + $0xb88] sm:$0xff]
        %v1024 = vld [vmem:[%s225 + $0xb90] sm:$0xff]
        %v1025 = vld [vmem:[%s225 + $0xb98] sm:$0xff]
        %v1026 = vld [vmem:[%s225 + $0xba0] sm:$0xff]
        %v1027 = vld [vmem:[%s225 + $0xba8] sm:$0xff]
        %v1028 = vld [vmem:[%s225 + $0xbb0] sm:$0xff]
        %v1029 = vld [vmem:[%s225 + $0xbb8] sm:$0xff]
        %v1030 = vld [vmem:[%s225 + $0xbc0] sm:$0xff]
        %v1031 = vld [vmem:[%s225 + $0xbc8] sm:$0xff]
        %v1032 = vld [vmem:[%s225 + $0xbd0] sm:$0xff]
        %v1033 = vld [vmem:[%s225 + $0xbd8] sm:$0xff]
        %v1034 = vld [vmem:[%s225 + $0xbe0] sm:$0xff]
        %v1035 = vld [vmem:[%s225 + $0xbe8] sm:$0xff]
        %v1036 = vld [vmem:[%s225 + $0xbf0] sm:$0xff]
        %v1037 = vld [vmem:[%s225 + $0xbf8] sm:$0xff]
        %v1038 = vld [vmem:[%s225 + $0xc00] sm:$0xff]
        %v1039 = vld [vmem:[%s225 + $0xc08] sm:$0xff]
        %v1040 = vld [vmem:[%s225 + $0xc10] sm:$0xff]
        %v1041 = vld [vmem:[%s225 + $0xc18] sm:$0xff]
        %v1042 = vld [vmem:[%s225 + $0xc20] sm:$0xff]
        %v1043 = vld [vmem:[%s225 + $0xc28] sm:$0xff]
        %v1044 = vld [vmem:[%s225 + $0xc30] sm:$0xff]
        %v1045 = vld [vmem:[%s225 + $0xc38] sm:$0xff]
        %v1046 = vld [vmem:[%s225 + $0xc40] sm:$0xff]
        %v1047 = vld [vmem:[%s225 + $0xc48] sm:$0xff]
        %v1048 = vld [vmem:[%s225 + $0xc50] sm:$0xff]
        %v1049 = vld [vmem:[%s225 + $0xc58] sm:$0xff]
        %v1050 = vld [vmem:[%s225 + $0xc60] sm:$0xff]
        %v1051 = vld [vmem:[%s225 + $0xc68] sm:$0xff]
        %v1052 = vld [vmem:[%s225 + $0xc70] sm:$0xff]
        %v1053 = vld [vmem:[%s225 + $0xc78] sm:$0xff]
        %1054 = vxpose.xlu0.b32.start [1/16] %v649, 128
        %1055 = vxpose.xlu0.b32.cont [2/16] 0.0, 128
        %1056 = vxpose.xlu0.b32.cont [3/16] 0.0, 128
        %1057 = vxpose.xlu0.b32.cont [4/16] 0.0, 128
        %1058 = vxpose.xlu0.b32.cont [5/16] 0.0, 128
        %1059 = vxpose.xlu0.b32.cont [6/16] 0.0, 128
        %1060 = vxpose.xlu0.b32.cont [7/16] 0.0, 128
        %1061 = vxpose.xlu0.b32.cont [8/16] 0.0, 128
        %1062 = vxpose.xlu0.b32.cont [9/16] 0.0, 128
        %1063 = vxpose.xlu0.b32.cont [10/16] 0.0, 128
        %1064 = vxpose.xlu0.b32.cont [11/16] 0.0, 128
        %1065 = vxpose.xlu0.b32.cont [12/16] 0.0, 128
        %1066 = vxpose.xlu0.b32.cont [13/16] 0.0, 128
        %1067 = vxpose.xlu0.b32.cont [14/16] 0.0, 128
        %1068 = vxpose.xlu0.b32.cont [15/16] 0.0, 128
        %1069 = vxpose.xlu0.b32.end [16/16] 0.0, 128
        %v1070 = vpop.trf.xlu0
        %v1071 = vpop.trf.xlu0
        %v1072 = vpop.trf.xlu0
        %v1073 = vpop.trf.xlu0
        %v1074 = vpop.trf.xlu0
        %v1075 = vpop.trf.xlu0
        %v1076 = vpop.trf.xlu0
        %v1077 = vpop.trf.xlu0
        %v1078 = vpop.trf.xlu0
        %v1079 = vpop.trf.xlu0
        %v1080 = vpop.trf.xlu0
        %v1081 = vpop.trf.xlu0
        %v1082 = vpop.trf.xlu0
        %v1083 = vpop.trf.xlu0
        %v1084 = vpop.trf.xlu0
        %v1085 = vpop.trf.xlu0
        %1086 = vxpose.xlu0.b32.start [1/16] %v650, 128
        %1087 = vxpose.xlu0.b32.cont [2/16] 0.0, 128
        %1088 = vxpose.xlu0.b32.cont [3/16] 0.0, 128
        %1089 = vxpose.xlu0.b32.cont [4/16] 0.0, 128
        %1090 = vxpose.xlu0.b32.cont [5/16] 0.0, 128
        %1091 = vxpose.xlu0.b32.cont [6/16] 0.0, 128
        %1092 = vxpose.xlu0.b32.cont [7/16] 0.0, 128
        %1093 = vxpose.xlu0.b32.cont [8/16] 0.0, 128
        %1094 = vxpose.xlu0.b32.cont [9/16] 0.0, 128
        %1095 = vxpose.xlu0.b32.cont [10/16] 0.0, 128
        %1096 = vxpose.xlu0.b32.cont [11/16] 0.0, 128
        %1097 = vxpose.xlu0.b32.cont [12/16] 0.0, 128
        %1098 = vxpose.xlu0.b32.cont [13/16] 0.0, 128
        %1099 = vxpose.xlu0.b32.cont [14/16] 0.0, 128
        %1100 = vxpose.xlu0.b32.cont [15/16] 0.0, 128
        %1101 = vxpose.xlu0.b32.end [16/16] 0.0, 128
        %v1102 = vpop.trf.xlu0
        %v1103 = vpop.trf.xlu0
        %v1104 = vpop.trf.xlu0
        %v1105 = vpop.trf.xlu0
        %v1106 = vpop.trf.xlu0
        %v1107 = vpop.trf.xlu0
        %v1108 = vpop.trf.xlu0
        %v1109 = vpop.trf.xlu0
        %v1110 = vpop.trf.xlu0
        %v1111 = vpop.trf.xlu0
        %v1112 = vpop.trf.xlu0
        %v1113 = vpop.trf.xlu0
        %v1114 = vpop.trf.xlu0
        %v1115 = vpop.trf.xlu0
        %v1116 = vpop.trf.xlu0
        %v1117 = vpop.trf.xlu0
        %1118 = vxpose.xlu0.b32.start [1/16] %v651, 128
        %1119 = vxpose.xlu0.b32.cont [2/16] 0.0, 128
        %1120 = vxpose.xlu0.b32.cont [3/16] 0.0, 128
        %1121 = vxpose.xlu0.b32.cont [4/16] 0.0, 128
        %1122 = vxpose.xlu0.b32.cont [5/16] 0.0, 128
        %1123 = vxpose.xlu0.b32.cont [6/16] 0.0, 128
        %1124 = vxpose.xlu0.b32.cont [7/16] 0.0, 128
        %1125 = vxpose.xlu0.b32.cont [8/16] 0.0, 128
        %1126 = vxpose.xlu0.b32.cont [9/16] 0.0, 128
        %1127 = vxpose.xlu0.b32.cont [10/16] 0.0, 128
        %1128 = vxpose.xlu0.b32.cont [11/16] 0.0, 128
        %1129 = vxpose.xlu0.b32.cont [12/16] 0.0, 128
        %1130 = vxpose.xlu0.b32.cont [13/16] 0.0, 128
        %1131 = vxpose.xlu0.b32.cont [14/16] 0.0, 128
        %1132 = vxpose.xlu0.b32.cont [15/16] 0.0, 128
        %1133 = vxpose.xlu0.b32.end [16/16] 0.0, 128
        %v1134 = vpop.trf.xlu0
        %v1135 = vpop.trf.xlu0
        %v1136 = vpop.trf.xlu0
        %v1137 = vpop.trf.xlu0
        %v1138 = vpop.trf.xlu0
        %v1139 = vpop.trf.xlu0
        %v1140 = vpop.trf.xlu0
        %v1141 = vpop.trf.xlu0
        %v1142 = vpop.trf.xlu0
        %v1143 = vpop.trf.xlu0
        %v1144 = vpop.trf.xlu0
        %v1145 = vpop.trf.xlu0
        %v1146 = vpop.trf.xlu0
        %v1147 = vpop.trf.xlu0
        %v1148 = vpop.trf.xlu0
        %v1149 = vpop.trf.xlu0
        %1150 = vxpose.xlu0.b32.start [1/16] %v652, 128
        %1151 = vxpose.xlu0.b32.cont [2/16] 0.0, 128
        %1152 = vxpose.xlu0.b32.cont [3/16] 0.0, 128
        %1153 = vxpose.xlu0.b32.cont [4/16] 0.0, 128
        %1154 = vxpose.xlu0.b32.cont [5/16] 0.0, 128
        %1155 = vxpose.xlu0.b32.cont [6/16] 0.0, 128
        %1156 = vxpose.xlu0.b32.cont [7/16] 0.0, 128
        %1157 = vxpose.xlu0.b32.cont [8/16] 0.0, 128
        %1158 = vxpose.xlu0.b32.cont [9/16] 0.0, 128
        %1159 = vxpose.xlu0.b32.cont [10/16] 0.0, 128
        %1160 = vxpose.xlu0.b32.cont [11/16] 0.0, 128
        %1161 = vxpose.xlu0.b32.cont [12/16] 0.0, 128
        %1162 = vxpose.xlu0.b32.cont [13/16] 0.0, 128
        %1163 = vxpose.xlu0.b32.cont [14/16] 0.0, 128
        %1164 = vxpose.xlu0.b32.cont [15/16] 0.0, 128
        %1165 = vxpose.xlu0.b32.end [16/16] 0.0, 128
        %v1166 = vpop.trf.xlu0
        %v1167 = vpop.trf.xlu0
        %v1168 = vpop.trf.xlu0
        %v1169 = vpop.trf.xlu0
        %v1170 = vpop.trf.xlu0
        %v1171 = vpop.trf.xlu0
        %v1172 = vpop.trf.xlu0
        %v1173 = vpop.trf.xlu0
        %v1174 = vpop.trf.xlu0
        %v1175 = vpop.trf.xlu0
        %v1176 = vpop.trf.xlu0
        %v1177 = vpop.trf.xlu0
        %v1178 = vpop.trf.xlu0
        %v1179 = vpop.trf.xlu0
        %v1180 = vpop.trf.xlu0
        %v1181 = vpop.trf.xlu0
        %1182 = vxpose.xlu0.b32.start [1/16] %v653, 128
        %1183 = vxpose.xlu0.b32.cont [2/16] 0.0, 128
        %1184 = vxpose.xlu0.b32.cont [3/16] 0.0, 128
        %1185 = vxpose.xlu0.b32.cont [4/16] 0.0, 128
        %1186 = vxpose.xlu0.b32.cont [5/16] 0.0, 128
        %1187 = vxpose.xlu0.b32.cont [6/16] 0.0, 128
        %1188 = vxpose.xlu0.b32.cont [7/16] 0.0, 128
        %1189 = vxpose.xlu0.b32.cont [8/16] 0.0, 128
        %1190 = vxpose.xlu0.b32.cont [9/16] 0.0, 128
        %1191 = vxpose.xlu0.b32.cont [10/16] 0.0, 128
        %1192 = vxpose.xlu0.b32.cont [11/16] 0.0, 128
        %1193 = vxpose.xlu0.b32.cont [12/16] 0.0, 128
        %1194 = vxpose.xlu0.b32.cont [13/16] 0.0, 128
        %1195 = vxpose.xlu0.b32.cont [14/16] 0.0, 128
        %1196 = vxpose.xlu0.b32.cont [15/16] 0.0, 128
        %1197 = vxpose.xlu0.b32.end [16/16] 0.0, 128
        %v1198 = vpop.trf.xlu0
        %v1199 = vpop.trf.xlu0
        %v1200 = vpop.trf.xlu0
        %v1201 = vpop.trf.xlu0
        %v1202 = vpop.trf.xlu0
        %v1203 = vpop.trf.xlu0
        %v1204 = vpop.trf.xlu0
        %v1205 = vpop.trf.xlu0
        %v1206 = vpop.trf.xlu0
        %v1207 = vpop.trf.xlu0
        %v1208 = vpop.trf.xlu0
        %v1209 = vpop.trf.xlu0
        %v1210 = vpop.trf.xlu0
        %v1211 = vpop.trf.xlu0
        %v1212 = vpop.trf.xlu0
        %v1213 = vpop.trf.xlu0
        %vm1214 = vcmask 64512
        %v1216 = vsel %vm1214, %v1070, 0
        %v1219 = vsel %vm1214, %v1071, 0
        %v1222 = vsel %vm1214, %v1072, 0
        %v1225 = vsel %vm1214, %v1073, 0
        %v1228 = vsel %vm1214, %v1074, 0
        %v1231 = vsel %vm1214, %v1075, 0
        %v1234 = vsel %vm1214, %v1076, 0
        %v1237 = vsel %vm1214, %v1077, 0
        %v1240 = vsel %vm1214, %v1078, 0
        %v1243 = vsel %vm1214, %v1079, 0
        %v1246 = vsel %vm1214, %v1080, 0
        %v1249 = vsel %vm1214, %v1081, 0
        %v1252 = vsel %vm1214, %v1082, 0
        %v1255 = vsel %vm1214, %v1083, 0
        %v1258 = vsel %vm1214, %v1084, 0
        %v1261 = vsel %vm1214, %v1085, 0
        %v1264 = vsel %vm1214, %v1102, 0
        %v1267 = vsel %vm1214, %v1103, 0
        %v1270 = vsel %vm1214, %v1104, 0
        %v1273 = vsel %vm1214, %v1105, 0
        %v1276 = vsel %vm1214, %v1106, 0
        %v1279 = vsel %vm1214, %v1107, 0
        %v1282 = vsel %vm1214, %v1108, 0
        %v1285 = vsel %vm1214, %v1109, 0
        %v1288 = vsel %vm1214, %v1110, 0
        %v1291 = vsel %vm1214, %v1111, 0
        %v1294 = vsel %vm1214, %v1112, 0
        %v1297 = vsel %vm1214, %v1113, 0
        %v1300 = vsel %vm1214, %v1114, 0
        %v1303 = vsel %vm1214, %v1115, 0
        %v1306 = vsel %vm1214, %v1116, 0
        %v1309 = vsel %vm1214, %v1117, 0
        %v1312 = vsel %vm1214, %v1134, 0
        %v1315 = vsel %vm1214, %v1135, 0
        %v1318 = vsel %vm1214, %v1136, 0
        %v1321 = vsel %vm1214, %v1137, 0
        %v1324 = vsel %vm1214, %v1138, 0
        %v1327 = vsel %vm1214, %v1139, 0
        %v1330 = vsel %vm1214, %v1140, 0
        %v1333 = vsel %vm1214, %v1141, 0
        %v1336 = vsel %vm1214, %v1142, 0
        %v1339 = vsel %vm1214, %v1143, 0
        %v1342 = vsel %vm1214, %v1144, 0
        %v1345 = vsel %vm1214, %v1145, 0
        %v1348 = vsel %vm1214, %v1146, 0
        %v1351 = vsel %vm1214, %v1147, 0
        %v1354 = vsel %vm1214, %v1148, 0
        %v1357 = vsel %vm1214, %v1149, 0
        %v1360 = vsel %vm1214, %v1166, 0
        %v1363 = vsel %vm1214, %v1167, 0
        %v1366 = vsel %vm1214, %v1168, 0
        %v1369 = vsel %vm1214, %v1169, 0
        %v1372 = vsel %vm1214, %v1170, 0
        %v1375 = vsel %vm1214, %v1171, 0
        %v1378 = vsel %vm1214, %v1172, 0
        %v1381 = vsel %vm1214, %v1173, 0
        %v1384 = vsel %vm1214, %v1174, 0
        %v1387 = vsel %vm1214, %v1175, 0
        %v1390 = vsel %vm1214, %v1176, 0
        %v1393 = vsel %vm1214, %v1177, 0
        %v1396 = vsel %vm1214, %v1178, 0
        %v1399 = vsel %vm1214, %v1179, 0
        %v1402 = vsel %vm1214, %v1180, 0
        %v1405 = vsel %vm1214, %v1181, 0
        %v1408 = vsel %vm1214, %v1198, 0
        %v1411 = vsel %vm1214, %v1199, 0
        %v1414 = vsel %vm1214, %v1200, 0
        %v1417 = vsel %vm1214, %v1201, 0
        %v1420 = vsel %vm1214, %v1202, 0
        %v1423 = vsel %vm1214, %v1203, 0
        %v1426 = vsel %vm1214, %v1204, 0
        %v1429 = vsel %vm1214, %v1205, 0
        %v1432 = vsel %vm1214, %v1206, 0
        %v1435 = vsel %vm1214, %v1207, 0
        %v1438 = vsel %vm1214, %v1208, 0
        %v1441 = vsel %vm1214, %v1209, 0
        %v1444 = vsel %vm1214, %v1210, 0
        %v1447 = vsel %vm1214, %v1211, 0
        %v1450 = vsel %vm1214, %v1212, 0
        %v1453 = vsel %vm1214, %v1213, 0
        %1455 = vmatpush.msra.mxu0 0.0
        %1456 = vmatpush.msra.mxu0 0.0
        %1457 = vmatpush.msra.mxu0 0.0
        %1458 = vmatpush.msra.mxu0 0.0
        %1459 = vmatpush.msra.mxu0 0.0
        %1460 = vmatpush.msra.mxu0 0.0
        %1461 = vmatpush.msra.mxu0 0.0
        %1462 = vmatpush.msra.mxu0 0.0
        %1463 = vmatpush.msra.mxu0 0.0
        %1464 = vmatpush.msra.mxu0 0.0
        %1465 = vmatpush.msra.mxu0 0.0
        %1466 = vmatpush.msra.mxu0 0.0
        %1467 = vmatpush.msra.mxu0 0.0
        %1468 = vmatpush.msra.mxu0 0.0
        %1469 = vmatpush.msra.mxu0 0.0
        %1470 = vmatpush.msra.mxu0 %v649
        %1471 = vmatmul.f32.gmra.mxu0 %v1216
        %v1472 = vpop.f32.mrf.mxu0
        %v1473 = vadd.f32 0.0, %v1472
        %1474 = vmatmul.f32.gmra.mxu0 %v1219
        %v1475 = vpop.f32.mrf.mxu0
        %v1476 = vadd.f32 0.0, %v1475
        %1477 = vmatmul.f32.gmra.mxu0 %v1222
        %v1478 = vpop.f32.mrf.mxu0
        %v1479 = vadd.f32 0.0, %v1478
        %1480 = vmatmul.f32.gmra.mxu0 %v1225
        %v1481 = vpop.f32.mrf.mxu0
        %v1482 = vadd.f32 0.0, %v1481
        %1483 = vmatmul.f32.gmra.mxu0 %v1228
        %v1484 = vpop.f32.mrf.mxu0
        %v1485 = vadd.f32 0.0, %v1484
        %1486 = vmatmul.f32.gmra.mxu0 %v1231
        %v1487 = vpop.f32.mrf.mxu0
        %v1488 = vadd.f32 0.0, %v1487
        %1489 = vmatmul.f32.gmra.mxu0 %v1234
        %v1490 = vpop.f32.mrf.mxu0
        %v1491 = vadd.f32 0.0, %v1490
        %1492 = vmatmul.f32.gmra.mxu0 %v1237
        %v1493 = vpop.f32.mrf.mxu0
        %v1494 = vadd.f32 0.0, %v1493
        %1495 = vmatmul.f32.gmra.mxu0 %v1240
        %v1496 = vpop.f32.mrf.mxu0
        %v1497 = vadd.f32 0.0, %v1496
        %1498 = vmatmul.f32.gmra.mxu0 %v1243
        %v1499 = vpop.f32.mrf.mxu0
        %v1500 = vadd.f32 0.0, %v1499
        %1501 = vmatmul.f32.gmra.mxu0 %v1246
        %v1502 = vpop.f32.mrf.mxu0
        %v1503 = vadd.f32 0.0, %v1502
        %1504 = vmatmul.f32.gmra.mxu0 %v1249
        %v1505 = vpop.f32.mrf.mxu0
        %v1506 = vadd.f32 0.0, %v1505
        %1507 = vmatmul.f32.gmra.mxu0 %v1252
        %v1508 = vpop.f32.mrf.mxu0
        %v1509 = vadd.f32 0.0, %v1508
        %1510 = vmatmul.f32.gmra.mxu0 %v1255
        %v1511 = vpop.f32.mrf.mxu0
        %v1512 = vadd.f32 0.0, %v1511
        %1513 = vmatmul.f32.gmra.mxu0 %v1258
        %v1514 = vpop.f32.mrf.mxu0
        %v1515 = vadd.f32 0.0, %v1514
        %1516 = vmatmul.f32.gmra.mxu0 %v1261
        %v1517 = vpop.f32.mrf.mxu0
        %v1518 = vadd.f32 0.0, %v1517
        %1519 = vmatmul.f32.gmra.mxu0 %v1264
        %v1520 = vpop.f32.mrf.mxu0
        %v1521 = vadd.f32 0.0, %v1520
        %1522 = vmatmul.f32.gmra.mxu0 %v1267
        %v1523 = vpop.f32.mrf.mxu0
        %v1524 = vadd.f32 0.0, %v1523
        %1525 = vmatmul.f32.gmra.mxu0 %v1270
        %v1526 = vpop.f32.mrf.mxu0
        %v1527 = vadd.f32 0.0, %v1526
        %1528 = vmatmul.f32.gmra.mxu0 %v1273
        %v1529 = vpop.f32.mrf.mxu0
        %v1530 = vadd.f32 0.0, %v1529
        %1531 = vmatmul.f32.gmra.mxu0 %v1276
        %v1532 = vpop.f32.mrf.mxu0
        %v1533 = vadd.f32 0.0, %v1532
        %1534 = vmatmul.f32.gmra.mxu0 %v1279
        %v1535 = vpop.f32.mrf.mxu0
        %v1536 = vadd.f32 0.0, %v1535
        %1537 = vmatmul.f32.gmra.mxu0 %v1282
        %v1538 = vpop.f32.mrf.mxu0
        %v1539 = vadd.f32 0.0, %v1538
        %1540 = vmatmul.f32.gmra.mxu0 %v1285
        %v1541 = vpop.f32.mrf.mxu0
        %v1542 = vadd.f32 0.0, %v1541
        %1543 = vmatmul.f32.gmra.mxu0 %v1288
        %v1544 = vpop.f32.mrf.mxu0
        %v1545 = vadd.f32 0.0, %v1544
        %1546 = vmatmul.f32.gmra.mxu0 %v1291
        %v1547 = vpop.f32.mrf.mxu0
        %v1548 = vadd.f32 0.0, %v1547
        %1549 = vmatmul.f32.gmra.mxu0 %v1294
        %v1550 = vpop.f32.mrf.mxu0
        %v1551 = vadd.f32 0.0, %v1550
        %1552 = vmatmul.f32.gmra.mxu0 %v1297
        %v1553 = vpop.f32.mrf.mxu0
        %v1554 = vadd.f32 0.0, %v1553
        %1555 = vmatmul.f32.gmra.mxu0 %v1300
        %v1556 = vpop.f32.mrf.mxu0
        %v1557 = vadd.f32 0.0, %v1556
        %1558 = vmatmul.f32.gmra.mxu0 %v1303
        %v1559 = vpop.f32.mrf.mxu0
        %v1560 = vadd.f32 0.0, %v1559
        %1561 = vmatmul.f32.gmra.mxu0 %v1306
        %v1562 = vpop.f32.mrf.mxu0
        %v1563 = vadd.f32 0.0, %v1562
        %1564 = vmatmul.f32.gmra.mxu0 %v1309
        %v1565 = vpop.f32.mrf.mxu0
        %v1566 = vadd.f32 0.0, %v1565
        %1567 = vmatmul.f32.gmra.mxu0 %v1312
        %v1568 = vpop.f32.mrf.mxu0
        %v1569 = vadd.f32 0.0, %v1568
        %1570 = vmatmul.f32.gmra.mxu0 %v1315
        %v1571 = vpop.f32.mrf.mxu0
        %v1572 = vadd.f32 0.0, %v1571
        %1573 = vmatmul.f32.gmra.mxu0 %v1318
        %v1574 = vpop.f32.mrf.mxu0
        %v1575 = vadd.f32 0.0, %v1574
        %1576 = vmatmul.f32.gmra.mxu0 %v1321
        %v1577 = vpop.f32.mrf.mxu0
        %v1578 = vadd.f32 0.0, %v1577
        %1579 = vmatmul.f32.gmra.mxu0 %v1324
        %v1580 = vpop.f32.mrf.mxu0
        %v1581 = vadd.f32 0.0, %v1580
        %1582 = vmatmul.f32.gmra.mxu0 %v1327
        %v1583 = vpop.f32.mrf.mxu0
        %v1584 = vadd.f32 0.0, %v1583
        %1585 = vmatmul.f32.gmra.mxu0 %v1330
        %v1586 = vpop.f32.mrf.mxu0
        %v1587 = vadd.f32 0.0, %v1586
        %1588 = vmatmul.f32.gmra.mxu0 %v1333
        %v1589 = vpop.f32.mrf.mxu0
        %v1590 = vadd.f32 0.0, %v1589
        %1591 = vmatmul.f32.gmra.mxu0 %v1336
        %v1592 = vpop.f32.mrf.mxu0
        %v1593 = vadd.f32 0.0, %v1592
        %1594 = vmatmul.f32.gmra.mxu0 %v1339
        %v1595 = vpop.f32.mrf.mxu0
        %v1596 = vadd.f32 0.0, %v1595
        %1597 = vmatmul.f32.gmra.mxu0 %v1342
        %v1598 = vpop.f32.mrf.mxu0
        %v1599 = vadd.f32 0.0, %v1598
        %1600 = vmatmul.f32.gmra.mxu0 %v1345
        %v1601 = vpop.f32.mrf.mxu0
        %v1602 = vadd.f32 0.0, %v1601
        %1603 = vmatmul.f32.gmra.mxu0 %v1348
        %v1604 = vpop.f32.mrf.mxu0
        %v1605 = vadd.f32 0.0, %v1604
        %1606 = vmatmul.f32.gmra.mxu0 %v1351
        %v1607 = vpop.f32.mrf.mxu0
        %v1608 = vadd.f32 0.0, %v1607
        %1609 = vmatmul.f32.gmra.mxu0 %v1354
        %v1610 = vpop.f32.mrf.mxu0
        %v1611 = vadd.f32 0.0, %v1610
        %1612 = vmatmul.f32.gmra.mxu0 %v1357
        %v1613 = vpop.f32.mrf.mxu0
        %v1614 = vadd.f32 0.0, %v1613
        %1615 = vmatmul.f32.gmra.mxu0 %v1360
        %v1616 = vpop.f32.mrf.mxu0
        %v1617 = vadd.f32 0.0, %v1616
        %1618 = vmatmul.f32.gmra.mxu0 %v1363
        %v1619 = vpop.f32.mrf.mxu0
        %v1620 = vadd.f32 0.0, %v1619
        %1621 = vmatmul.f32.gmra.mxu0 %v1366
        %v1622 = vpop.f32.mrf.mxu0
        %v1623 = vadd.f32 0.0, %v1622
        %1624 = vmatmul.f32.gmra.mxu0 %v1369
        %v1625 = vpop.f32.mrf.mxu0
        %v1626 = vadd.f32 0.0, %v1625
        %1627 = vmatmul.f32.gmra.mxu0 %v1372
        %v1628 = vpop.f32.mrf.mxu0
        %v1629 = vadd.f32 0.0, %v1628
        %1630 = vmatmul.f32.gmra.mxu0 %v1375
        %v1631 = vpop.f32.mrf.mxu0
        %v1632 = vadd.f32 0.0, %v1631
        %1633 = vmatmul.f32.gmra.mxu0 %v1378
        %v1634 = vpop.f32.mrf.mxu0
        %v1635 = vadd.f32 0.0, %v1634
        %1636 = vmatmul.f32.gmra.mxu0 %v1381
        %v1637 = vpop.f32.mrf.mxu0
        %v1638 = vadd.f32 0.0, %v1637
        %1639 = vmatmul.f32.gmra.mxu0 %v1384
        %v1640 = vpop.f32.mrf.mxu0
        %v1641 = vadd.f32 0.0, %v1640
        %1642 = vmatmul.f32.gmra.mxu0 %v1387
        %v1643 = vpop.f32.mrf.mxu0
        %v1644 = vadd.f32 0.0, %v1643
        %1645 = vmatmul.f32.gmra.mxu0 %v1390
        %v1646 = vpop.f32.mrf.mxu0
        %v1647 = vadd.f32 0.0, %v1646
        %1648 = vmatmul.f32.gmra.mxu0 %v1393
        %v1649 = vpop.f32.mrf.mxu0
        %v1650 = vadd.f32 0.0, %v1649
        %1651 = vmatmul.f32.gmra.mxu0 %v1396
        %v1652 = vpop.f32.mrf.mxu0
        %v1653 = vadd.f32 0.0, %v1652
        %1654 = vmatmul.f32.gmra.mxu0 %v1399
        %v1655 = vpop.f32.mrf.mxu0
        %v1656 = vadd.f32 0.0, %v1655
        %1657 = vmatmul.f32.gmra.mxu0 %v1402
        %v1658 = vpop.f32.mrf.mxu0
        %v1659 = vadd.f32 0.0, %v1658
        %1660 = vmatmul.f32.gmra.mxu0 %v1405
        %v1661 = vpop.f32.mrf.mxu0
        %v1662 = vadd.f32 0.0, %v1661
        %1663 = vmatmul.f32.gmra.mxu0 %v1408
        %v1664 = vpop.f32.mrf.mxu0
        %v1665 = vadd.f32 0.0, %v1664
        %1666 = vmatmul.f32.gmra.mxu0 %v1411
        %v1667 = vpop.f32.mrf.mxu0
        %v1668 = vadd.f32 0.0, %v1667
        %1669 = vmatmul.f32.gmra.mxu0 %v1414
        %v1670 = vpop.f32.mrf.mxu0
        %v1671 = vadd.f32 0.0, %v1670
        %1672 = vmatmul.f32.gmra.mxu0 %v1417
        %v1673 = vpop.f32.mrf.mxu0
        %v1674 = vadd.f32 0.0, %v1673
        %1675 = vmatmul.f32.gmra.mxu0 %v1420
        %v1676 = vpop.f32.mrf.mxu0
        %v1677 = vadd.f32 0.0, %v1676
        %1678 = vmatmul.f32.gmra.mxu0 %v1423
        %v1679 = vpop.f32.mrf.mxu0
        %v1680 = vadd.f32 0.0, %v1679
        %1681 = vmatmul.f32.gmra.mxu0 %v1426
        %v1682 = vpop.f32.mrf.mxu0
        %v1683 = vadd.f32 0.0, %v1682
        %1684 = vmatmul.f32.gmra.mxu0 %v1429
        %v1685 = vpop.f32.mrf.mxu0
        %v1686 = vadd.f32 0.0, %v1685
        %1687 = vmatmul.f32.gmra.mxu0 %v1432
        %v1688 = vpop.f32.mrf.mxu0
        %v1689 = vadd.f32 0.0, %v1688
        %1690 = vmatmul.f32.gmra.mxu0 %v1435
        %v1691 = vpop.f32.mrf.mxu0
        %v1692 = vadd.f32 0.0, %v1691
        %1693 = vmatmul.f32.gmra.mxu0 %v1438
        %v1694 = vpop.f32.mrf.mxu0
        %v1695 = vadd.f32 0.0, %v1694
        %1696 = vmatmul.f32.gmra.mxu0 %v1441
        %v1697 = vpop.f32.mrf.mxu0
        %v1698 = vadd.f32 0.0, %v1697
        %1699 = vmatmul.f32.gmra.mxu0 %v1444
        %v1700 = vpop.f32.mrf.mxu0
        %v1701 = vadd.f32 0.0, %v1700
        %1702 = vmatmul.f32.gmra.mxu0 %v1447
        %v1703 = vpop.f32.mrf.mxu0
        %v1704 = vadd.f32 0.0, %v1703
        %1705 = vmatmul.f32.gmra.mxu0 %v1450
        %v1706 = vpop.f32.mrf.mxu0
        %v1707 = vadd.f32 0.0, %v1706
        %1708 = vmatmul.f32.gmra.mxu0 %v1453
        %v1709 = vpop.f32.mrf.mxu0
        %v1710 = vadd.f32 0.0, %v1709
        %1711 = vdwg.mxu0
        %1712 = vmatpush.msra.mxu0 0.0
        %1713 = vmatpush.msra.mxu0 0.0
        %1714 = vmatpush.msra.mxu0 0.0
        %1715 = vmatpush.msra.mxu0 0.0
        %1716 = vmatpush.msra.mxu0 0.0
        %1717 = vmatpush.msra.mxu0 0.0
        %1718 = vmatpush.msra.mxu0 0.0
        %1719 = vmatpush.msra.mxu0 0.0
        %1720 = vmatpush.msra.mxu0 0.0
        %1721 = vmatpush.msra.mxu0 0.0
        %1722 = vmatpush.msra.mxu0 0.0
        %1723 = vmatpush.msra.mxu0 0.0
        %1724 = vmatpush.msra.mxu0 0.0
        %1725 = vmatpush.msra.mxu0 0.0
        %1726 = vmatpush.msra.mxu0 0.0
        %1727 = vmatpush.msra.mxu0 %v650
        %1728 = vmatmul.f32.gmra.mxu0 %v1216
        %v1729 = vpop.f32.mrf.mxu0
        %v1730 = vadd.f32 0.0, %v1729
        %1731 = vmatmul.f32.gmra.mxu0 %v1219
        %v1732 = vpop.f32.mrf.mxu0
        %v1733 = vadd.f32 0.0, %v1732
        %1734 = vmatmul.f32.gmra.mxu0 %v1222
        %v1735 = vpop.f32.mrf.mxu0
        %v1736 = vadd.f32 0.0, %v1735
        %1737 = vmatmul.f32.gmra.mxu0 %v1225
        %v1738 = vpop.f32.mrf.mxu0
        %v1739 = vadd.f32 0.0, %v1738
        %1740 = vmatmul.f32.gmra.mxu0 %v1228
        %v1741 = vpop.f32.mrf.mxu0
        %v1742 = vadd.f32 0.0, %v1741
        %1743 = vmatmul.f32.gmra.mxu0 %v1231
        %v1744 = vpop.f32.mrf.mxu0
        %v1745 = vadd.f32 0.0, %v1744
        %1746 = vmatmul.f32.gmra.mxu0 %v1234
        %v1747 = vpop.f32.mrf.mxu0
        %v1748 = vadd.f32 0.0, %v1747
        %1749 = vmatmul.f32.gmra.mxu0 %v1237
        %v1750 = vpop.f32.mrf.mxu0
        %v1751 = vadd.f32 0.0, %v1750
        %1752 = vmatmul.f32.gmra.mxu0 %v1240
        %v1753 = vpop.f32.mrf.mxu0
        %v1754 = vadd.f32 0.0, %v1753
        %1755 = vmatmul.f32.gmra.mxu0 %v1243
        %v1756 = vpop.f32.mrf.mxu0
        %v1757 = vadd.f32 0.0, %v1756
        %1758 = vmatmul.f32.gmra.mxu0 %v1246
        %v1759 = vpop.f32.mrf.mxu0
        %v1760 = vadd.f32 0.0, %v1759
        %1761 = vmatmul.f32.gmra.mxu0 %v1249
        %v1762 = vpop.f32.mrf.mxu0
        %v1763 = vadd.f32 0.0, %v1762
        %1764 = vmatmul.f32.gmra.mxu0 %v1252
        %v1765 = vpop.f32.mrf.mxu0
        %v1766 = vadd.f32 0.0, %v1765
        %1767 = vmatmul.f32.gmra.mxu0 %v1255
        %v1768 = vpop.f32.mrf.mxu0
        %v1769 = vadd.f32 0.0, %v1768
        %1770 = vmatmul.f32.gmra.mxu0 %v1258
        %v1771 = vpop.f32.mrf.mxu0
        %v1772 = vadd.f32 0.0, %v1771
        %1773 = vmatmul.f32.gmra.mxu0 %v1261
        %v1774 = vpop.f32.mrf.mxu0
        %v1775 = vadd.f32 0.0, %v1774
        %1776 = vmatmul.f32.gmra.mxu0 %v1264
        %v1777 = vpop.f32.mrf.mxu0
        %v1778 = vadd.f32 0.0, %v1777
        %1779 = vmatmul.f32.gmra.mxu0 %v1267
        %v1780 = vpop.f32.mrf.mxu0
        %v1781 = vadd.f32 0.0, %v1780
        %1782 = vmatmul.f32.gmra.mxu0 %v1270
        %v1783 = vpop.f32.mrf.mxu0
        %v1784 = vadd.f32 0.0, %v1783
        %1785 = vmatmul.f32.gmra.mxu0 %v1273
        %v1786 = vpop.f32.mrf.mxu0
        %v1787 = vadd.f32 0.0, %v1786
        %1788 = vmatmul.f32.gmra.mxu0 %v1276
        %v1789 = vpop.f32.mrf.mxu0
        %v1790 = vadd.f32 0.0, %v1789
        %1791 = vmatmul.f32.gmra.mxu0 %v1279
        %v1792 = vpop.f32.mrf.mxu0
        %v1793 = vadd.f32 0.0, %v1792
        %1794 = vmatmul.f32.gmra.mxu0 %v1282
        %v1795 = vpop.f32.mrf.mxu0
        %v1796 = vadd.f32 0.0, %v1795
        %1797 = vmatmul.f32.gmra.mxu0 %v1285
        %v1798 = vpop.f32.mrf.mxu0
        %v1799 = vadd.f32 0.0, %v1798
        %1800 = vmatmul.f32.gmra.mxu0 %v1288
        %v1801 = vpop.f32.mrf.mxu0
        %v1802 = vadd.f32 0.0, %v1801
        %1803 = vmatmul.f32.gmra.mxu0 %v1291
        %v1804 = vpop.f32.mrf.mxu0
        %v1805 = vadd.f32 0.0, %v1804
        %1806 = vmatmul.f32.gmra.mxu0 %v1294
        %v1807 = vpop.f32.mrf.mxu0
        %v1808 = vadd.f32 0.0, %v1807
        %1809 = vmatmul.f32.gmra.mxu0 %v1297
        %v1810 = vpop.f32.mrf.mxu0
        %v1811 = vadd.f32 0.0, %v1810
        %1812 = vmatmul.f32.gmra.mxu0 %v1300
        %v1813 = vpop.f32.mrf.mxu0
        %v1814 = vadd.f32 0.0, %v1813
        %1815 = vmatmul.f32.gmra.mxu0 %v1303
        %v1816 = vpop.f32.mrf.mxu0
        %v1817 = vadd.f32 0.0, %v1816
        %1818 = vmatmul.f32.gmra.mxu0 %v1306
        %v1819 = vpop.f32.mrf.mxu0
        %v1820 = vadd.f32 0.0, %v1819
        %1821 = vmatmul.f32.gmra.mxu0 %v1309
        %v1822 = vpop.f32.mrf.mxu0
        %v1823 = vadd.f32 0.0, %v1822
        %1824 = vmatmul.f32.gmra.mxu0 %v1312
        %v1825 = vpop.f32.mrf.mxu0
        %v1826 = vadd.f32 0.0, %v1825
        %1827 = vmatmul.f32.gmra.mxu0 %v1315
        %v1828 = vpop.f32.mrf.mxu0
        %v1829 = vadd.f32 0.0, %v1828
        %1830 = vmatmul.f32.gmra.mxu0 %v1318
        %v1831 = vpop.f32.mrf.mxu0
        %v1832 = vadd.f32 0.0, %v1831
        %1833 = vmatmul.f32.gmra.mxu0 %v1321
        %v1834 = vpop.f32.mrf.mxu0
        %v1835 = vadd.f32 0.0, %v1834
        %1836 = vmatmul.f32.gmra.mxu0 %v1324
        %v1837 = vpop.f32.mrf.mxu0
        %v1838 = vadd.f32 0.0, %v1837
        %1839 = vmatmul.f32.gmra.mxu0 %v1327
        %v1840 = vpop.f32.mrf.mxu0
        %v1841 = vadd.f32 0.0, %v1840
        %1842 = vmatmul.f32.gmra.mxu0 %v1330
        %v1843 = vpop.f32.mrf.mxu0
        %v1844 = vadd.f32 0.0, %v1843
        %1845 = vmatmul.f32.gmra.mxu0 %v1333
        %v1846 = vpop.f32.mrf.mxu0
        %v1847 = vadd.f32 0.0, %v1846
        %1848 = vmatmul.f32.gmra.mxu0 %v1336
        %v1849 = vpop.f32.mrf.mxu0
        %v1850 = vadd.f32 0.0, %v1849
        %1851 = vmatmul.f32.gmra.mxu0 %v1339
        %v1852 = vpop.f32.mrf.mxu0
        %v1853 = vadd.f32 0.0, %v1852
        %1854 = vmatmul.f32.gmra.mxu0 %v1342
        %v1855 = vpop.f32.mrf.mxu0
        %v1856 = vadd.f32 0.0, %v1855
        %1857 = vmatmul.f32.gmra.mxu0 %v1345
        %v1858 = vpop.f32.mrf.mxu0
        %v1859 = vadd.f32 0.0, %v1858
        %1860 = vmatmul.f32.gmra.mxu0 %v1348
        %v1861 = vpop.f32.mrf.mxu0
        %v1862 = vadd.f32 0.0, %v1861
        %1863 = vmatmul.f32.gmra.mxu0 %v1351
        %v1864 = vpop.f32.mrf.mxu0
        %v1865 = vadd.f32 0.0, %v1864
        %1866 = vmatmul.f32.gmra.mxu0 %v1354
        %v1867 = vpop.f32.mrf.mxu0
        %v1868 = vadd.f32 0.0, %v1867
        %1869 = vmatmul.f32.gmra.mxu0 %v1357
        %v1870 = vpop.f32.mrf.mxu0
        %v1871 = vadd.f32 0.0, %v1870
        %1872 = vmatmul.f32.gmra.mxu0 %v1360
        %v1873 = vpop.f32.mrf.mxu0
        %v1874 = vadd.f32 0.0, %v1873
        %1875 = vmatmul.f32.gmra.mxu0 %v1363
        %v1876 = vpop.f32.mrf.mxu0
        %v1877 = vadd.f32 0.0, %v1876
        %1878 = vmatmul.f32.gmra.mxu0 %v1366
        %v1879 = vpop.f32.mrf.mxu0
        %v1880 = vadd.f32 0.0, %v1879
        %1881 = vmatmul.f32.gmra.mxu0 %v1369
        %v1882 = vpop.f32.mrf.mxu0
        %v1883 = vadd.f32 0.0, %v1882
        %1884 = vmatmul.f32.gmra.mxu0 %v1372
        %v1885 = vpop.f32.mrf.mxu0
        %v1886 = vadd.f32 0.0, %v1885
        %1887 = vmatmul.f32.gmra.mxu0 %v1375
        %v1888 = vpop.f32.mrf.mxu0
        %v1889 = vadd.f32 0.0, %v1888
        %1890 = vmatmul.f32.gmra.mxu0 %v1378
        %v1891 = vpop.f32.mrf.mxu0
        %v1892 = vadd.f32 0.0, %v1891
        %1893 = vmatmul.f32.gmra.mxu0 %v1381
        %v1894 = vpop.f32.mrf.mxu0
        %v1895 = vadd.f32 0.0, %v1894
        %1896 = vmatmul.f32.gmra.mxu0 %v1384
        %v1897 = vpop.f32.mrf.mxu0
        %v1898 = vadd.f32 0.0, %v1897
        %1899 = vmatmul.f32.gmra.mxu0 %v1387
        %v1900 = vpop.f32.mrf.mxu0
        %v1901 = vadd.f32 0.0, %v1900
        %1902 = vmatmul.f32.gmra.mxu0 %v1390
        %v1903 = vpop.f32.mrf.mxu0
        %v1904 = vadd.f32 0.0, %v1903
        %1905 = vmatmul.f32.gmra.mxu0 %v1393
        %v1906 = vpop.f32.mrf.mxu0
        %v1907 = vadd.f32 0.0, %v1906
        %1908 = vmatmul.f32.gmra.mxu0 %v1396
        %v1909 = vpop.f32.mrf.mxu0
        %v1910 = vadd.f32 0.0, %v1909
        %1911 = vmatmul.f32.gmra.mxu0 %v1399
        %v1912 = vpop.f32.mrf.mxu0
        %v1913 = vadd.f32 0.0, %v1912
        %1914 = vmatmul.f32.gmra.mxu0 %v1402
        %v1915 = vpop.f32.mrf.mxu0
        %v1916 = vadd.f32 0.0, %v1915
        %1917 = vmatmul.f32.gmra.mxu0 %v1405
        %v1918 = vpop.f32.mrf.mxu0
        %v1919 = vadd.f32 0.0, %v1918
        %1920 = vmatmul.f32.gmra.mxu0 %v1408
        %v1921 = vpop.f32.mrf.mxu0
        %v1922 = vadd.f32 0.0, %v1921
        %1923 = vmatmul.f32.gmra.mxu0 %v1411
        %v1924 = vpop.f32.mrf.mxu0
        %v1925 = vadd.f32 0.0, %v1924
        %1926 = vmatmul.f32.gmra.mxu0 %v1414
        %v1927 = vpop.f32.mrf.mxu0
        %v1928 = vadd.f32 0.0, %v1927
        %1929 = vmatmul.f32.gmra.mxu0 %v1417
        %v1930 = vpop.f32.mrf.mxu0
        %v1931 = vadd.f32 0.0, %v1930
        %1932 = vmatmul.f32.gmra.mxu0 %v1420
        %v1933 = vpop.f32.mrf.mxu0
        %v1934 = vadd.f32 0.0, %v1933
        %1935 = vmatmul.f32.gmra.mxu0 %v1423
        %v1936 = vpop.f32.mrf.mxu0
        %v1937 = vadd.f32 0.0, %v1936
        %1938 = vmatmul.f32.gmra.mxu0 %v1426
        %v1939 = vpop.f32.mrf.mxu0
        %v1940 = vadd.f32 0.0, %v1939
        %1941 = vmatmul.f32.gmra.mxu0 %v1429
        %v1942 = vpop.f32.mrf.mxu0
        %v1943 = vadd.f32 0.0, %v1942
        %1944 = vmatmul.f32.gmra.mxu0 %v1432
        %v1945 = vpop.f32.mrf.mxu0
        %v1946 = vadd.f32 0.0, %v1945
        %1947 = vmatmul.f32.gmra.mxu0 %v1435
        %v1948 = vpop.f32.mrf.mxu0
        %v1949 = vadd.f32 0.0, %v1948
        %1950 = vmatmul.f32.gmra.mxu0 %v1438
        %v1951 = vpop.f32.mrf.mxu0
        %v1952 = vadd.f32 0.0, %v1951
        %1953 = vmatmul.f32.gmra.mxu0 %v1441
        %v1954 = vpop.f32.mrf.mxu0
        %v1955 = vadd.f32 0.0, %v1954
        %1956 = vmatmul.f32.gmra.mxu0 %v1444
        %v1957 = vpop.f32.mrf.mxu0
        %v1958 = vadd.f32 0.0, %v1957
        %1959 = vmatmul.f32.gmra.mxu0 %v1447
        %v1960 = vpop.f32.mrf.mxu0
        %v1961 = vadd.f32 0.0, %v1960
        %1962 = vmatmul.f32.gmra.mxu0 %v1450
        %v1963 = vpop.f32.mrf.mxu0
        %v1964 = vadd.f32 0.0, %v1963
        %1965 = vmatmul.f32.gmra.mxu0 %v1453
        %v1966 = vpop.f32.mrf.mxu0
        %v1967 = vadd.f32 0.0, %v1966
        %1968 = vdwg.mxu0
        %1969 = vmatpush.msra.mxu0 0.0
        %1970 = vmatpush.msra.mxu0 0.0
        %1971 = vmatpush.msra.mxu0 0.0
        %1972 = vmatpush.msra.mxu0 0.0
        %1973 = vmatpush.msra.mxu0 0.0
        %1974 = vmatpush.msra.mxu0 0.0
        %1975 = vmatpush.msra.mxu0 0.0
        %1976 = vmatpush.msra.mxu0 0.0
        %1977 = vmatpush.msra.mxu0 0.0
        %1978 = vmatpush.msra.mxu0 0.0
        %1979 = vmatpush.msra.mxu0 0.0
        %1980 = vmatpush.msra.mxu0 0.0
        %1981 = vmatpush.msra.mxu0 0.0
        %1982 = vmatpush.msra.mxu0 0.0
        %1983 = vmatpush.msra.mxu0 0.0
        %1984 = vmatpush.msra.mxu0 %v651
        %1985 = vmatmul.f32.gmra.mxu0 %v1216
        %v1986 = vpop.f32.mrf.mxu0
        %v1987 = vadd.f32 0.0, %v1986
        %1988 = vmatmul.f32.gmra.mxu0 %v1219
        %v1989 = vpop.f32.mrf.mxu0
        %v1990 = vadd.f32 0.0, %v1989
        %1991 = vmatmul.f32.gmra.mxu0 %v1222
        %v1992 = vpop.f32.mrf.mxu0
        %v1993 = vadd.f32 0.0, %v1992
        %1994 = vmatmul.f32.gmra.mxu0 %v1225
        %v1995 = vpop.f32.mrf.mxu0
        %v1996 = vadd.f32 0.0, %v1995
        %1997 = vmatmul.f32.gmra.mxu0 %v1228
        %v1998 = vpop.f32.mrf.mxu0
        %v1999 = vadd.f32 0.0, %v1998
        %2000 = vmatmul.f32.gmra.mxu0 %v1231
        %v2001 = vpop.f32.mrf.mxu0
        %v2002 = vadd.f32 0.0, %v2001
        %2003 = vmatmul.f32.gmra.mxu0 %v1234
        %v2004 = vpop.f32.mrf.mxu0
        %v2005 = vadd.f32 0.0, %v2004
        %2006 = vmatmul.f32.gmra.mxu0 %v1237
        %v2007 = vpop.f32.mrf.mxu0
        %v2008 = vadd.f32 0.0, %v2007
        %2009 = vmatmul.f32.gmra.mxu0 %v1240
        %v2010 = vpop.f32.mrf.mxu0
        %v2011 = vadd.f32 0.0, %v2010
        %2012 = vmatmul.f32.gmra.mxu0 %v1243
        %v2013 = vpop.f32.mrf.mxu0
        %v2014 = vadd.f32 0.0, %v2013
        %2015 = vmatmul.f32.gmra.mxu0 %v1246
        %v2016 = vpop.f32.mrf.mxu0
        %v2017 = vadd.f32 0.0, %v2016
        %2018 = vmatmul.f32.gmra.mxu0 %v1249
        %v2019 = vpop.f32.mrf.mxu0
        %v2020 = vadd.f32 0.0, %v2019
        %2021 = vmatmul.f32.gmra.mxu0 %v1252
        %v2022 = vpop.f32.mrf.mxu0
        %v2023 = vadd.f32 0.0, %v2022
        %2024 = vmatmul.f32.gmra.mxu0 %v1255
        %v2025 = vpop.f32.mrf.mxu0
        %v2026 = vadd.f32 0.0, %v2025
        %2027 = vmatmul.f32.gmra.mxu0 %v1258
        %v2028 = vpop.f32.mrf.mxu0
        %v2029 = vadd.f32 0.0, %v2028
        %2030 = vmatmul.f32.gmra.mxu0 %v1261
        %v2031 = vpop.f32.mrf.mxu0
        %v2032 = vadd.f32 0.0, %v2031
        %2033 = vmatmul.f32.gmra.mxu0 %v1264
        %v2034 = vpop.f32.mrf.mxu0
        %v2035 = vadd.f32 0.0, %v2034
        %2036 = vmatmul.f32.gmra.mxu0 %v1267
        %v2037 = vpop.f32.mrf.mxu0
        %v2038 = vadd.f32 0.0, %v2037
        %2039 = vmatmul.f32.gmra.mxu0 %v1270
        %v2040 = vpop.f32.mrf.mxu0
        %v2041 = vadd.f32 0.0, %v2040
        %2042 = vmatmul.f32.gmra.mxu0 %v1273
        %v2043 = vpop.f32.mrf.mxu0
        %v2044 = vadd.f32 0.0, %v2043
        %2045 = vmatmul.f32.gmra.mxu0 %v1276
        %v2046 = vpop.f32.mrf.mxu0
        %v2047 = vadd.f32 0.0, %v2046
        %2048 = vmatmul.f32.gmra.mxu0 %v1279
        %v2049 = vpop.f32.mrf.mxu0
        %v2050 = vadd.f32 0.0, %v2049
        %2051 = vmatmul.f32.gmra.mxu0 %v1282
        %v2052 = vpop.f32.mrf.mxu0
        %v2053 = vadd.f32 0.0, %v2052
        %2054 = vmatmul.f32.gmra.mxu0 %v1285
        %v2055 = vpop.f32.mrf.mxu0
        %v2056 = vadd.f32 0.0, %v2055
        %2057 = vmatmul.f32.gmra.mxu0 %v1288
        %v2058 = vpop.f32.mrf.mxu0
        %v2059 = vadd.f32 0.0, %v2058
        %2060 = vmatmul.f32.gmra.mxu0 %v1291
        %v2061 = vpop.f32.mrf.mxu0
        %v2062 = vadd.f32 0.0, %v2061
        %2063 = vmatmul.f32.gmra.mxu0 %v1294
        %v2064 = vpop.f32.mrf.mxu0
        %v2065 = vadd.f32 0.0, %v2064
        %2066 = vmatmul.f32.gmra.mxu0 %v1297
        %v2067 = vpop.f32.mrf.mxu0
        %v2068 = vadd.f32 0.0, %v2067
        %2069 = vmatmul.f32.gmra.mxu0 %v1300
        %v2070 = vpop.f32.mrf.mxu0
        %v2071 = vadd.f32 0.0, %v2070
        %2072 = vmatmul.f32.gmra.mxu0 %v1303
        %v2073 = vpop.f32.mrf.mxu0
        %v2074 = vadd.f32 0.0, %v2073
        %2075 = vmatmul.f32.gmra.mxu0 %v1306
        %v2076 = vpop.f32.mrf.mxu0
        %v2077 = vadd.f32 0.0, %v2076
        %2078 = vmatmul.f32.gmra.mxu0 %v1309
        %v2079 = vpop.f32.mrf.mxu0
        %v2080 = vadd.f32 0.0, %v2079
        %2081 = vmatmul.f32.gmra.mxu0 %v1312
        %v2082 = vpop.f32.mrf.mxu0
        %v2083 = vadd.f32 0.0, %v2082
        %2084 = vmatmul.f32.gmra.mxu0 %v1315
        %v2085 = vpop.f32.mrf.mxu0
        %v2086 = vadd.f32 0.0, %v2085
        %2087 = vmatmul.f32.gmra.mxu0 %v1318
        %v2088 = vpop.f32.mrf.mxu0
        %v2089 = vadd.f32 0.0, %v2088
        %2090 = vmatmul.f32.gmra.mxu0 %v1321
        %v2091 = vpop.f32.mrf.mxu0
        %v2092 = vadd.f32 0.0, %v2091
        %2093 = vmatmul.f32.gmra.mxu0 %v1324
        %v2094 = vpop.f32.mrf.mxu0
        %v2095 = vadd.f32 0.0, %v2094
        %2096 = vmatmul.f32.gmra.mxu0 %v1327
        %v2097 = vpop.f32.mrf.mxu0
        %v2098 = vadd.f32 0.0, %v2097
        %2099 = vmatmul.f32.gmra.mxu0 %v1330
        %v2100 = vpop.f32.mrf.mxu0
        %v2101 = vadd.f32 0.0, %v2100
        %2102 = vmatmul.f32.gmra.mxu0 %v1333
        %v2103 = vpop.f32.mrf.mxu0
        %v2104 = vadd.f32 0.0, %v2103
        %2105 = vmatmul.f32.gmra.mxu0 %v1336
        %v2106 = vpop.f32.mrf.mxu0
        %v2107 = vadd.f32 0.0, %v2106
        %2108 = vmatmul.f32.gmra.mxu0 %v1339
        %v2109 = vpop.f32.mrf.mxu0
        %v2110 = vadd.f32 0.0, %v2109
        %2111 = vmatmul.f32.gmra.mxu0 %v1342
        %v2112 = vpop.f32.mrf.mxu0
        %v2113 = vadd.f32 0.0, %v2112
        %2114 = vmatmul.f32.gmra.mxu0 %v1345
        %v2115 = vpop.f32.mrf.mxu0
        %v2116 = vadd.f32 0.0, %v2115
        %2117 = vmatmul.f32.gmra.mxu0 %v1348
        %v2118 = vpop.f32.mrf.mxu0
        %v2119 = vadd.f32 0.0, %v2118
        %2120 = vmatmul.f32.gmra.mxu0 %v1351
        %v2121 = vpop.f32.mrf.mxu0
        %v2122 = vadd.f32 0.0, %v2121
        %2123 = vmatmul.f32.gmra.mxu0 %v1354
        %v2124 = vpop.f32.mrf.mxu0
        %v2125 = vadd.f32 0.0, %v2124
        %2126 = vmatmul.f32.gmra.mxu0 %v1357
        %v2127 = vpop.f32.mrf.mxu0
        %v2128 = vadd.f32 0.0, %v2127
        %2129 = vmatmul.f32.gmra.mxu0 %v1360
        %v2130 = vpop.f32.mrf.mxu0
        %v2131 = vadd.f32 0.0, %v2130
        %2132 = vmatmul.f32.gmra.mxu0 %v1363
        %v2133 = vpop.f32.mrf.mxu0
        %v2134 = vadd.f32 0.0, %v2133
        %2135 = vmatmul.f32.gmra.mxu0 %v1366
        %v2136 = vpop.f32.mrf.mxu0
        %v2137 = vadd.f32 0.0, %v2136
        %2138 = vmatmul.f32.gmra.mxu0 %v1369
        %v2139 = vpop.f32.mrf.mxu0
        %v2140 = vadd.f32 0.0, %v2139
        %2141 = vmatmul.f32.gmra.mxu0 %v1372
        %v2142 = vpop.f32.mrf.mxu0
        %v2143 = vadd.f32 0.0, %v2142
        %2144 = vmatmul.f32.gmra.mxu0 %v1375
        %v2145 = vpop.f32.mrf.mxu0
        %v2146 = vadd.f32 0.0, %v2145
        %2147 = vmatmul.f32.gmra.mxu0 %v1378
        %v2148 = vpop.f32.mrf.mxu0
        %v2149 = vadd.f32 0.0, %v2148
        %2150 = vmatmul.f32.gmra.mxu0 %v1381
        %v2151 = vpop.f32.mrf.mxu0
        %v2152 = vadd.f32 0.0, %v2151
        %2153 = vmatmul.f32.gmra.mxu0 %v1384
        %v2154 = vpop.f32.mrf.mxu0
        %v2155 = vadd.f32 0.0, %v2154
        %2156 = vmatmul.f32.gmra.mxu0 %v1387
        %v2157 = vpop.f32.mrf.mxu0
        %v2158 = vadd.f32 0.0, %v2157
        %2159 = vmatmul.f32.gmra.mxu0 %v1390
        %v2160 = vpop.f32.mrf.mxu0
        %v2161 = vadd.f32 0.0, %v2160
        %2162 = vmatmul.f32.gmra.mxu0 %v1393
        %v2163 = vpop.f32.mrf.mxu0
        %v2164 = vadd.f32 0.0, %v2163
        %2165 = vmatmul.f32.gmra.mxu0 %v1396
        %v2166 = vpop.f32.mrf.mxu0
        %v2167 = vadd.f32 0.0, %v2166
        %2168 = vmatmul.f32.gmra.mxu0 %v1399
        %v2169 = vpop.f32.mrf.mxu0
        %v2170 = vadd.f32 0.0, %v2169
        %2171 = vmatmul.f32.gmra.mxu0 %v1402
        %v2172 = vpop.f32.mrf.mxu0
        %v2173 = vadd.f32 0.0, %v2172
        %2174 = vmatmul.f32.gmra.mxu0 %v1405
        %v2175 = vpop.f32.mrf.mxu0
        %v2176 = vadd.f32 0.0, %v2175
        %2177 = vmatmul.f32.gmra.mxu0 %v1408
        %v2178 = vpop.f32.mrf.mxu0
        %v2179 = vadd.f32 0.0, %v2178
        %2180 = vmatmul.f32.gmra.mxu0 %v1411
        %v2181 = vpop.f32.mrf.mxu0
        %v2182 = vadd.f32 0.0, %v2181
        %2183 = vmatmul.f32.gmra.mxu0 %v1414
        %v2184 = vpop.f32.mrf.mxu0
        %v2185 = vadd.f32 0.0, %v2184
        %2186 = vmatmul.f32.gmra.mxu0 %v1417
        %v2187 = vpop.f32.mrf.mxu0
        %v2188 = vadd.f32 0.0, %v2187
        %2189 = vmatmul.f32.gmra.mxu0 %v1420
        %v2190 = vpop.f32.mrf.mxu0
        %v2191 = vadd.f32 0.0, %v2190
        %2192 = vmatmul.f32.gmra.mxu0 %v1423
        %v2193 = vpop.f32.mrf.mxu0
        %v2194 = vadd.f32 0.0, %v2193
        %2195 = vmatmul.f32.gmra.mxu0 %v1426
        %v2196 = vpop.f32.mrf.mxu0
        %v2197 = vadd.f32 0.0, %v2196
        %2198 = vmatmul.f32.gmra.mxu0 %v1429
        %v2199 = vpop.f32.mrf.mxu0
        %v2200 = vadd.f32 0.0, %v2199
        %2201 = vmatmul.f32.gmra.mxu0 %v1432
        %v2202 = vpop.f32.mrf.mxu0
        %v2203 = vadd.f32 0.0, %v2202
        %2204 = vmatmul.f32.gmra.mxu0 %v1435
        %v2205 = vpop.f32.mrf.mxu0
        %v2206 = vadd.f32 0.0, %v2205
        %2207 = vmatmul.f32.gmra.mxu0 %v1438
        %v2208 = vpop.f32.mrf.mxu0
        %v2209 = vadd.f32 0.0, %v2208
        %2210 = vmatmul.f32.gmra.mxu0 %v1441
        %v2211 = vpop.f32.mrf.mxu0
        %v2212 = vadd.f32 0.0, %v2211
        %2213 = vmatmul.f32.gmra.mxu0 %v1444
        %v2214 = vpop.f32.mrf.mxu0
        %v2215 = vadd.f32 0.0, %v2214
        %2216 = vmatmul.f32.gmra.mxu0 %v1447
        %v2217 = vpop.f32.mrf.mxu0
        %v2218 = vadd.f32 0.0, %v2217
        %2219 = vmatmul.f32.gmra.mxu0 %v1450
        %v2220 = vpop.f32.mrf.mxu0
        %v2221 = vadd.f32 0.0, %v2220
        %2222 = vmatmul.f32.gmra.mxu0 %v1453
        %v2223 = vpop.f32.mrf.mxu0
        %v2224 = vadd.f32 0.0, %v2223
        %2225 = vdwg.mxu0
        %2226 = vmatpush.msra.mxu0 0.0
        %2227 = vmatpush.msra.mxu0 0.0
        %2228 = vmatpush.msra.mxu0 0.0
        %2229 = vmatpush.msra.mxu0 0.0
        %2230 = vmatpush.msra.mxu0 0.0
        %2231 = vmatpush.msra.mxu0 0.0
        %2232 = vmatpush.msra.mxu0 0.0
        %2233 = vmatpush.msra.mxu0 0.0
        %2234 = vmatpush.msra.mxu0 0.0
        %2235 = vmatpush.msra.mxu0 0.0
        %2236 = vmatpush.msra.mxu0 0.0
        %2237 = vmatpush.msra.mxu0 0.0
        %2238 = vmatpush.msra.mxu0 0.0
        %2239 = vmatpush.msra.mxu0 0.0
        %2240 = vmatpush.msra.mxu0 0.0
        %2241 = vmatpush.msra.mxu0 %v652
        %2242 = vmatmul.f32.gmra.mxu0 %v1216
        %v2243 = vpop.f32.mrf.mxu0
        %v2244 = vadd.f32 0.0, %v2243
        %2245 = vmatmul.f32.gmra.mxu0 %v1219
        %v2246 = vpop.f32.mrf.mxu0
        %v2247 = vadd.f32 0.0, %v2246
        %2248 = vmatmul.f32.gmra.mxu0 %v1222
        %v2249 = vpop.f32.mrf.mxu0
        %v2250 = vadd.f32 0.0, %v2249
        %2251 = vmatmul.f32.gmra.mxu0 %v1225
        %v2252 = vpop.f32.mrf.mxu0
        %v2253 = vadd.f32 0.0, %v2252
        %2254 = vmatmul.f32.gmra.mxu0 %v1228
        %v2255 = vpop.f32.mrf.mxu0
        %v2256 = vadd.f32 0.0, %v2255
        %2257 = vmatmul.f32.gmra.mxu0 %v1231
        %v2258 = vpop.f32.mrf.mxu0
        %v2259 = vadd.f32 0.0, %v2258
        %2260 = vmatmul.f32.gmra.mxu0 %v1234
        %v2261 = vpop.f32.mrf.mxu0
        %v2262 = vadd.f32 0.0, %v2261
        %2263 = vmatmul.f32.gmra.mxu0 %v1237
        %v2264 = vpop.f32.mrf.mxu0
        %v2265 = vadd.f32 0.0, %v2264
        %2266 = vmatmul.f32.gmra.mxu0 %v1240
        %v2267 = vpop.f32.mrf.mxu0
        %v2268 = vadd.f32 0.0, %v2267
        %2269 = vmatmul.f32.gmra.mxu0 %v1243
        %v2270 = vpop.f32.mrf.mxu0
        %v2271 = vadd.f32 0.0, %v2270
        %2272 = vmatmul.f32.gmra.mxu0 %v1246
        %v2273 = vpop.f32.mrf.mxu0
        %v2274 = vadd.f32 0.0, %v2273
        %2275 = vmatmul.f32.gmra.mxu0 %v1249
        %v2276 = vpop.f32.mrf.mxu0
        %v2277 = vadd.f32 0.0, %v2276
        %2278 = vmatmul.f32.gmra.mxu0 %v1252
        %v2279 = vpop.f32.mrf.mxu0
        %v2280 = vadd.f32 0.0, %v2279
        %2281 = vmatmul.f32.gmra.mxu0 %v1255
        %v2282 = vpop.f32.mrf.mxu0
        %v2283 = vadd.f32 0.0, %v2282
        %2284 = vmatmul.f32.gmra.mxu0 %v1258
        %v2285 = vpop.f32.mrf.mxu0
        %v2286 = vadd.f32 0.0, %v2285
        %2287 = vmatmul.f32.gmra.mxu0 %v1261
        %v2288 = vpop.f32.mrf.mxu0
        %v2289 = vadd.f32 0.0, %v2288
        %2290 = vmatmul.f32.gmra.mxu0 %v1264
        %v2291 = vpop.f32.mrf.mxu0
        %v2292 = vadd.f32 0.0, %v2291
        %2293 = vmatmul.f32.gmra.mxu0 %v1267
        %v2294 = vpop.f32.mrf.mxu0
        %v2295 = vadd.f32 0.0, %v2294
        %2296 = vmatmul.f32.gmra.mxu0 %v1270
        %v2297 = vpop.f32.mrf.mxu0
        %v2298 = vadd.f32 0.0, %v2297
        %2299 = vmatmul.f32.gmra.mxu0 %v1273
        %v2300 = vpop.f32.mrf.mxu0
        %v2301 = vadd.f32 0.0, %v2300
        %2302 = vmatmul.f32.gmra.mxu0 %v1276
        %v2303 = vpop.f32.mrf.mxu0
        %v2304 = vadd.f32 0.0, %v2303
        %2305 = vmatmul.f32.gmra.mxu0 %v1279
        %v2306 = vpop.f32.mrf.mxu0
        %v2307 = vadd.f32 0.0, %v2306
        %2308 = vmatmul.f32.gmra.mxu0 %v1282
        %v2309 = vpop.f32.mrf.mxu0
        %v2310 = vadd.f32 0.0, %v2309
        %2311 = vmatmul.f32.gmra.mxu0 %v1285
        %v2312 = vpop.f32.mrf.mxu0
        %v2313 = vadd.f32 0.0, %v2312
        %2314 = vmatmul.f32.gmra.mxu0 %v1288
        %v2315 = vpop.f32.mrf.mxu0
        %v2316 = vadd.f32 0.0, %v2315
        %2317 = vmatmul.f32.gmra.mxu0 %v1291
        %v2318 = vpop.f32.mrf.mxu0
        %v2319 = vadd.f32 0.0, %v2318
        %2320 = vmatmul.f32.gmra.mxu0 %v1294
        %v2321 = vpop.f32.mrf.mxu0
        %v2322 = vadd.f32 0.0, %v2321
        %2323 = vmatmul.f32.gmra.mxu0 %v1297
        %v2324 = vpop.f32.mrf.mxu0
        %v2325 = vadd.f32 0.0, %v2324
        %2326 = vmatmul.f32.gmra.mxu0 %v1300
        %v2327 = vpop.f32.mrf.mxu0
        %v2328 = vadd.f32 0.0, %v2327
        %2329 = vmatmul.f32.gmra.mxu0 %v1303
        %v2330 = vpop.f32.mrf.mxu0
        %v2331 = vadd.f32 0.0, %v2330
        %2332 = vmatmul.f32.gmra.mxu0 %v1306
        %v2333 = vpop.f32.mrf.mxu0
        %v2334 = vadd.f32 0.0, %v2333
        %2335 = vmatmul.f32.gmra.mxu0 %v1309
        %v2336 = vpop.f32.mrf.mxu0
        %v2337 = vadd.f32 0.0, %v2336
        %2338 = vmatmul.f32.gmra.mxu0 %v1312
        %v2339 = vpop.f32.mrf.mxu0
        %v2340 = vadd.f32 0.0, %v2339
        %2341 = vmatmul.f32.gmra.mxu0 %v1315
        %v2342 = vpop.f32.mrf.mxu0
        %v2343 = vadd.f32 0.0, %v2342
        %2344 = vmatmul.f32.gmra.mxu0 %v1318
        %v2345 = vpop.f32.mrf.mxu0
        %v2346 = vadd.f32 0.0, %v2345
        %2347 = vmatmul.f32.gmra.mxu0 %v1321
        %v2348 = vpop.f32.mrf.mxu0
        %v2349 = vadd.f32 0.0, %v2348
        %2350 = vmatmul.f32.gmra.mxu0 %v1324
        %v2351 = vpop.f32.mrf.mxu0
        %v2352 = vadd.f32 0.0, %v2351
        %2353 = vmatmul.f32.gmra.mxu0 %v1327
        %v2354 = vpop.f32.mrf.mxu0
        %v2355 = vadd.f32 0.0, %v2354
        %2356 = vmatmul.f32.gmra.mxu0 %v1330
        %v2357 = vpop.f32.mrf.mxu0
        %v2358 = vadd.f32 0.0, %v2357
        %2359 = vmatmul.f32.gmra.mxu0 %v1333
        %v2360 = vpop.f32.mrf.mxu0
        %v2361 = vadd.f32 0.0, %v2360
        %2362 = vmatmul.f32.gmra.mxu0 %v1336
        %v2363 = vpop.f32.mrf.mxu0
        %v2364 = vadd.f32 0.0, %v2363
        %2365 = vmatmul.f32.gmra.mxu0 %v1339
        %v2366 = vpop.f32.mrf.mxu0
        %v2367 = vadd.f32 0.0, %v2366
        %2368 = vmatmul.f32.gmra.mxu0 %v1342
        %v2369 = vpop.f32.mrf.mxu0
        %v2370 = vadd.f32 0.0, %v2369
        %2371 = vmatmul.f32.gmra.mxu0 %v1345
        %v2372 = vpop.f32.mrf.mxu0
        %v2373 = vadd.f32 0.0, %v2372
        %2374 = vmatmul.f32.gmra.mxu0 %v1348
        %v2375 = vpop.f32.mrf.mxu0
        %v2376 = vadd.f32 0.0, %v2375
        %2377 = vmatmul.f32.gmra.mxu0 %v1351
        %v2378 = vpop.f32.mrf.mxu0
        %v2379 = vadd.f32 0.0, %v2378
        %2380 = vmatmul.f32.gmra.mxu0 %v1354
        %v2381 = vpop.f32.mrf.mxu0
        %v2382 = vadd.f32 0.0, %v2381
        %2383 = vmatmul.f32.gmra.mxu0 %v1357
        %v2384 = vpop.f32.mrf.mxu0
        %v2385 = vadd.f32 0.0, %v2384
        %2386 = vmatmul.f32.gmra.mxu0 %v1360
        %v2387 = vpop.f32.mrf.mxu0
        %v2388 = vadd.f32 0.0, %v2387
        %2389 = vmatmul.f32.gmra.mxu0 %v1363
        %v2390 = vpop.f32.mrf.mxu0
        %v2391 = vadd.f32 0.0, %v2390
        %2392 = vmatmul.f32.gmra.mxu0 %v1366
        %v2393 = vpop.f32.mrf.mxu0
        %v2394 = vadd.f32 0.0, %v2393
        %2395 = vmatmul.f32.gmra.mxu0 %v1369
        %v2396 = vpop.f32.mrf.mxu0
        %v2397 = vadd.f32 0.0, %v2396
        %2398 = vmatmul.f32.gmra.mxu0 %v1372
        %v2399 = vpop.f32.mrf.mxu0
        %v2400 = vadd.f32 0.0, %v2399
        %2401 = vmatmul.f32.gmra.mxu0 %v1375
        %v2402 = vpop.f32.mrf.mxu0
        %v2403 = vadd.f32 0.0, %v2402
        %2404 = vmatmul.f32.gmra.mxu0 %v1378
        %v2405 = vpop.f32.mrf.mxu0
        %v2406 = vadd.f32 0.0, %v2405
        %2407 = vmatmul.f32.gmra.mxu0 %v1381
        %v2408 = vpop.f32.mrf.mxu0
        %v2409 = vadd.f32 0.0, %v2408
        %2410 = vmatmul.f32.gmra.mxu0 %v1384
        %v2411 = vpop.f32.mrf.mxu0
        %v2412 = vadd.f32 0.0, %v2411
        %2413 = vmatmul.f32.gmra.mxu0 %v1387
        %v2414 = vpop.f32.mrf.mxu0
        %v2415 = vadd.f32 0.0, %v2414
        %2416 = vmatmul.f32.gmra.mxu0 %v1390
        %v2417 = vpop.f32.mrf.mxu0
        %v2418 = vadd.f32 0.0, %v2417
        %2419 = vmatmul.f32.gmra.mxu0 %v1393
        %v2420 = vpop.f32.mrf.mxu0
        %v2421 = vadd.f32 0.0, %v2420
        %2422 = vmatmul.f32.gmra.mxu0 %v1396
        %v2423 = vpop.f32.mrf.mxu0
        %v2424 = vadd.f32 0.0, %v2423
        %2425 = vmatmul.f32.gmra.mxu0 %v1399
        %v2426 = vpop.f32.mrf.mxu0
        %v2427 = vadd.f32 0.0, %v2426
        %2428 = vmatmul.f32.gmra.mxu0 %v1402
        %v2429 = vpop.f32.mrf.mxu0
        %v2430 = vadd.f32 0.0, %v2429
        %2431 = vmatmul.f32.gmra.mxu0 %v1405
        %v2432 = vpop.f32.mrf.mxu0
        %v2433 = vadd.f32 0.0, %v2432
        %2434 = vmatmul.f32.gmra.mxu0 %v1408
        %v2435 = vpop.f32.mrf.mxu0
        %v2436 = vadd.f32 0.0, %v2435
        %2437 = vmatmul.f32.gmra.mxu0 %v1411
        %v2438 = vpop.f32.mrf.mxu0
        %v2439 = vadd.f32 0.0, %v2438
        %2440 = vmatmul.f32.gmra.mxu0 %v1414
        %v2441 = vpop.f32.mrf.mxu0
        %v2442 = vadd.f32 0.0, %v2441
        %2443 = vmatmul.f32.gmra.mxu0 %v1417
        %v2444 = vpop.f32.mrf.mxu0
        %v2445 = vadd.f32 0.0, %v2444
        %2446 = vmatmul.f32.gmra.mxu0 %v1420
        %v2447 = vpop.f32.mrf.mxu0
        %v2448 = vadd.f32 0.0, %v2447
        %2449 = vmatmul.f32.gmra.mxu0 %v1423
        %v2450 = vpop.f32.mrf.mxu0
        %v2451 = vadd.f32 0.0, %v2450
        %2452 = vmatmul.f32.gmra.mxu0 %v1426
        %v2453 = vpop.f32.mrf.mxu0
        %v2454 = vadd.f32 0.0, %v2453
        %2455 = vmatmul.f32.gmra.mxu0 %v1429
        %v2456 = vpop.f32.mrf.mxu0
        %v2457 = vadd.f32 0.0, %v2456
        %2458 = vmatmul.f32.gmra.mxu0 %v1432
        %v2459 = vpop.f32.mrf.mxu0
        %v2460 = vadd.f32 0.0, %v2459
        %2461 = vmatmul.f32.gmra.mxu0 %v1435
        %v2462 = vpop.f32.mrf.mxu0
        %v2463 = vadd.f32 0.0, %v2462
        %2464 = vmatmul.f32.gmra.mxu0 %v1438
        %v2465 = vpop.f32.mrf.mxu0
        %v2466 = vadd.f32 0.0, %v2465
        %2467 = vmatmul.f32.gmra.mxu0 %v1441
        %v2468 = vpop.f32.mrf.mxu0
        %v2469 = vadd.f32 0.0, %v2468
        %2470 = vmatmul.f32.gmra.mxu0 %v1444
        %v2471 = vpop.f32.mrf.mxu0
        %v2472 = vadd.f32 0.0, %v2471
        %2473 = vmatmul.f32.gmra.mxu0 %v1447
        %v2474 = vpop.f32.mrf.mxu0
        %v2475 = vadd.f32 0.0, %v2474
        %2476 = vmatmul.f32.gmra.mxu0 %v1450
        %v2477 = vpop.f32.mrf.mxu0
        %v2478 = vadd.f32 0.0, %v2477
        %2479 = vmatmul.f32.gmra.mxu0 %v1453
        %v2480 = vpop.f32.mrf.mxu0
        %v2481 = vadd.f32 0.0, %v2480
        %2482 = vdwg.mxu0
        %2483 = vmatpush.msra.mxu0 0.0
        %2484 = vmatpush.msra.mxu0 0.0
        %2485 = vmatpush.msra.mxu0 0.0
        %2486 = vmatpush.msra.mxu0 0.0
        %2487 = vmatpush.msra.mxu0 0.0
        %2488 = vmatpush.msra.mxu0 0.0
        %2489 = vmatpush.msra.mxu0 0.0
        %2490 = vmatpush.msra.mxu0 0.0
        %2491 = vmatpush.msra.mxu0 0.0
        %2492 = vmatpush.msra.mxu0 0.0
        %2493 = vmatpush.msra.mxu0 0.0
        %2494 = vmatpush.msra.mxu0 0.0
        %2495 = vmatpush.msra.mxu0 0.0
        %2496 = vmatpush.msra.mxu0 0.0
        %2497 = vmatpush.msra.mxu0 0.0
        %2498 = vmatpush.msra.mxu0 %v653
        %2499 = vmatmul.f32.gmra.mxu0 %v1216
        %v2500 = vpop.f32.mrf.mxu0
        %v2501 = vadd.f32 0.0, %v2500
        %2502 = vmatmul.f32.gmra.mxu0 %v1219
        %v2503 = vpop.f32.mrf.mxu0
        %v2504 = vadd.f32 0.0, %v2503
        %2505 = vmatmul.f32.gmra.mxu0 %v1222
        %v2506 = vpop.f32.mrf.mxu0
        %v2507 = vadd.f32 0.0, %v2506
        %2508 = vmatmul.f32.gmra.mxu0 %v1225
        %v2509 = vpop.f32.mrf.mxu0
        %v2510 = vadd.f32 0.0, %v2509
        %2511 = vmatmul.f32.gmra.mxu0 %v1228
        %v2512 = vpop.f32.mrf.mxu0
        %v2513 = vadd.f32 0.0, %v2512
        %2514 = vmatmul.f32.gmra.mxu0 %v1231
        %v2515 = vpop.f32.mrf.mxu0
        %v2516 = vadd.f32 0.0, %v2515
        %2517 = vmatmul.f32.gmra.mxu0 %v1234
        %v2518 = vpop.f32.mrf.mxu0
        %v2519 = vadd.f32 0.0, %v2518
        %2520 = vmatmul.f32.gmra.mxu0 %v1237
        %v2521 = vpop.f32.mrf.mxu0
        %v2522 = vadd.f32 0.0, %v2521
        %2523 = vmatmul.f32.gmra.mxu0 %v1240
        %v2524 = vpop.f32.mrf.mxu0
        %v2525 = vadd.f32 0.0, %v2524
        %2526 = vmatmul.f32.gmra.mxu0 %v1243
        %v2527 = vpop.f32.mrf.mxu0
        %v2528 = vadd.f32 0.0, %v2527
        %2529 = vmatmul.f32.gmra.mxu0 %v1246
        %v2530 = vpop.f32.mrf.mxu0
        %v2531 = vadd.f32 0.0, %v2530
        %2532 = vmatmul.f32.gmra.mxu0 %v1249
        %v2533 = vpop.f32.mrf.mxu0
        %v2534 = vadd.f32 0.0, %v2533
        %2535 = vmatmul.f32.gmra.mxu0 %v1252
        %v2536 = vpop.f32.mrf.mxu0
        %v2537 = vadd.f32 0.0, %v2536
        %2538 = vmatmul.f32.gmra.mxu0 %v1255
        %v2539 = vpop.f32.mrf.mxu0
        %v2540 = vadd.f32 0.0, %v2539
        %2541 = vmatmul.f32.gmra.mxu0 %v1258
        %v2542 = vpop.f32.mrf.mxu0
        %v2543 = vadd.f32 0.0, %v2542
        %2544 = vmatmul.f32.gmra.mxu0 %v1261
        %v2545 = vpop.f32.mrf.mxu0
        %v2546 = vadd.f32 0.0, %v2545
        %2547 = vmatmul.f32.gmra.mxu0 %v1264
        %v2548 = vpop.f32.mrf.mxu0
        %v2549 = vadd.f32 0.0, %v2548
        %2550 = vmatmul.f32.gmra.mxu0 %v1267
        %v2551 = vpop.f32.mrf.mxu0
        %v2552 = vadd.f32 0.0, %v2551
        %2553 = vmatmul.f32.gmra.mxu0 %v1270
        %v2554 = vpop.f32.mrf.mxu0
        %v2555 = vadd.f32 0.0, %v2554
        %2556 = vmatmul.f32.gmra.mxu0 %v1273
        %v2557 = vpop.f32.mrf.mxu0
        %v2558 = vadd.f32 0.0, %v2557
        %2559 = vmatmul.f32.gmra.mxu0 %v1276
        %v2560 = vpop.f32.mrf.mxu0
        %v2561 = vadd.f32 0.0, %v2560
        %2562 = vmatmul.f32.gmra.mxu0 %v1279
        %v2563 = vpop.f32.mrf.mxu0
        %v2564 = vadd.f32 0.0, %v2563
        %2565 = vmatmul.f32.gmra.mxu0 %v1282
        %v2566 = vpop.f32.mrf.mxu0
        %v2567 = vadd.f32 0.0, %v2566
        %2568 = vmatmul.f32.gmra.mxu0 %v1285
        %v2569 = vpop.f32.mrf.mxu0
        %v2570 = vadd.f32 0.0, %v2569
        %2571 = vmatmul.f32.gmra.mxu0 %v1288
        %v2572 = vpop.f32.mrf.mxu0
        %v2573 = vadd.f32 0.0, %v2572
        %2574 = vmatmul.f32.gmra.mxu0 %v1291
        %v2575 = vpop.f32.mrf.mxu0
        %v2576 = vadd.f32 0.0, %v2575
        %2577 = vmatmul.f32.gmra.mxu0 %v1294
        %v2578 = vpop.f32.mrf.mxu0
        %v2579 = vadd.f32 0.0, %v2578
        %2580 = vmatmul.f32.gmra.mxu0 %v1297
        %v2581 = vpop.f32.mrf.mxu0
        %v2582 = vadd.f32 0.0, %v2581
        %2583 = vmatmul.f32.gmra.mxu0 %v1300
        %v2584 = vpop.f32.mrf.mxu0
        %v2585 = vadd.f32 0.0, %v2584
        %2586 = vmatmul.f32.gmra.mxu0 %v1303
        %v2587 = vpop.f32.mrf.mxu0
        %v2588 = vadd.f32 0.0, %v2587
        %2589 = vmatmul.f32.gmra.mxu0 %v1306
        %v2590 = vpop.f32.mrf.mxu0
        %v2591 = vadd.f32 0.0, %v2590
        %2592 = vmatmul.f32.gmra.mxu0 %v1309
        %v2593 = vpop.f32.mrf.mxu0
        %v2594 = vadd.f32 0.0, %v2593
        %2595 = vmatmul.f32.gmra.mxu0 %v1312
        %v2596 = vpop.f32.mrf.mxu0
        %v2597 = vadd.f32 0.0, %v2596
        %2598 = vmatmul.f32.gmra.mxu0 %v1315
        %v2599 = vpop.f32.mrf.mxu0
        %v2600 = vadd.f32 0.0, %v2599
        %2601 = vmatmul.f32.gmra.mxu0 %v1318
        %v2602 = vpop.f32.mrf.mxu0
        %v2603 = vadd.f32 0.0, %v2602
        %2604 = vmatmul.f32.gmra.mxu0 %v1321
        %v2605 = vpop.f32.mrf.mxu0
        %v2606 = vadd.f32 0.0, %v2605
        %2607 = vmatmul.f32.gmra.mxu0 %v1324
        %v2608 = vpop.f32.mrf.mxu0
        %v2609 = vadd.f32 0.0, %v2608
        %2610 = vmatmul.f32.gmra.mxu0 %v1327
        %v2611 = vpop.f32.mrf.mxu0
        %v2612 = vadd.f32 0.0, %v2611
        %2613 = vmatmul.f32.gmra.mxu0 %v1330
        %v2614 = vpop.f32.mrf.mxu0
        %v2615 = vadd.f32 0.0, %v2614
        %2616 = vmatmul.f32.gmra.mxu0 %v1333
        %v2617 = vpop.f32.mrf.mxu0
        %v2618 = vadd.f32 0.0, %v2617
        %2619 = vmatmul.f32.gmra.mxu0 %v1336
        %v2620 = vpop.f32.mrf.mxu0
        %v2621 = vadd.f32 0.0, %v2620
        %2622 = vmatmul.f32.gmra.mxu0 %v1339
        %v2623 = vpop.f32.mrf.mxu0
        %v2624 = vadd.f32 0.0, %v2623
        %2625 = vmatmul.f32.gmra.mxu0 %v1342
        %v2626 = vpop.f32.mrf.mxu0
        %v2627 = vadd.f32 0.0, %v2626
        %2628 = vmatmul.f32.gmra.mxu0 %v1345
        %v2629 = vpop.f32.mrf.mxu0
        %v2630 = vadd.f32 0.0, %v2629
        %2631 = vmatmul.f32.gmra.mxu0 %v1348
        %v2632 = vpop.f32.mrf.mxu0
        %v2633 = vadd.f32 0.0, %v2632
        %2634 = vmatmul.f32.gmra.mxu0 %v1351
        %v2635 = vpop.f32.mrf.mxu0
        %v2636 = vadd.f32 0.0, %v2635
        %2637 = vmatmul.f32.gmra.mxu0 %v1354
        %v2638 = vpop.f32.mrf.mxu0
        %v2639 = vadd.f32 0.0, %v2638
        %2640 = vmatmul.f32.gmra.mxu0 %v1357
        %v2641 = vpop.f32.mrf.mxu0
        %v2642 = vadd.f32 0.0, %v2641
        %2643 = vmatmul.f32.gmra.mxu0 %v1360
        %v2644 = vpop.f32.mrf.mxu0
        %v2645 = vadd.f32 0.0, %v2644
        %2646 = vmatmul.f32.gmra.mxu0 %v1363
        %v2647 = vpop.f32.mrf.mxu0
        %v2648 = vadd.f32 0.0, %v2647
        %2649 = vmatmul.f32.gmra.mxu0 %v1366
        %v2650 = vpop.f32.mrf.mxu0
        %v2651 = vadd.f32 0.0, %v2650
        %2652 = vmatmul.f32.gmra.mxu0 %v1369
        %v2653 = vpop.f32.mrf.mxu0
        %v2654 = vadd.f32 0.0, %v2653
        %2655 = vmatmul.f32.gmra.mxu0 %v1372
        %v2656 = vpop.f32.mrf.mxu0
        %v2657 = vadd.f32 0.0, %v2656
        %2658 = vmatmul.f32.gmra.mxu0 %v1375
        %v2659 = vpop.f32.mrf.mxu0
        %v2660 = vadd.f32 0.0, %v2659
        %2661 = vmatmul.f32.gmra.mxu0 %v1378
        %v2662 = vpop.f32.mrf.mxu0
        %v2663 = vadd.f32 0.0, %v2662
        %2664 = vmatmul.f32.gmra.mxu0 %v1381
        %v2665 = vpop.f32.mrf.mxu0
        %v2666 = vadd.f32 0.0, %v2665
        %2667 = vmatmul.f32.gmra.mxu0 %v1384
        %v2668 = vpop.f32.mrf.mxu0
        %v2669 = vadd.f32 0.0, %v2668
        %2670 = vmatmul.f32.gmra.mxu0 %v1387
        %v2671 = vpop.f32.mrf.mxu0
        %v2672 = vadd.f32 0.0, %v2671
        %2673 = vmatmul.f32.gmra.mxu0 %v1390
        %v2674 = vpop.f32.mrf.mxu0
        %v2675 = vadd.f32 0.0, %v2674
        %2676 = vmatmul.f32.gmra.mxu0 %v1393
        %v2677 = vpop.f32.mrf.mxu0
        %v2678 = vadd.f32 0.0, %v2677
        %2679 = vmatmul.f32.gmra.mxu0 %v1396
        %v2680 = vpop.f32.mrf.mxu0
        %v2681 = vadd.f32 0.0, %v2680
        %2682 = vmatmul.f32.gmra.mxu0 %v1399
        %v2683 = vpop.f32.mrf.mxu0
        %v2684 = vadd.f32 0.0, %v2683
        %2685 = vmatmul.f32.gmra.mxu0 %v1402
        %v2686 = vpop.f32.mrf.mxu0
        %v2687 = vadd.f32 0.0, %v2686
        %2688 = vmatmul.f32.gmra.mxu0 %v1405
        %v2689 = vpop.f32.mrf.mxu0
        %v2690 = vadd.f32 0.0, %v2689
        %2691 = vmatmul.f32.gmra.mxu0 %v1408
        %v2692 = vpop.f32.mrf.mxu0
        %v2693 = vadd.f32 0.0, %v2692
        %2694 = vmatmul.f32.gmra.mxu0 %v1411
        %v2695 = vpop.f32.mrf.mxu0
        %v2696 = vadd.f32 0.0, %v2695
        %2697 = vmatmul.f32.gmra.mxu0 %v1414
        %v2698 = vpop.f32.mrf.mxu0
        %v2699 = vadd.f32 0.0, %v2698
        %2700 = vmatmul.f32.gmra.mxu0 %v1417
        %v2701 = vpop.f32.mrf.mxu0
        %v2702 = vadd.f32 0.0, %v2701
        %2703 = vmatmul.f32.gmra.mxu0 %v1420
        %v2704 = vpop.f32.mrf.mxu0
        %v2705 = vadd.f32 0.0, %v2704
        %2706 = vmatmul.f32.gmra.mxu0 %v1423
        %v2707 = vpop.f32.mrf.mxu0
        %v2708 = vadd.f32 0.0, %v2707
        %2709 = vmatmul.f32.gmra.mxu0 %v1426
        %v2710 = vpop.f32.mrf.mxu0
        %v2711 = vadd.f32 0.0, %v2710
        %2712 = vmatmul.f32.gmra.mxu0 %v1429
        %v2713 = vpop.f32.mrf.mxu0
        %v2714 = vadd.f32 0.0, %v2713
        %2715 = vmatmul.f32.gmra.mxu0 %v1432
        %v2716 = vpop.f32.mrf.mxu0
        %v2717 = vadd.f32 0.0, %v2716
        %2718 = vmatmul.f32.gmra.mxu0 %v1435
        %v2719 = vpop.f32.mrf.mxu0
        %v2720 = vadd.f32 0.0, %v2719
        %2721 = vmatmul.f32.gmra.mxu0 %v1438
        %v2722 = vpop.f32.mrf.mxu0
        %v2723 = vadd.f32 0.0, %v2722
        %2724 = vmatmul.f32.gmra.mxu0 %v1441
        %v2725 = vpop.f32.mrf.mxu0
        %v2726 = vadd.f32 0.0, %v2725
        %2727 = vmatmul.f32.gmra.mxu0 %v1444
        %v2728 = vpop.f32.mrf.mxu0
        %v2729 = vadd.f32 0.0, %v2728
        %2730 = vmatmul.f32.gmra.mxu0 %v1447
        %v2731 = vpop.f32.mrf.mxu0
        %v2732 = vadd.f32 0.0, %v2731
        %2733 = vmatmul.f32.gmra.mxu0 %v1450
        %v2734 = vpop.f32.mrf.mxu0
        %v2735 = vadd.f32 0.0, %v2734
        %2736 = vmatmul.f32.gmra.mxu0 %v1453
        %v2737 = vpop.f32.mrf.mxu0
        %v2738 = vadd.f32 0.0, %v2737
        %2739 = vdwg.mxu0
        %v2740 = vadd.f32 %v654, %v1473
        %v2741 = vadd.f32 %v655, %v1730
        %v2742 = vadd.f32 %v656, %v1987
        %v2743 = vadd.f32 %v657, %v2244
        %v2744 = vadd.f32 %v658, %v2501
        %v2745 = vadd.f32 %v659, %v1476
        %v2746 = vadd.f32 %v660, %v1733
        %v2747 = vadd.f32 %v661, %v1990
        %v2748 = vadd.f32 %v662, %v2247
        %v2749 = vadd.f32 %v663, %v2504
        %v2750 = vadd.f32 %v664, %v1479
        %v2751 = vadd.f32 %v665, %v1736
        %v2752 = vadd.f32 %v666, %v1993
        %v2753 = vadd.f32 %v667, %v2250
        %v2754 = vadd.f32 %v668, %v2507
        %v2755 = vadd.f32 %v669, %v1482
        %v2756 = vadd.f32 %v670, %v1739
        %v2757 = vadd.f32 %v671, %v1996
        %v2758 = vadd.f32 %v672, %v2253
        %v2759 = vadd.f32 %v673, %v2510
        %v2760 = vadd.f32 %v674, %v1485
        %v2761 = vadd.f32 %v675, %v1742
        %v2762 = vadd.f32 %v676, %v1999
        %v2763 = vadd.f32 %v677, %v2256
        %v2764 = vadd.f32 %v678, %v2513
        %v2765 = vadd.f32 %v679, %v1488
        %v2766 = vadd.f32 %v680, %v1745
        %v2767 = vadd.f32 %v681, %v2002
        %v2768 = vadd.f32 %v682, %v2259
        %v2769 = vadd.f32 %v683, %v2516
        %v2770 = vadd.f32 %v684, %v1491
        %v2771 = vadd.f32 %v685, %v1748
        %v2772 = vadd.f32 %v686, %v2005
        %v2773 = vadd.f32 %v687, %v2262
        %v2774 = vadd.f32 %v688, %v2519
        %v2775 = vadd.f32 %v689, %v1494
        %v2776 = vadd.f32 %v690, %v1751
        %v2777 = vadd.f32 %v691, %v2008
        %v2778 = vadd.f32 %v692, %v2265
        %v2779 = vadd.f32 %v693, %v2522
        %v2780 = vadd.f32 %v694, %v1497
        %v2781 = vadd.f32 %v695, %v1754
        %v2782 = vadd.f32 %v696, %v2011
        %v2783 = vadd.f32 %v697, %v2268
        %v2784 = vadd.f32 %v698, %v2525
        %v2785 = vadd.f32 %v699, %v1500
        %v2786 = vadd.f32 %v700, %v1757
        %v2787 = vadd.f32 %v701, %v2014
        %v2788 = vadd.f32 %v702, %v2271
        %v2789 = vadd.f32 %v703, %v2528
        %v2790 = vadd.f32 %v704, %v1503
        %v2791 = vadd.f32 %v705, %v1760
        %v2792 = vadd.f32 %v706, %v2017
        %v2793 = vadd.f32 %v707, %v2274
        %v2794 = vadd.f32 %v708, %v2531
        %v2795 = vadd.f32 %v709, %v1506
        %v2796 = vadd.f32 %v710, %v1763
        %v2797 = vadd.f32 %v711, %v2020
        %v2798 = vadd.f32 %v712, %v2277
        %v2799 = vadd.f32 %v713, %v2534
        %v2800 = vadd.f32 %v714, %v1509
        %v2801 = vadd.f32 %v715, %v1766
        %v2802 = vadd.f32 %v716, %v2023
        %v2803 = vadd.f32 %v717, %v2280
        %v2804 = vadd.f32 %v718, %v2537
        %v2805 = vadd.f32 %v719, %v1512
        %v2806 = vadd.f32 %v720, %v1769
        %v2807 = vadd.f32 %v721, %v2026
        %v2808 = vadd.f32 %v722, %v2283
        %v2809 = vadd.f32 %v723, %v2540
        %v2810 = vadd.f32 %v724, %v1515
        %v2811 = vadd.f32 %v725, %v1772
        %v2812 = vadd.f32 %v726, %v2029
        %v2813 = vadd.f32 %v727, %v2286
        %v2814 = vadd.f32 %v728, %v2543
        %v2815 = vadd.f32 %v729, %v1518
        %v2816 = vadd.f32 %v730, %v1775
        %v2817 = vadd.f32 %v731, %v2032
        %v2818 = vadd.f32 %v732, %v2289
        %v2819 = vadd.f32 %v733, %v2546
        %v2820 = vadd.f32 %v734, %v1521
        %v2821 = vadd.f32 %v735, %v1778
        %v2822 = vadd.f32 %v736, %v2035
        %v2823 = vadd.f32 %v737, %v2292
        %v2824 = vadd.f32 %v738, %v2549
        %v2825 = vadd.f32 %v739, %v1524
        %v2826 = vadd.f32 %v740, %v1781
        %v2827 = vadd.f32 %v741, %v2038
        %v2828 = vadd.f32 %v742, %v2295
        %v2829 = vadd.f32 %v743, %v2552
        %v2830 = vadd.f32 %v744, %v1527
        %v2831 = vadd.f32 %v745, %v1784
        %v2832 = vadd.f32 %v746, %v2041
        %v2833 = vadd.f32 %v747, %v2298
        %v2834 = vadd.f32 %v748, %v2555
        %v2835 = vadd.f32 %v749, %v1530
        %v2836 = vadd.f32 %v750, %v1787
        %v2837 = vadd.f32 %v751, %v2044
        %v2838 = vadd.f32 %v752, %v2301
        %v2839 = vadd.f32 %v753, %v2558
        %v2840 = vadd.f32 %v754, %v1533
        %v2841 = vadd.f32 %v755, %v1790
        %v2842 = vadd.f32 %v756, %v2047
        %v2843 = vadd.f32 %v757, %v2304
        %v2844 = vadd.f32 %v758, %v2561
        %v2845 = vadd.f32 %v759, %v1536
        %v2846 = vadd.f32 %v760, %v1793
        %v2847 = vadd.f32 %v761, %v2050
        %v2848 = vadd.f32 %v762, %v2307
        %v2849 = vadd.f32 %v763, %v2564
        %v2850 = vadd.f32 %v764, %v1539
        %v2851 = vadd.f32 %v765, %v1796
        %v2852 = vadd.f32 %v766, %v2053
        %v2853 = vadd.f32 %v767, %v2310
        %v2854 = vadd.f32 %v768, %v2567
        %v2855 = vadd.f32 %v769, %v1542
        %v2856 = vadd.f32 %v770, %v1799
        %v2857 = vadd.f32 %v771, %v2056
        %v2858 = vadd.f32 %v772, %v2313
        %v2859 = vadd.f32 %v773, %v2570
        %v2860 = vadd.f32 %v774, %v1545
        %v2861 = vadd.f32 %v775, %v1802
        %v2862 = vadd.f32 %v776, %v2059
        %v2863 = vadd.f32 %v777, %v2316
        %v2864 = vadd.f32 %v778, %v2573
        %v2865 = vadd.f32 %v779, %v1548
        %v2866 = vadd.f32 %v780, %v1805
        %v2867 = vadd.f32 %v781, %v2062
        %v2868 = vadd.f32 %v782, %v2319
        %v2869 = vadd.f32 %v783, %v2576
        %v2870 = vadd.f32 %v784, %v1551
        %v2871 = vadd.f32 %v785, %v1808
        %v2872 = vadd.f32 %v786, %v2065
        %v2873 = vadd.f32 %v787, %v2322
        %v2874 = vadd.f32 %v788, %v2579
        %v2875 = vadd.f32 %v789, %v1554
        %v2876 = vadd.f32 %v790, %v1811
        %v2877 = vadd.f32 %v791, %v2068
        %v2878 = vadd.f32 %v792, %v2325
        %v2879 = vadd.f32 %v793, %v2582
        %v2880 = vadd.f32 %v794, %v1557
        %v2881 = vadd.f32 %v795, %v1814
        %v2882 = vadd.f32 %v796, %v2071
        %v2883 = vadd.f32 %v797, %v2328
        %v2884 = vadd.f32 %v798, %v2585
        %v2885 = vadd.f32 %v799, %v1560
        %v2886 = vadd.f32 %v800, %v1817
        %v2887 = vadd.f32 %v801, %v2074
        %v2888 = vadd.f32 %v802, %v2331
        %v2889 = vadd.f32 %v803, %v2588
        %v2890 = vadd.f32 %v804, %v1563
        %v2891 = vadd.f32 %v805, %v1820
        %v2892 = vadd.f32 %v806, %v2077
        %v2893 = vadd.f32 %v807, %v2334
        %v2894 = vadd.f32 %v808, %v2591
        %v2895 = vadd.f32 %v809, %v1566
        %v2896 = vadd.f32 %v810, %v1823
        %v2897 = vadd.f32 %v811, %v2080
        %v2898 = vadd.f32 %v812, %v2337
        %v2899 = vadd.f32 %v813, %v2594
        %v2900 = vadd.f32 %v814, %v1569
        %v2901 = vadd.f32 %v815, %v1826
        %v2902 = vadd.f32 %v816, %v2083
        %v2903 = vadd.f32 %v817, %v2340
        %v2904 = vadd.f32 %v818, %v2597
        %v2905 = vadd.f32 %v819, %v1572
        %v2906 = vadd.f32 %v820, %v1829
        %v2907 = vadd.f32 %v821, %v2086
        %v2908 = vadd.f32 %v822, %v2343
        %v2909 = vadd.f32 %v823, %v2600
        %v2910 = vadd.f32 %v824, %v1575
        %v2911 = vadd.f32 %v825, %v1832
        %v2912 = vadd.f32 %v826, %v2089
        %v2913 = vadd.f32 %v827, %v2346
        %v2914 = vadd.f32 %v828, %v2603
        %v2915 = vadd.f32 %v829, %v1578
        %v2916 = vadd.f32 %v830, %v1835
        %v2917 = vadd.f32 %v831, %v2092
        %v2918 = vadd.f32 %v832, %v2349
        %v2919 = vadd.f32 %v833, %v2606
        %v2920 = vadd.f32 %v834, %v1581
        %v2921 = vadd.f32 %v835, %v1838
        %v2922 = vadd.f32 %v836, %v2095
        %v2923 = vadd.f32 %v837, %v2352
        %v2924 = vadd.f32 %v838, %v2609
        %v2925 = vadd.f32 %v839, %v1584
        %v2926 = vadd.f32 %v840, %v1841
        %v2927 = vadd.f32 %v841, %v2098
        %v2928 = vadd.f32 %v842, %v2355
        %v2929 = vadd.f32 %v843, %v2612
        %v2930 = vadd.f32 %v844, %v1587
        %v2931 = vadd.f32 %v845, %v1844
        %v2932 = vadd.f32 %v846, %v2101
        %v2933 = vadd.f32 %v847, %v2358
        %v2934 = vadd.f32 %v848, %v2615
        %v2935 = vadd.f32 %v849, %v1590
        %v2936 = vadd.f32 %v850, %v1847
        %v2937 = vadd.f32 %v851, %v2104
        %v2938 = vadd.f32 %v852, %v2361
        %v2939 = vadd.f32 %v853, %v2618
        %v2940 = vadd.f32 %v854, %v1593
        %v2941 = vadd.f32 %v855, %v1850
        %v2942 = vadd.f32 %v856, %v2107
        %v2943 = vadd.f32 %v857, %v2364
        %v2944 = vadd.f32 %v858, %v2621
        %v2945 = vadd.f32 %v859, %v1596
        %v2946 = vadd.f32 %v860, %v1853
        %v2947 = vadd.f32 %v861, %v2110
        %v2948 = vadd.f32 %v862, %v2367
        %v2949 = vadd.f32 %v863, %v2624
        %v2950 = vadd.f32 %v864, %v1599
        %v2951 = vadd.f32 %v865, %v1856
        %v2952 = vadd.f32 %v866, %v2113
        %v2953 = vadd.f32 %v867, %v2370
        %v2954 = vadd.f32 %v868, %v2627
        %v2955 = vadd.f32 %v869, %v1602
        %v2956 = vadd.f32 %v870, %v1859
        %v2957 = vadd.f32 %v871, %v2116
        %v2958 = vadd.f32 %v872, %v2373
        %v2959 = vadd.f32 %v873, %v2630
        %v2960 = vadd.f32 %v874, %v1605
        %v2961 = vadd.f32 %v875, %v1862
        %v2962 = vadd.f32 %v876, %v2119
        %v2963 = vadd.f32 %v877, %v2376
        %v2964 = vadd.f32 %v878, %v2633
        %v2965 = vadd.f32 %v879, %v1608
        %v2966 = vadd.f32 %v880, %v1865
        %v2967 = vadd.f32 %v881, %v2122
        %v2968 = vadd.f32 %v882, %v2379
        %v2969 = vadd.f32 %v883, %v2636
        %v2970 = vadd.f32 %v884, %v1611
        %v2971 = vadd.f32 %v885, %v1868
        %v2972 = vadd.f32 %v886, %v2125
        %v2973 = vadd.f32 %v887, %v2382
        %v2974 = vadd.f32 %v888, %v2639
        %v2975 = vadd.f32 %v889, %v1614
        %v2976 = vadd.f32 %v890, %v1871
        %v2977 = vadd.f32 %v891, %v2128
        %v2978 = vadd.f32 %v892, %v2385
        %v2979 = vadd.f32 %v893, %v2642
        %v2980 = vadd.f32 %v894, %v1617
        %v2981 = vadd.f32 %v895, %v1874
        %v2982 = vadd.f32 %v896, %v2131
        %v2983 = vadd.f32 %v897, %v2388
        %v2984 = vadd.f32 %v898, %v2645
        %v2985 = vadd.f32 %v899, %v1620
        %v2986 = vadd.f32 %v900, %v1877
        %v2987 = vadd.f32 %v901, %v2134
        %v2988 = vadd.f32 %v902, %v2391
        %v2989 = vadd.f32 %v903, %v2648
        %v2990 = vadd.f32 %v904, %v1623
        %v2991 = vadd.f32 %v905, %v1880
        %v2992 = vadd.f32 %v906, %v2137
        %v2993 = vadd.f32 %v907, %v2394
        %v2994 = vadd.f32 %v908, %v2651
        %v2995 = vadd.f32 %v909, %v1626
        %v2996 = vadd.f32 %v910, %v1883
        %v2997 = vadd.f32 %v911, %v2140
        %v2998 = vadd.f32 %v912, %v2397
        %v2999 = vadd.f32 %v913, %v2654
        %v3000 = vadd.f32 %v914, %v1629
        %v3001 = vadd.f32 %v915, %v1886
        %v3002 = vadd.f32 %v916, %v2143
        %v3003 = vadd.f32 %v917, %v2400
        %v3004 = vadd.f32 %v918, %v2657
        %v3005 = vadd.f32 %v919, %v1632
        %v3006 = vadd.f32 %v920, %v1889
        %v3007 = vadd.f32 %v921, %v2146
        %v3008 = vadd.f32 %v922, %v2403
        %v3009 = vadd.f32 %v923, %v2660
        %v3010 = vadd.f32 %v924, %v1635
        %v3011 = vadd.f32 %v925, %v1892
        %v3012 = vadd.f32 %v926, %v2149
        %v3013 = vadd.f32 %v927, %v2406
        %v3014 = vadd.f32 %v928, %v2663
        %v3015 = vadd.f32 %v929, %v1638
        %v3016 = vadd.f32 %v930, %v1895
        %v3017 = vadd.f32 %v931, %v2152
        %v3018 = vadd.f32 %v932, %v2409
        %v3019 = vadd.f32 %v933, %v2666
        %v3020 = vadd.f32 %v934, %v1641
        %v3021 = vadd.f32 %v935, %v1898
        %v3022 = vadd.f32 %v936, %v2155
        %v3023 = vadd.f32 %v937, %v2412
        %v3024 = vadd.f32 %v938, %v2669
        %v3025 = vadd.f32 %v939, %v1644
        %v3026 = vadd.f32 %v940, %v1901
        %v3027 = vadd.f32 %v941, %v2158
        %v3028 = vadd.f32 %v942, %v2415
        %v3029 = vadd.f32 %v943, %v2672
        %v3030 = vadd.f32 %v944, %v1647
        %v3031 = vadd.f32 %v945, %v1904
        %v3032 = vadd.f32 %v946, %v2161
        %v3033 = vadd.f32 %v947, %v2418
        %v3034 = vadd.f32 %v948, %v2675
        %v3035 = vadd.f32 %v949, %v1650
        %v3036 = vadd.f32 %v950, %v1907
        %v3037 = vadd.f32 %v951, %v2164
        %v3038 = vadd.f32 %v952, %v2421
        %v3039 = vadd.f32 %v953, %v2678
        %v3040 = vadd.f32 %v954, %v1653
        %v3041 = vadd.f32 %v955, %v1910
        %v3042 = vadd.f32 %v956, %v2167
        %v3043 = vadd.f32 %v957, %v2424
        %v3044 = vadd.f32 %v958, %v2681
        %v3045 = vadd.f32 %v959, %v1656
        %v3046 = vadd.f32 %v960, %v1913
        %v3047 = vadd.f32 %v961, %v2170
        %v3048 = vadd.f32 %v962, %v2427
        %v3049 = vadd.f32 %v963, %v2684
        %v3050 = vadd.f32 %v964, %v1659
        %v3051 = vadd.f32 %v965, %v1916
        %v3052 = vadd.f32 %v966, %v2173
        %v3053 = vadd.f32 %v967, %v2430
        %v3054 = vadd.f32 %v968, %v2687
        %v3055 = vadd.f32 %v969, %v1662
        %v3056 = vadd.f32 %v970, %v1919
        %v3057 = vadd.f32 %v971, %v2176
        %v3058 = vadd.f32 %v972, %v2433
        %v3059 = vadd.f32 %v973, %v2690
        %v3060 = vadd.f32 %v974, %v1665
        %v3061 = vadd.f32 %v975, %v1922
        %v3062 = vadd.f32 %v976, %v2179
        %v3063 = vadd.f32 %v977, %v2436
        %v3064 = vadd.f32 %v978, %v2693
        %v3065 = vadd.f32 %v979, %v1668
        %v3066 = vadd.f32 %v980, %v1925
        %v3067 = vadd.f32 %v981, %v2182
        %v3068 = vadd.f32 %v982, %v2439
        %v3069 = vadd.f32 %v983, %v2696
        %v3070 = vadd.f32 %v984, %v1671
        %v3071 = vadd.f32 %v985, %v1928
        %v3072 = vadd.f32 %v986, %v2185
        %v3073 = vadd.f32 %v987, %v2442
        %v3074 = vadd.f32 %v988, %v2699
        %v3075 = vadd.f32 %v989, %v1674
        %v3076 = vadd.f32 %v990, %v1931
        %v3077 = vadd.f32 %v991, %v2188
        %v3078 = vadd.f32 %v992, %v2445
        %v3079 = vadd.f32 %v993, %v2702
        %v3080 = vadd.f32 %v994, %v1677
        %v3081 = vadd.f32 %v995, %v1934
        %v3082 = vadd.f32 %v996, %v2191
        %v3083 = vadd.f32 %v997, %v2448
        %v3084 = vadd.f32 %v998, %v2705
        %v3085 = vadd.f32 %v999, %v1680
        %v3086 = vadd.f32 %v1000, %v1937
        %v3087 = vadd.f32 %v1001, %v2194
        %v3088 = vadd.f32 %v1002, %v2451
        %v3089 = vadd.f32 %v1003, %v2708
        %v3090 = vadd.f32 %v1004, %v1683
        %v3091 = vadd.f32 %v1005, %v1940
        %v3092 = vadd.f32 %v1006, %v2197
        %v3093 = vadd.f32 %v1007, %v2454
        %v3094 = vadd.f32 %v1008, %v2711
        %v3095 = vadd.f32 %v1009, %v1686
        %v3096 = vadd.f32 %v1010, %v1943
        %v3097 = vadd.f32 %v1011, %v2200
        %v3098 = vadd.f32 %v1012, %v2457
        %v3099 = vadd.f32 %v1013, %v2714
        %v3100 = vadd.f32 %v1014, %v1689
        %v3101 = vadd.f32 %v1015, %v1946
        %v3102 = vadd.f32 %v1016, %v2203
        %v3103 = vadd.f32 %v1017, %v2460
        %v3104 = vadd.f32 %v1018, %v2717
        %v3105 = vadd.f32 %v1019, %v1692
        %v3106 = vadd.f32 %v1020, %v1949
        %v3107 = vadd.f32 %v1021, %v2206
        %v3108 = vadd.f32 %v1022, %v2463
        %v3109 = vadd.f32 %v1023, %v2720
        %v3110 = vadd.f32 %v1024, %v1695
        %v3111 = vadd.f32 %v1025, %v1952
        %v3112 = vadd.f32 %v1026, %v2209
        %v3113 = vadd.f32 %v1027, %v2466
        %v3114 = vadd.f32 %v1028, %v2723
        %v3115 = vadd.f32 %v1029, %v1698
        %v3116 = vadd.f32 %v1030, %v1955
        %v3117 = vadd.f32 %v1031, %v2212
        %v3118 = vadd.f32 %v1032, %v2469
        %v3119 = vadd.f32 %v1033, %v2726
        %v3120 = vadd.f32 %v1034, %v1701
        %v3121 = vadd.f32 %v1035, %v1958
        %v3122 = vadd.f32 %v1036, %v2215
        %v3123 = vadd.f32 %v1037, %v2472
        %v3124 = vadd.f32 %v1038, %v2729
        %v3125 = vadd.f32 %v1039, %v1704
        %v3126 = vadd.f32 %v1040, %v1961
        %v3127 = vadd.f32 %v1041, %v2218
        %v3128 = vadd.f32 %v1042, %v2475
        %v3129 = vadd.f32 %v1043, %v2732
        %v3130 = vadd.f32 %v1044, %v1707
        %v3131 = vadd.f32 %v1045, %v1964
        %v3132 = vadd.f32 %v1046, %v2221
        %v3133 = vadd.f32 %v1047, %v2478
        %v3134 = vadd.f32 %v1048, %v2735
        %v3135 = vadd.f32 %v1049, %v1710
        %v3136 = vadd.f32 %v1050, %v1967
        %v3137 = vadd.f32 %v1051, %v2224
        %v3138 = vadd.f32 %v1052, %v2481
        %v3139 = vadd.f32 %v1053, %v2738
        %3140 = vst [vmem:[%s225] sm:$0xff] %v2740
        %3141 = vst [vmem:[%s225 + $0x8] sm:$0xff] %v2741
        %3142 = vst [vmem:[%s225 + $0x10] sm:$0xff] %v2742
        %3143 = vst [vmem:[%s225 + $0x18] sm:$0xff] %v2743
        %3144 = vst [vmem:[%s225 + $0x20] sm:$0xff] %v2744
        %3145 = vst [vmem:[%s225 + $0x28] sm:$0xff] %v2745
        %3146 = vst [vmem:[%s225 + $0x30] sm:$0xff] %v2746
        %3147 = vst [vmem:[%s225 + $0x38] sm:$0xff] %v2747
        %3148 = vst [vmem:[%s225 + $0x40] sm:$0xff] %v2748
        %3149 = vst [vmem:[%s225 + $0x48] sm:$0xff] %v2749
        %3150 = vst [vmem:[%s225 + $0x50] sm:$0xff] %v2750
        %3151 = vst [vmem:[%s225 + $0x58] sm:$0xff] %v2751
        %3152 = vst [vmem:[%s225 + $0x60] sm:$0xff] %v2752
        %3153 = vst [vmem:[%s225 + $0x68] sm:$0xff] %v2753
        %3154 = vst [vmem:[%s225 + $0x70] sm:$0xff] %v2754
        %3155 = vst [vmem:[%s225 + $0x78] sm:$0xff] %v2755
        %3156 = vst [vmem:[%s225 + $0x80] sm:$0xff] %v2756
        %3157 = vst [vmem:[%s225 + $0x88] sm:$0xff] %v2757
        %3158 = vst [vmem:[%s225 + $0x90] sm:$0xff] %v2758
        %3159 = vst [vmem:[%s225 + $0x98] sm:$0xff] %v2759
        %3160 = vst [vmem:[%s225 + $0xa0] sm:$0xff] %v2760
        %3161 = vst [vmem:[%s225 + $0xa8] sm:$0xff] %v2761
        %3162 = vst [vmem:[%s225 + $0xb0] sm:$0xff] %v2762
        %3163 = vst [vmem:[%s225 + $0xb8] sm:$0xff] %v2763
        %3164 = vst [vmem:[%s225 + $0xc0] sm:$0xff] %v2764
        %3165 = vst [vmem:[%s225 + $0xc8] sm:$0xff] %v2765
        %3166 = vst [vmem:[%s225 + $0xd0] sm:$0xff] %v2766
        %3167 = vst [vmem:[%s225 + $0xd8] sm:$0xff] %v2767
        %3168 = vst [vmem:[%s225 + $0xe0] sm:$0xff] %v2768
        %3169 = vst [vmem:[%s225 + $0xe8] sm:$0xff] %v2769
        %3170 = vst [vmem:[%s225 + $0xf0] sm:$0xff] %v2770
        %3171 = vst [vmem:[%s225 + $0xf8] sm:$0xff] %v2771
        %3172 = vst [vmem:[%s225 + $0x100] sm:$0xff] %v2772
        %3173 = vst [vmem:[%s225 + $0x108] sm:$0xff] %v2773
        %3174 = vst [vmem:[%s225 + $0x110] sm:$0xff] %v2774
        %3175 = vst [vmem:[%s225 + $0x118] sm:$0xff] %v2775
        %3176 = vst [vmem:[%s225 + $0x120] sm:$0xff] %v2776
        %3177 = vst [vmem:[%s225 + $0x128] sm:$0xff] %v2777
        %3178 = vst [vmem:[%s225 + $0x130] sm:$0xff] %v2778
        %3179 = vst [vmem:[%s225 + $0x138] sm:$0xff] %v2779
        %3180 = vst [vmem:[%s225 + $0x140] sm:$0xff] %v2780
        %3181 = vst [vmem:[%s225 + $0x148] sm:$0xff] %v2781
        %3182 = vst [vmem:[%s225 + $0x150] sm:$0xff] %v2782
        %3183 = vst [vmem:[%s225 + $0x158] sm:$0xff] %v2783
        %3184 = vst [vmem:[%s225 + $0x160] sm:$0xff] %v2784
        %3185 = vst [vmem:[%s225 + $0x168] sm:$0xff] %v2785
        %3186 = vst [vmem:[%s225 + $0x170] sm:$0xff] %v2786
        %3187 = vst [vmem:[%s225 + $0x178] sm:$0xff] %v2787
        %3188 = vst [vmem:[%s225 + $0x180] sm:$0xff] %v2788
        %3189 = vst [vmem:[%s225 + $0x188] sm:$0xff] %v2789
        %3190 = vst [vmem:[%s225 + $0x190] sm:$0xff] %v2790
        %3191 = vst [vmem:[%s225 + $0x198] sm:$0xff] %v2791
        %3192 = vst [vmem:[%s225 + $0x1a0] sm:$0xff] %v2792
        %3193 = vst [vmem:[%s225 + $0x1a8] sm:$0xff] %v2793
        %3194 = vst [vmem:[%s225 + $0x1b0] sm:$0xff] %v2794
        %3195 = vst [vmem:[%s225 + $0x1b8] sm:$0xff] %v2795
        %3196 = vst [vmem:[%s225 + $0x1c0] sm:$0xff] %v2796
        %3197 = vst [vmem:[%s225 + $0x1c8] sm:$0xff] %v2797
        %3198 = vst [vmem:[%s225 + $0x1d0] sm:$0xff] %v2798
        %3199 = vst [vmem:[%s225 + $0x1d8] sm:$0xff] %v2799
        %3200 = vst [vmem:[%s225 + $0x1e0] sm:$0xff] %v2800
        %3201 = vst [vmem:[%s225 + $0x1e8] sm:$0xff] %v2801
        %3202 = vst [vmem:[%s225 + $0x1f0] sm:$0xff] %v2802
        %3203 = vst [vmem:[%s225 + $0x1f8] sm:$0xff] %v2803
        %3204 = vst [vmem:[%s225 + $0x200] sm:$0xff] %v2804
        %3205 = vst [vmem:[%s225 + $0x208] sm:$0xff] %v2805
        %3206 = vst [vmem:[%s225 + $0x210] sm:$0xff] %v2806
        %3207 = vst [vmem:[%s225 + $0x218] sm:$0xff] %v2807
        %3208 = vst [vmem:[%s225 + $0x220] sm:$0xff] %v2808
        %3209 = vst [vmem:[%s225 + $0x228] sm:$0xff] %v2809
        %3210 = vst [vmem:[%s225 + $0x230] sm:$0xff] %v2810
        %3211 = vst [vmem:[%s225 + $0x238] sm:$0xff] %v2811
        %3212 = vst [vmem:[%s225 + $0x240] sm:$0xff] %v2812
        %3213 = vst [vmem:[%s225 + $0x248] sm:$0xff] %v2813
        %3214 = vst [vmem:[%s225 + $0x250] sm:$0xff] %v2814
        %3215 = vst [vmem:[%s225 + $0x258] sm:$0xff] %v2815
        %3216 = vst [vmem:[%s225 + $0x260] sm:$0xff] %v2816
        %3217 = vst [vmem:[%s225 + $0x268] sm:$0xff] %v2817
        %3218 = vst [vmem:[%s225 + $0x270] sm:$0xff] %v2818
        %3219 = vst [vmem:[%s225 + $0x278] sm:$0xff] %v2819
        %3220 = vst [vmem:[%s225 + $0x280] sm:$0xff] %v2820
        %3221 = vst [vmem:[%s225 + $0x288] sm:$0xff] %v2821
        %3222 = vst [vmem:[%s225 + $0x290] sm:$0xff] %v2822
        %3223 = vst [vmem:[%s225 + $0x298] sm:$0xff] %v2823
        %3224 = vst [vmem:[%s225 + $0x2a0] sm:$0xff] %v2824
        %3225 = vst [vmem:[%s225 + $0x2a8] sm:$0xff] %v2825
        %3226 = vst [vmem:[%s225 + $0x2b0] sm:$0xff] %v2826
        %3227 = vst [vmem:[%s225 + $0x2b8] sm:$0xff] %v2827
        %3228 = vst [vmem:[%s225 + $0x2c0] sm:$0xff] %v2828
        %3229 = vst [vmem:[%s225 + $0x2c8] sm:$0xff] %v2829
        %3230 = vst [vmem:[%s225 + $0x2d0] sm:$0xff] %v2830
        %3231 = vst [vmem:[%s225 + $0x2d8] sm:$0xff] %v2831
        %3232 = vst [vmem:[%s225 + $0x2e0] sm:$0xff] %v2832
        %3233 = vst [vmem:[%s225 + $0x2e8] sm:$0xff] %v2833
        %3234 = vst [vmem:[%s225 + $0x2f0] sm:$0xff] %v2834
        %3235 = vst [vmem:[%s225 + $0x2f8] sm:$0xff] %v2835
        %3236 = vst [vmem:[%s225 + $0x300] sm:$0xff] %v2836
        %3237 = vst [vmem:[%s225 + $0x308] sm:$0xff] %v2837
        %3238 = vst [vmem:[%s225 + $0x310] sm:$0xff] %v2838
        %3239 = vst [vmem:[%s225 + $0x318] sm:$0xff] %v2839
        %3240 = vst [vmem:[%s225 + $0x320] sm:$0xff] %v2840
        %3241 = vst [vmem:[%s225 + $0x328] sm:$0xff] %v2841
        %3242 = vst [vmem:[%s225 + $0x330] sm:$0xff] %v2842
        %3243 = vst [vmem:[%s225 + $0x338] sm:$0xff] %v2843
        %3244 = vst [vmem:[%s225 + $0x340] sm:$0xff] %v2844
        %3245 = vst [vmem:[%s225 + $0x348] sm:$0xff] %v2845
        %3246 = vst [vmem:[%s225 + $0x350] sm:$0xff] %v2846
        %3247 = vst [vmem:[%s225 + $0x358] sm:$0xff] %v2847
        %3248 = vst [vmem:[%s225 + $0x360] sm:$0xff] %v2848
        %3249 = vst [vmem:[%s225 + $0x368] sm:$0xff] %v2849
        %3250 = vst [vmem:[%s225 + $0x370] sm:$0xff] %v2850
        %3251 = vst [vmem:[%s225 + $0x378] sm:$0xff] %v2851
        %3252 = vst [vmem:[%s225 + $0x380] sm:$0xff] %v2852
        %3253 = vst [vmem:[%s225 + $0x388] sm:$0xff] %v2853
        %3254 = vst [vmem:[%s225 + $0x390] sm:$0xff] %v2854
        %3255 = vst [vmem:[%s225 + $0x398] sm:$0xff] %v2855
        %3256 = vst [vmem:[%s225 + $0x3a0] sm:$0xff] %v2856
        %3257 = vst [vmem:[%s225 + $0x3a8] sm:$0xff] %v2857
        %3258 = vst [vmem:[%s225 + $0x3b0] sm:$0xff] %v2858
        %3259 = vst [vmem:[%s225 + $0x3b8] sm:$0xff] %v2859
        %3260 = vst [vmem:[%s225 + $0x3c0] sm:$0xff] %v2860
        %3261 = vst [vmem:[%s225 + $0x3c8] sm:$0xff] %v2861
        %3262 = vst [vmem:[%s225 + $0x3d0] sm:$0xff] %v2862
        %3263 = vst [vmem:[%s225 + $0x3d8] sm:$0xff] %v2863
        %3264 = vst [vmem:[%s225 + $0x3e0] sm:$0xff] %v2864
        %3265 = vst [vmem:[%s225 + $0x3e8] sm:$0xff] %v2865
        %3266 = vst [vmem:[%s225 + $0x3f0] sm:$0xff] %v2866
        %3267 = vst [vmem:[%s225 + $0x3f8] sm:$0xff] %v2867
        %3268 = vst [vmem:[%s225 + $0x400] sm:$0xff] %v2868
        %3269 = vst [vmem:[%s225 + $0x408] sm:$0xff] %v2869
        %3270 = vst [vmem:[%s225 + $0x410] sm:$0xff] %v2870
        %3271 = vst [vmem:[%s225 + $0x418] sm:$0xff] %v2871
        %3272 = vst [vmem:[%s225 + $0x420] sm:$0xff] %v2872
        %3273 = vst [vmem:[%s225 + $0x428] sm:$0xff] %v2873
        %3274 = vst [vmem:[%s225 + $0x430] sm:$0xff] %v2874
        %3275 = vst [vmem:[%s225 + $0x438] sm:$0xff] %v2875
        %3276 = vst [vmem:[%s225 + $0x440] sm:$0xff] %v2876
        %3277 = vst [vmem:[%s225 + $0x448] sm:$0xff] %v2877
        %3278 = vst [vmem:[%s225 + $0x450] sm:$0xff] %v2878
        %3279 = vst [vmem:[%s225 + $0x458] sm:$0xff] %v2879
        %3280 = vst [vmem:[%s225 + $0x460] sm:$0xff] %v2880
        %3281 = vst [vmem:[%s225 + $0x468] sm:$0xff] %v2881
        %3282 = vst [vmem:[%s225 + $0x470] sm:$0xff] %v2882
        %3283 = vst [vmem:[%s225 + $0x478] sm:$0xff] %v2883
        %3284 = vst [vmem:[%s225 + $0x480] sm:$0xff] %v2884
        %3285 = vst [vmem:[%s225 + $0x488] sm:$0xff] %v2885
        %3286 = vst [vmem:[%s225 + $0x490] sm:$0xff] %v2886
        %3287 = vst [vmem:[%s225 + $0x498] sm:$0xff] %v2887
        %3288 = vst [vmem:[%s225 + $0x4a0] sm:$0xff] %v2888
        %3289 = vst [vmem:[%s225 + $0x4a8] sm:$0xff] %v2889
        %3290 = vst [vmem:[%s225 + $0x4b0] sm:$0xff] %v2890
        %3291 = vst [vmem:[%s225 + $0x4b8] sm:$0xff] %v2891
        %3292 = vst [vmem:[%s225 + $0x4c0] sm:$0xff] %v2892
        %3293 = vst [vmem:[%s225 + $0x4c8] sm:$0xff] %v2893
        %3294 = vst [vmem:[%s225 + $0x4d0] sm:$0xff] %v2894
        %3295 = vst [vmem:[%s225 + $0x4d8] sm:$0xff] %v2895
        %3296 = vst [vmem:[%s225 + $0x4e0] sm:$0xff] %v2896
        %3297 = vst [vmem:[%s225 + $0x4e8] sm:$0xff] %v2897
        %3298 = vst [vmem:[%s225 + $0x4f0] sm:$0xff] %v2898
        %3299 = vst [vmem:[%s225 + $0x4f8] sm:$0xff] %v2899
        %3300 = vst [vmem:[%s225 + $0x500] sm:$0xff] %v2900
        %3301 = vst [vmem:[%s225 + $0x508] sm:$0xff] %v2901
        %3302 = vst [vmem:[%s225 + $0x510] sm:$0xff] %v2902
        %3303 = vst [vmem:[%s225 + $0x518] sm:$0xff] %v2903
        %3304 = vst [vmem:[%s225 + $0x520] sm:$0xff] %v2904
        %3305 = vst [vmem:[%s225 + $0x528] sm:$0xff] %v2905
        %3306 = vst [vmem:[%s225 + $0x530] sm:$0xff] %v2906
        %3307 = vst [vmem:[%s225 + $0x538] sm:$0xff] %v2907
        %3308 = vst [vmem:[%s225 + $0x540] sm:$0xff] %v2908
        %3309 = vst [vmem:[%s225 + $0x548] sm:$0xff] %v2909
        %3310 = vst [vmem:[%s225 + $0x550] sm:$0xff] %v2910
        %3311 = vst [vmem:[%s225 + $0x558] sm:$0xff] %v2911
        %3312 = vst [vmem:[%s225 + $0x560] sm:$0xff] %v2912
        %3313 = vst [vmem:[%s225 + $0x568] sm:$0xff] %v2913
        %3314 = vst [vmem:[%s225 + $0x570] sm:$0xff] %v2914
        %3315 = vst [vmem:[%s225 + $0x578] sm:$0xff] %v2915
        %3316 = vst [vmem:[%s225 + $0x580] sm:$0xff] %v2916
        %3317 = vst [vmem:[%s225 + $0x588] sm:$0xff] %v2917
        %3318 = vst [vmem:[%s225 + $0x590] sm:$0xff] %v2918
        %3319 = vst [vmem:[%s225 + $0x598] sm:$0xff] %v2919
        %3320 = vst [vmem:[%s225 + $0x5a0] sm:$0xff] %v2920
        %3321 = vst [vmem:[%s225 + $0x5a8] sm:$0xff] %v2921
        %3322 = vst [vmem:[%s225 + $0x5b0] sm:$0xff] %v2922
        %3323 = vst [vmem:[%s225 + $0x5b8] sm:$0xff] %v2923
        %3324 = vst [vmem:[%s225 + $0x5c0] sm:$0xff] %v2924
        %3325 = vst [vmem:[%s225 + $0x5c8] sm:$0xff] %v2925
        %3326 = vst [vmem:[%s225 + $0x5d0] sm:$0xff] %v2926
        %3327 = vst [vmem:[%s225 + $0x5d8] sm:$0xff] %v2927
        %3328 = vst [vmem:[%s225 + $0x5e0] sm:$0xff] %v2928
        %3329 = vst [vmem:[%s225 + $0x5e8] sm:$0xff] %v2929
        %3330 = vst [vmem:[%s225 + $0x5f0] sm:$0xff] %v2930
        %3331 = vst [vmem:[%s225 + $0x5f8] sm:$0xff] %v2931
        %3332 = vst [vmem:[%s225 + $0x600] sm:$0xff] %v2932
        %3333 = vst [vmem:[%s225 + $0x608] sm:$0xff] %v2933
        %3334 = vst [vmem:[%s225 + $0x610] sm:$0xff] %v2934
        %3335 = vst [vmem:[%s225 + $0x618] sm:$0xff] %v2935
        %3336 = vst [vmem:[%s225 + $0x620] sm:$0xff] %v2936
        %3337 = vst [vmem:[%s225 + $0x628] sm:$0xff] %v2937
        %3338 = vst [vmem:[%s225 + $0x630] sm:$0xff] %v2938
        %3339 = vst [vmem:[%s225 + $0x638] sm:$0xff] %v2939
        %3340 = vst [vmem:[%s225 + $0x640] sm:$0xff] %v2940
        %3341 = vst [vmem:[%s225 + $0x648] sm:$0xff] %v2941
        %3342 = vst [vmem:[%s225 + $0x650] sm:$0xff] %v2942
        %3343 = vst [vmem:[%s225 + $0x658] sm:$0xff] %v2943
        %3344 = vst [vmem:[%s225 + $0x660] sm:$0xff] %v2944
        %3345 = vst [vmem:[%s225 + $0x668] sm:$0xff] %v2945
        %3346 = vst [vmem:[%s225 + $0x670] sm:$0xff] %v2946
        %3347 = vst [vmem:[%s225 + $0x678] sm:$0xff] %v2947
        %3348 = vst [vmem:[%s225 + $0x680] sm:$0xff] %v2948
        %3349 = vst [vmem:[%s225 + $0x688] sm:$0xff] %v2949
        %3350 = vst [vmem:[%s225 + $0x690] sm:$0xff] %v2950
        %3351 = vst [vmem:[%s225 + $0x698] sm:$0xff] %v2951
        %3352 = vst [vmem:[%s225 + $0x6a0] sm:$0xff] %v2952
        %3353 = vst [vmem:[%s225 + $0x6a8] sm:$0xff] %v2953
        %3354 = vst [vmem:[%s225 + $0x6b0] sm:$0xff] %v2954
        %3355 = vst [vmem:[%s225 + $0x6b8] sm:$0xff] %v2955
        %3356 = vst [vmem:[%s225 + $0x6c0] sm:$0xff] %v2956
        %3357 = vst [vmem:[%s225 + $0x6c8] sm:$0xff] %v2957
        %3358 = vst [vmem:[%s225 + $0x6d0] sm:$0xff] %v2958
        %3359 = vst [vmem:[%s225 + $0x6d8] sm:$0xff] %v2959
        %3360 = vst [vmem:[%s225 + $0x6e0] sm:$0xff] %v2960
        %3361 = vst [vmem:[%s225 + $0x6e8] sm:$0xff] %v2961
        %3362 = vst [vmem:[%s225 + $0x6f0] sm:$0xff] %v2962
        %3363 = vst [vmem:[%s225 + $0x6f8] sm:$0xff] %v2963
        %3364 = vst [vmem:[%s225 + $0x700] sm:$0xff] %v2964
        %3365 = vst [vmem:[%s225 + $0x708] sm:$0xff] %v2965
        %3366 = vst [vmem:[%s225 + $0x710] sm:$0xff] %v2966
        %3367 = vst [vmem:[%s225 + $0x718] sm:$0xff] %v2967
        %3368 = vst [vmem:[%s225 + $0x720] sm:$0xff] %v2968
        %3369 = vst [vmem:[%s225 + $0x728] sm:$0xff] %v2969
        %3370 = vst [vmem:[%s225 + $0x730] sm:$0xff] %v2970
        %3371 = vst [vmem:[%s225 + $0x738] sm:$0xff] %v2971
        %3372 = vst [vmem:[%s225 + $0x740] sm:$0xff] %v2972
        %3373 = vst [vmem:[%s225 + $0x748] sm:$0xff] %v2973
        %3374 = vst [vmem:[%s225 + $0x750] sm:$0xff] %v2974
        %3375 = vst [vmem:[%s225 + $0x758] sm:$0xff] %v2975
        %3376 = vst [vmem:[%s225 + $0x760] sm:$0xff] %v2976
        %3377 = vst [vmem:[%s225 + $0x768] sm:$0xff] %v2977
        %3378 = vst [vmem:[%s225 + $0x770] sm:$0xff] %v2978
        %3379 = vst [vmem:[%s225 + $0x778] sm:$0xff] %v2979
        %3380 = vst [vmem:[%s225 + $0x780] sm:$0xff] %v2980
        %3381 = vst [vmem:[%s225 + $0x788] sm:$0xff] %v2981
        %3382 = vst [vmem:[%s225 + $0x790] sm:$0xff] %v2982
        %3383 = vst [vmem:[%s225 + $0x798] sm:$0xff] %v2983
        %3384 = vst [vmem:[%s225 + $0x7a0] sm:$0xff] %v2984
        %3385 = vst [vmem:[%s225 + $0x7a8] sm:$0xff] %v2985
        %3386 = vst [vmem:[%s225 + $0x7b0] sm:$0xff] %v2986
        %3387 = vst [vmem:[%s225 + $0x7b8] sm:$0xff] %v2987
        %3388 = vst [vmem:[%s225 + $0x7c0] sm:$0xff] %v2988
        %3389 = vst [vmem:[%s225 + $0x7c8] sm:$0xff] %v2989
        %3390 = vst [vmem:[%s225 + $0x7d0] sm:$0xff] %v2990
        %3391 = vst [vmem:[%s225 + $0x7d8] sm:$0xff] %v2991
        %3392 = vst [vmem:[%s225 + $0x7e0] sm:$0xff] %v2992
        %3393 = vst [vmem:[%s225 + $0x7e8] sm:$0xff] %v2993
        %3394 = vst [vmem:[%s225 + $0x7f0] sm:$0xff] %v2994
        %3395 = vst [vmem:[%s225 + $0x7f8] sm:$0xff] %v2995
        %3396 = vst [vmem:[%s225 + $0x800] sm:$0xff] %v2996
        %3397 = vst [vmem:[%s225 + $0x808] sm:$0xff] %v2997
        %3398 = vst [vmem:[%s225 + $0x810] sm:$0xff] %v2998
        %3399 = vst [vmem:[%s225 + $0x818] sm:$0xff] %v2999
        %3400 = vst [vmem:[%s225 + $0x820] sm:$0xff] %v3000
        %3401 = vst [vmem:[%s225 + $0x828] sm:$0xff] %v3001
        %3402 = vst [vmem:[%s225 + $0x830] sm:$0xff] %v3002
        %3403 = vst [vmem:[%s225 + $0x838] sm:$0xff] %v3003
        %3404 = vst [vmem:[%s225 + $0x840] sm:$0xff] %v3004
        %3405 = vst [vmem:[%s225 + $0x848] sm:$0xff] %v3005
        %3406 = vst [vmem:[%s225 + $0x850] sm:$0xff] %v3006
        %3407 = vst [vmem:[%s225 + $0x858] sm:$0xff] %v3007
        %3408 = vst [vmem:[%s225 + $0x860] sm:$0xff] %v3008
        %3409 = vst [vmem:[%s225 + $0x868] sm:$0xff] %v3009
        %3410 = vst [vmem:[%s225 + $0x870] sm:$0xff] %v3010
        %3411 = vst [vmem:[%s225 + $0x878] sm:$0xff] %v3011
        %3412 = vst [vmem:[%s225 + $0x880] sm:$0xff] %v3012
        %3413 = vst [vmem:[%s225 + $0x888] sm:$0xff] %v3013
        %3414 = vst [vmem:[%s225 + $0x890] sm:$0xff] %v3014
        %3415 = vst [vmem:[%s225 + $0x898] sm:$0xff] %v3015
        %3416 = vst [vmem:[%s225 + $0x8a0] sm:$0xff] %v3016
        %3417 = vst [vmem:[%s225 + $0x8a8] sm:$0xff] %v3017
        %3418 = vst [vmem:[%s225 + $0x8b0] sm:$0xff] %v3018
        %3419 = vst [vmem:[%s225 + $0x8b8] sm:$0xff] %v3019
        %3420 = vst [vmem:[%s225 + $0x8c0] sm:$0xff] %v3020
        %3421 = vst [vmem:[%s225 + $0x8c8] sm:$0xff] %v3021
        %3422 = vst [vmem:[%s225 + $0x8d0] sm:$0xff] %v3022
        %3423 = vst [vmem:[%s225 + $0x8d8] sm:$0xff] %v3023
        %3424 = vst [vmem:[%s225 + $0x8e0] sm:$0xff] %v3024
        %3425 = vst [vmem:[%s225 + $0x8e8] sm:$0xff] %v3025
        %3426 = vst [vmem:[%s225 + $0x8f0] sm:$0xff] %v3026
        %3427 = vst [vmem:[%s225 + $0x8f8] sm:$0xff] %v3027
        %3428 = vst [vmem:[%s225 + $0x900] sm:$0xff] %v3028
        %3429 = vst [vmem:[%s225 + $0x908] sm:$0xff] %v3029
        %3430 = vst [vmem:[%s225 + $0x910] sm:$0xff] %v3030
        %3431 = vst [vmem:[%s225 + $0x918] sm:$0xff] %v3031
        %3432 = vst [vmem:[%s225 + $0x920] sm:$0xff] %v3032
        %3433 = vst [vmem:[%s225 + $0x928] sm:$0xff] %v3033
        %3434 = vst [vmem:[%s225 + $0x930] sm:$0xff] %v3034
        %3435 = vst [vmem:[%s225 + $0x938] sm:$0xff] %v3035
        %3436 = vst [vmem:[%s225 + $0x940] sm:$0xff] %v3036
        %3437 = vst [vmem:[%s225 + $0x948] sm:$0xff] %v3037
        %3438 = vst [vmem:[%s225 + $0x950] sm:$0xff] %v3038
        %3439 = vst [vmem:[%s225 + $0x958] sm:$0xff] %v3039
        %3440 = vst [vmem:[%s225 + $0x960] sm:$0xff] %v3040
        %3441 = vst [vmem:[%s225 + $0x968] sm:$0xff] %v3041
        %3442 = vst [vmem:[%s225 + $0x970] sm:$0xff] %v3042
        %3443 = vst [vmem:[%s225 + $0x978] sm:$0xff] %v3043
        %3444 = vst [vmem:[%s225 + $0x980] sm:$0xff] %v3044
        %3445 = vst [vmem:[%s225 + $0x988] sm:$0xff] %v3045
        %3446 = vst [vmem:[%s225 + $0x990] sm:$0xff] %v3046
        %3447 = vst [vmem:[%s225 + $0x998] sm:$0xff] %v3047
        %3448 = vst [vmem:[%s225 + $0x9a0] sm:$0xff] %v3048
        %3449 = vst [vmem:[%s225 + $0x9a8] sm:$0xff] %v3049
        %3450 = vst [vmem:[%s225 + $0x9b0] sm:$0xff] %v3050
        %3451 = vst [vmem:[%s225 + $0x9b8] sm:$0xff] %v3051
        %3452 = vst [vmem:[%s225 + $0x9c0] sm:$0xff] %v3052
        %3453 = vst [vmem:[%s225 + $0x9c8] sm:$0xff] %v3053
        %3454 = vst [vmem:[%s225 + $0x9d0] sm:$0xff] %v3054
        %3455 = vst [vmem:[%s225 + $0x9d8] sm:$0xff] %v3055
        %3456 = vst [vmem:[%s225 + $0x9e0] sm:$0xff] %v3056
        %3457 = vst [vmem:[%s225 + $0x9e8] sm:$0xff] %v3057
        %3458 = vst [vmem:[%s225 + $0x9f0] sm:$0xff] %v3058
        %3459 = vst [vmem:[%s225 + $0x9f8] sm:$0xff] %v3059
        %3460 = vst [vmem:[%s225 + $0xa00] sm:$0xff] %v3060
        %3461 = vst [vmem:[%s225 + $0xa08] sm:$0xff] %v3061
        %3462 = vst [vmem:[%s225 + $0xa10] sm:$0xff] %v3062
        %3463 = vst [vmem:[%s225 + $0xa18] sm:$0xff] %v3063
        %3464 = vst [vmem:[%s225 + $0xa20] sm:$0xff] %v3064
        %3465 = vst [vmem:[%s225 + $0xa28] sm:$0xff] %v3065
        %3466 = vst [vmem:[%s225 + $0xa30] sm:$0xff] %v3066
        %3467 = vst [vmem:[%s225 + $0xa38] sm:$0xff] %v3067
        %3468 = vst [vmem:[%s225 + $0xa40] sm:$0xff] %v3068
        %3469 = vst [vmem:[%s225 + $0xa48] sm:$0xff] %v3069
        %3470 = vst [vmem:[%s225 + $0xa50] sm:$0xff] %v3070
        %3471 = vst [vmem:[%s225 + $0xa58] sm:$0xff] %v3071
        %3472 = vst [vmem:[%s225 + $0xa60] sm:$0xff] %v3072
        %3473 = vst [vmem:[%s225 + $0xa68] sm:$0xff] %v3073
        %3474 = vst [vmem:[%s225 + $0xa70] sm:$0xff] %v3074
        %3475 = vst [vmem:[%s225 + $0xa78] sm:$0xff] %v3075
        %3476 = vst [vmem:[%s225 + $0xa80] sm:$0xff] %v3076
        %3477 = vst [vmem:[%s225 + $0xa88] sm:$0xff] %v3077
        %3478 = vst [vmem:[%s225 + $0xa90] sm:$0xff] %v3078
        %3479 = vst [vmem:[%s225 + $0xa98] sm:$0xff] %v3079
        %3480 = vst [vmem:[%s225 + $0xaa0] sm:$0xff] %v3080
        %3481 = vst [vmem:[%s225 + $0xaa8] sm:$0xff] %v3081
        %3482 = vst [vmem:[%s225 + $0xab0] sm:$0xff] %v3082
        %3483 = vst [vmem:[%s225 + $0xab8] sm:$0xff] %v3083
        %3484 = vst [vmem:[%s225 + $0xac0] sm:$0xff] %v3084
        %3485 = vst [vmem:[%s225 + $0xac8] sm:$0xff] %v3085
        %3486 = vst [vmem:[%s225 + $0xad0] sm:$0xff] %v3086
        %3487 = vst [vmem:[%s225 + $0xad8] sm:$0xff] %v3087
        %3488 = vst [vmem:[%s225 + $0xae0] sm:$0xff] %v3088
        %3489 = vst [vmem:[%s225 + $0xae8] sm:$0xff] %v3089
        %3490 = vst [vmem:[%s225 + $0xaf0] sm:$0xff] %v3090
        %3491 = vst [vmem:[%s225 + $0xaf8] sm:$0xff] %v3091
        %3492 = vst [vmem:[%s225 + $0xb00] sm:$0xff] %v3092
        %3493 = vst [vmem:[%s225 + $0xb08] sm:$0xff] %v3093
        %3494 = vst [vmem:[%s225 + $0xb10] sm:$0xff] %v3094
        %3495 = vst [vmem:[%s225 + $0xb18] sm:$0xff] %v3095
        %3496 = vst [vmem:[%s225 + $0xb20] sm:$0xff] %v3096
        %3497 = vst [vmem:[%s225 + $0xb28] sm:$0xff] %v3097
        %3498 = vst [vmem:[%s225 + $0xb30] sm:$0xff] %v3098
        %3499 = vst [vmem:[%s225 + $0xb38] sm:$0xff] %v3099
        %3500 = vst [vmem:[%s225 + $0xb40] sm:$0xff] %v3100
        %3501 = vst [vmem:[%s225 + $0xb48] sm:$0xff] %v3101
        %3502 = vst [vmem:[%s225 + $0xb50] sm:$0xff] %v3102
        %3503 = vst [vmem:[%s225 + $0xb58] sm:$0xff] %v3103
        %3504 = vst [vmem:[%s225 + $0xb60] sm:$0xff] %v3104
        %3505 = vst [vmem:[%s225 + $0xb68] sm:$0xff] %v3105
        %3506 = vst [vmem:[%s225 + $0xb70] sm:$0xff] %v3106
        %3507 = vst [vmem:[%s225 + $0xb78] sm:$0xff] %v3107
        %3508 = vst [vmem:[%s225 + $0xb80] sm:$0xff] %v3108
        %3509 = vst [vmem:[%s225 + $0xb88] sm:$0xff] %v3109
        %3510 = vst [vmem:[%s225 + $0xb90] sm:$0xff] %v3110
        %3511 = vst [vmem:[%s225 + $0xb98] sm:$0xff] %v3111
        %3512 = vst [vmem:[%s225 + $0xba0] sm:$0xff] %v3112
        %3513 = vst [vmem:[%s225 + $0xba8] sm:$0xff] %v3113
        %3514 = vst [vmem:[%s225 + $0xbb0] sm:$0xff] %v3114
        %3515 = vst [vmem:[%s225 + $0xbb8] sm:$0xff] %v3115
        %3516 = vst [vmem:[%s225 + $0xbc0] sm:$0xff] %v3116
        %3517 = vst [vmem:[%s225 + $0xbc8] sm:$0xff] %v3117
        %3518 = vst [vmem:[%s225 + $0xbd0] sm:$0xff] %v3118
        %3519 = vst [vmem:[%s225 + $0xbd8] sm:$0xff] %v3119
        %3520 = vst [vmem:[%s225 + $0xbe0] sm:$0xff] %v3120
        %3521 = vst [vmem:[%s225 + $0xbe8] sm:$0xff] %v3121
        %3522 = vst [vmem:[%s225 + $0xbf0] sm:$0xff] %v3122
        %3523 = vst [vmem:[%s225 + $0xbf8] sm:$0xff] %v3123
        %3524 = vst [vmem:[%s225 + $0xc00] sm:$0xff] %v3124
        %3525 = vst [vmem:[%s225 + $0xc08] sm:$0xff] %v3125
        %3526 = vst [vmem:[%s225 + $0xc10] sm:$0xff] %v3126
        %3527 = vst [vmem:[%s225 + $0xc18] sm:$0xff] %v3127
        %3528 = vst [vmem:[%s225 + $0xc20] sm:$0xff] %v3128
        %3529 = vst [vmem:[%s225 + $0xc28] sm:$0xff] %v3129
        %3530 = vst [vmem:[%s225 + $0xc30] sm:$0xff] %v3130
        %3531 = vst [vmem:[%s225 + $0xc38] sm:$0xff] %v3131
        %3532 = vst [vmem:[%s225 + $0xc40] sm:$0xff] %v3132
        %3533 = vst [vmem:[%s225 + $0xc48] sm:$0xff] %v3133
        %3534 = vst [vmem:[%s225 + $0xc50] sm:$0xff] %v3134
        %3535 = vst [vmem:[%s225 + $0xc58] sm:$0xff] %v3135
        %3536 = vst [vmem:[%s225 + $0xc60] sm:$0xff] %v3136
        %3537 = vst [vmem:[%s225 + $0xc68] sm:$0xff] %v3137
        %3538 = vst [vmem:[%s225 + $0xc70] sm:$0xff] %v3138
        %3539 = vst [vmem:[%s225 + $0xc78] sm:$0xff] %v3139
        %s3540 = sand.u32 %s102, 1
        %s3541 = scalar_lea.sflag [#allocation4], %s3540
        %s3542 = sand.u32 %s102, 1
        %s3543 = smul.addr %s3542, 3200
        %s3544 = scalar_lea.vmem [#allocation7], %s3543
        // Predicated region
        $region41: #{tpu_custom_call.1} parent=27 // pred_check
          %p3545 = pneg %p112
        $region42: #{tpu_custom_call.1} parent=27 // pred_check_branch
          %3547 = sbr.rel (%p3545) target = $region44
        $region43: #{tpu_custom_call.1} parent=27 // pred_region
          %3549 = vsyncadd %s3541, 0
          %s3550 = smul.addr %s26, 400
          %s3551 = smul.addr %s3550, 8
          %s3552 = scalar_lea.hbm %s2, %s3551
          %s3553 = sshll.u32 %s3544, 4
          %s3554 = int_to_ptr.vmem [resolvable:$true] %s3553
          %s3555 = sshll.u32 %s3552, 4
          %s3556 = int_to_ptr.hbm [resolvable:$true] %s3555
          %3561 = dma.vmem_to_hbm [thread:$0]  %s3554, 51200, %s3556, %s3541, 640, 640, 40
        $region44: #{tpu_custom_call.1} parent=27 // pred_fallthru
          _
      $region28: #{tpu_custom_call.1} parent=5 // pred_fallthru
        _
      %p3562 = scmp.le.s32.totalorder 2, %s17
      // Predicated region
      $region45: #{tpu_custom_call.1} parent=5 // pred_check
        %p3563 = pneg %p3562
      $region46: #{tpu_custom_call.1} parent=5 // pred_check_branch
        %3565 = sbr.rel (%p3563) target = $region48
      $region47: #{tpu_custom_call.1} parent=5 // pred_region
        %s3566 = ssub.s32 %s17, 2
        // Predicated region
        $region49: #{tpu_custom_call.1} parent=47 // pred_check
          %p3567 = pneg %p118
        $region50: #{tpu_custom_call.1} parent=47 // pred_check_branch
          %3569 = sbr.rel (%p3567) target = $region52
        $region51: #{tpu_custom_call.1} parent=47 // pred_region
          %s3570 = sand.u32 %s103, 1
          %s3571 = scalar_lea.sflag [#allocation4], %s3570
          %s3572 = sand.u32 %s103, 1
          %s3573 = smul.addr %s3572, 3200
          %s3574 = scalar_lea.vmem [#allocation7], %s3573
          %3576 = dma.done %s3571, 51200
        $region52: #{tpu_custom_call.1} parent=47 // pred_fallthru
          _
      $region48: #{tpu_custom_call.1} parent=5 // pred_fallthru
        _
    $region6: #{tpu_custom_call.1} parent=1 // loop_footer
      %s21 = sadd.s32 1, %s17
    $region7: #{tpu_custom_call.1} parent=1 // loop_footer_branch
      %16 = sbr.rel target = $region3
    $region8: #{tpu_custom_call.1} parent=1 // loop_exit
      _
    %3577 = vsyncpa [#allocation3], 1
    %s3578 = scalar_lea.sflag [#allocation3], 1
    %3579 = vsyncpa %s3578, 1
    %3580 = vsyncpa [#allocation6], 1
    %s3581 = scalar_lea.sflag [#allocation6], 1
    %3582 = vsyncpa %s3581, 1
    %3583 = vsyncpa [#allocation4], 1
    %s3584 = scalar_lea.sflag [#allocation4], 1
    %3585 = vsyncpa %s3584, 1

</llo_original>
